<compile_context>
chip_gen: v7x
topology: tpu7x:2x2x1
jax: 0.10.0
libtpu: 0.0.40
codegen_flags: <defaults>
</compile_context>

<pallas_src>
import math

import numpy as np
import jax
import jax.numpy as jnp
from jax.experimental import pallas as pl
from jax.experimental.pallas import tpu as pltpu


# --------------------- constant 0/1 selection matrices (host-side) ---------------------


def _conv_selectors(n, h_in, w_in, h_out, w_out, pad):
    """9 matrices S_k (k = kh*3+kw), shape (n*h_out*w_out, n*h_in*w_in).

    (S_k @ act)[row(n,ho,wo), :] = act[row(n, ho+kh-pad, wo+kw-pad), :], zero outside the
    image (implicit zero padding).  Row layout of activations is (n, h, w); lanes = channels.
    h_out/w_out may be the *cropped* output extent (only the rows the pool will read).
    """
    sels = np.zeros((9, n * h_out * w_out, n * h_in * w_in), np.float32)
    for kh in range(3):
        for kw in range(3):
            k = kh * 3 + kw
            for b in range(n):
                for ho in range(h_out):
                    for wo in range(w_out):
                        hi, wi = ho + kh - pad, wo + kw - pad
                        if 0 <= hi < h_in and 0 <= wi < w_in:
                            sels[k,
                                 b * h_out * w_out + ho * w_out + wo,
                                 b * h_in * w_in + hi * w_in + wi] = 1.0
    return sels


def _pool_selectors(n, h_in, w_in):
    """4 matrices for MaxPool2d(2,2): tap (dh,dw) of each 2x2 window (h_in/w_in even)."""
    h_out, w_out = h_in // 2, w_in // 2
    sels = np.zeros((4, n * h_out * w_out, n * h_in * w_in), np.float32)
    for dh in range(2):
        for dw in range(2):
            j = dh * 2 + dw
            for b in range(n):
                for po in range(h_out):
                    for pw in range(w_out):
                        sels[j,
                             b * h_out * w_out + po * w_out + pw,
                             b * h_in * w_in + (2 * po + dh) * w_in + (2 * pw + dw)] = 1.0
    return sels


def _flatten_selectors(n, hw):
    """hw matrices Q_j, shape (n, n*hw): Q_j @ pooled picks the batch rows of spatial pos j."""
    sels = np.zeros((hw, n, n * hw), np.float32)
    for j in range(hw):
        for b in range(n):
            sels[j, b, b * hw + j] = 1.0
    return sels


# ----------------------------------- fused kernel --------------------------------------


def _make_fused_kernel(n_conv, n_fc):
    """Fused forward kernel.  Ref order:
       x, (conv_sel, conv_w, conv_b, pool_sel) * n_conv, flatten_sel, (fc_w, fc_b) * n_fc, out.
    """

    def kernel(*refs):
        it = iter(refs)
        x_ref = next(it)
        conv_blocks = [(next(it), next(it), next(it), next(it)) for _ in range(n_conv)]
        q_ref = next(it)
        fc_blocks = [(next(it), next(it)) for _ in range(n_fc)]
        o_ref = next(it)
        f32 = jnp.float32

        a = x_ref[...]                                            # (N*H*W, Cin)
        for s_ref, w_ref, b_ref, p_ref in conv_blocks:
            cin = w_ref.shape[1]
            acc = None
            for k in range(s_ref.shape[0]):                       # 9 kernel taps, unrolled
                if cin == 1:
                    # Degenerate Cin=1: fold the (1, Cout) weight in with a broadcast
                    # multiply so no matmul has a size-1 contraction dim.
                    aw = a * w_ref[k]                              # (rows_in, Cout)
                else:
                    # weight matmul first (rows_in < rows_out) -> fewer MACs
                    aw = jnp.dot(a, w_ref[k], preferred_element_type=f32)
                term = jnp.dot(s_ref[k], aw, preferred_element_type=f32)
                acc = term if acc is None else acc + term
            a = jnp.maximum(acc + b_ref[...], 0.0)                # bias + ReLU epilogue
            # fused MaxPool2d(2,2): elementwise max over the 4 window taps
            pooled = jnp.dot(p_ref[0], a, preferred_element_type=f32)
            for j in range(1, p_ref.shape[0]):
                pooled = jnp.maximum(pooled, jnp.dot(p_ref[j], a, preferred_element_type=f32))
            a = pooled                                            # (N*Hp*Wp, Cout)

        # Flatten (PyTorch NCHW order is folded into the first FC weight slices) + FC stack.
        w0_ref, b0_ref = fc_blocks[0]
        acc = None
        for j in range(q_ref.shape[0]):                           # spatial positions, unrolled
            rows = jnp.dot(q_ref[j], a, preferred_element_type=f32)       # (N, C)
            term = jnp.dot(rows, w0_ref[j], preferred_element_type=f32)   # (N, F)
            acc = term if acc is None else acc + term
        h = acc + b0_ref[...]
        if n_fc > 1:
            h = jnp.maximum(h, 0.0)
        for li, (w_ref, b_ref) in enumerate(fc_blocks[1:], start=1):
            h = jnp.dot(h, w_ref[...], preferred_element_type=f32) + b_ref[...]
            if li < n_fc - 1:
                h = jnp.maximum(h, 0.0)
        o_ref[...] = h

    return kernel


def _full_block_spec(a):
    nd = a.ndim
    return pl.BlockSpec(tuple(a.shape), lambda i, _nd=nd: (0,) * _nd)


def fused_forward(plan, x):
    """Single-pallas_call forward of the whole ConfigurableCNN.  x: (N, 1, size, size)."""
    conv_blocks, q, fc_blocks = plan
    n = x.shape[0]
    # Cin == 1, so NCHW -> (N*H*W, Cin) row layout is a pure reshape (cheap wrapper glue).
    x2d = x.reshape(n * x.shape[2] * x.shape[3], x.shape[1]).astype(jnp.float32)

    flat_inputs = [x2d]
    for blk in conv_blocks:
        flat_inputs.extend(blk)
    flat_inputs.append(q)
    for blk in fc_blocks:
        flat_inputs.extend(blk)

    out_dim = fc_blocks[-1][1].shape[1]
    kernel = _make_fused_kernel(len(conv_blocks), len(fc_blocks))
    return pl.pallas_call(
        kernel,
        out_shape=jax.ShapeDtypeStruct((n, out_dim), jnp.float32),
        grid=(1,),
        in_specs=[_full_block_spec(a) for a in flat_inputs],
        out_specs=pl.BlockSpec((n, out_dim), lambda i: (0, 0)),
        compiler_params=pltpu.CompilerParams(dimension_semantics=("arbitrary",)),
    )(*flat_inputs)


# --------------------------- parameter init & kernel "plan" ----------------------------


def init_params(key, size=5, conv_layers=2, fc_layers=2, initial_channels=32):
    """Deterministic init mimicking PyTorch default uniform(-1/sqrt(fan_in), ...)."""
    convs = []
    in_ch, out_ch = 1, initial_channels
    for _ in range(conv_layers):
        key, k1, k2 = jax.random.split(key, 3)
        bound = 1.0 / math.sqrt(in_ch * 9)
        w = jax.random.uniform(k1, (out_ch, in_ch, 3, 3), jnp.float32, -bound, bound)
        b = jax.random.uniform(k2, (out_ch,), jnp.float32, -bound, bound)
        convs.append((w, b))
        in_ch, out_ch = out_ch, out_ch * 2

    # Replicate _get_conv_output: each block does conv (H -> H+2, padding=2) then pool (//2).
    sp = size
    for _ in range(conv_layers):
        sp = (sp + 2) // 2
    fc_in = in_ch * sp * sp

    fcs = []
    d_in = fc_in
    for _ in range(fc_layers - 1):
        d_out = d_in // 2
        key, k1, k2 = jax.random.split(key, 3)
        bound = 1.0 / math.sqrt(d_in)
        w = jax.random.uniform(k1, (d_out, d_in), jnp.float32, -bound, bound)
        b = jax.random.uniform(k2, (d_out,), jnp.float32, -bound, bound)
        fcs.append((w, b))
        d_in = d_out
    key, k1, k2 = jax.random.split(key, 3)
    bound = 1.0 / math.sqrt(d_in)
    w = jax.random.uniform(k1, (size * size, d_in), jnp.float32, -bound, bound)
    b = jax.random.uniform(k2, (size * size,), jnp.float32, -bound, bound)
    fcs.append((w, b))
    return {"convs": convs, "fcs": fcs}


def build_plan(params, batch, size):
    """Rearrange PyTorch-layout weights + build constant selection matrices (one-time prep)."""
    n = batch
    h = w = size
    conv_blocks = []
    channels = 1
    for (cw, cb) in params["convs"]:
        cout, cin = cw.shape[0], cw.shape[1]
        h_full, w_full = h + 2, w + 2                     # kernel=3, padding=2, stride=1
        hp, wp = h_full // 2, w_full // 2                 # pooled extent (floor mode)
        h_out, w_out = 2 * hp, 2 * wp                     # cropped conv rows the pool reads
        s = jnp.asarray(_conv_selectors(n, h, w, h_out, w_out, pad=2))
        wk = jnp.transpose(cw, (2, 3, 1, 0)).reshape(9, cin, cout).astype(jnp.float32)
        br = cb.reshape(1, cout).astype(jnp.float32)
        p = jnp.asarray(_pool_selectors(n, h_out, w_out))
        conv_blocks.append((s, wk, br, p))
        h, w = hp, wp
        channels = cout

    hw = h * w
    q = jnp.asarray(_flatten_selectors(n, hw))

    fcs = params["fcs"]
    fc_blocks = []
    w0, b0 = fcs[0]
    f_out = w0.shape[0]
    # PyTorch flatten of (N, C, Hp, Wp) is (c, ph, pw)-major -> slice W0 per spatial position.
    w0r = w0.reshape(f_out, channels, h, w)
    w0r = jnp.transpose(w0r, (2, 3, 1, 0)).reshape(hw, channels, f_out).astype(jnp.float32)
    fc_blocks.append((w0r, b0.reshape(1, f_out).astype(jnp.float32)))
    for (fw, fb) in fcs[1:]:
        fc_blocks.append((fw.T.astype(jnp.float32),
                          fb.reshape(1, fw.shape[0]).astype(jnp.float32)))
    return (tuple(conv_blocks), q, tuple(fc_blocks))


# ------------------------------- pure-JAX reference ------------------------------------


def reference_forward(params, x):
    out = x
    for (w, b) in params["convs"]:
        out = jax.lax.conv_general_dilated(
            out, w, window_strides=(1, 1), padding=((2, 2), (2, 2)),
            dimension_numbers=("NCHW", "OIHW", "NCHW"))
        out = jnp.maximum(out + b.reshape(1, -1, 1, 1), 0.0)
        nb, c, hh, ww = out.shape
        ho, wo = hh // 2, ww // 2
        out = out[:, :, :ho * 2, :wo * 2].reshape(nb, c, ho, 2, wo, 2).max(axis=(3, 5))
    out = out.reshape(out.shape[0], -1)
    fcs = params["fcs"]
    for i, (w, b) in enumerate(fcs):
        out = out @ w.T + b
        if i < len(fcs) - 1:
            out = jnp.maximum(out, 0.0)
    return out


# ---------------------------------------- main ------------------------------------------

if __name__ == "__main__":
    size = 5
    batch = 2
    params = init_params(jax.random.PRNGKey(42), size=size,
                         conv_layers=2, fc_layers=2, initial_channels=32)
    x = jax.random.normal(jax.random.PRNGKey(0), (batch, 1, size, size), jnp.float32)

    plan = build_plan(params, batch, size)
    fwd = jax.jit(fused_forward)
    out = jax.block_until_ready(fwd(plan, x))
    assert out.shape == (batch, size * size), out.shape

    ref = jax.block_until_ready(reference_forward(params, x))
    err = float(np.max(np.abs(np.asarray(out) - np.asarray(ref))))
    assert np.allclose(np.asarray(out), np.asarray(ref), rtol=1e-4, atol=1e-4), err

    print("KERNEL_OK")
</pallas_src>

<mosaic_0001>
module attributes {stable_mosaic.version = 11 : i64} {
  func.func @kernel(%arg0: i32, %arg1: memref<50x1xf32, #tpu.memory_space<vmem>>, %arg2: memref<9x72x50xf32, #tpu.memory_space<vmem>>, %arg3: memref<9x1x32xf32, #tpu.memory_space<vmem>>, %arg4: memref<1x32xf32, #tpu.memory_space<vmem>>, %arg5: memref<4x18x72xf32, #tpu.memory_space<vmem>>, %arg6: memref<9x32x18xf32, #tpu.memory_space<vmem>>, %arg7: memref<9x32x64xf32, #tpu.memory_space<vmem>>, %arg8: memref<1x64xf32, #tpu.memory_space<vmem>>, %arg9: memref<4x8x32xf32, #tpu.memory_space<vmem>>, %arg10: memref<4x2x8xf32, #tpu.memory_space<vmem>>, %arg11: memref<4x64x128xf32, #tpu.memory_space<vmem>>, %arg12: memref<1x128xf32, #tpu.memory_space<vmem>>, %arg13: memref<128x25xf32, #tpu.memory_space<vmem>>, %arg14: memref<1x25xf32, #tpu.memory_space<vmem>>, %arg15: memref<2x25xf32, #tpu.memory_space<vmem>>) attributes {dimension_semantics = [#tpu.dimension_semantics<arbitrary>], iteration_bounds = array<i64: 1>, scalar_prefetch = 0 : i64, scratch_operands = 0 : i64, tpu.core_type = #tpu.core_type<tc>, window_params = [{pipeline_mode = #tpu.pipeline_mode<synchronous>, transform_indices = @transform_0, window_bounds = array<i64: 50, 1>}, {pipeline_mode = #tpu.pipeline_mode<synchronous>, transform_indices = @transform_1, window_bounds = array<i64: 9, 72, 50>}, {pipeline_mode = #tpu.pipeline_mode<synchronous>, transform_indices = @transform_2, window_bounds = array<i64: 9, 1, 32>}, {pipeline_mode = #tpu.pipeline_mode<synchronous>, transform_indices = @transform_3, window_bounds = array<i64: 1, 32>}, {pipeline_mode = #tpu.pipeline_mode<synchronous>, transform_indices = @transform_4, window_bounds = array<i64: 4, 18, 72>}, {pipeline_mode = #tpu.pipeline_mode<synchronous>, transform_indices = @transform_5, window_bounds = array<i64: 9, 32, 18>}, {pipeline_mode = #tpu.pipeline_mode<synchronous>, transform_indices = @transform_6, window_bounds = array<i64: 9, 32, 64>}, {pipeline_mode = #tpu.pipeline_mode<synchronous>, transform_indices = @transform_7, window_bounds = array<i64: 1, 64>}, {pipeline_mode = #tpu.pipeline_mode<synchronous>, transform_indices = @transform_8, window_bounds = array<i64: 4, 8, 32>}, {pipeline_mode = #tpu.pipeline_mode<synchronous>, transform_indices = @transform_9, window_bounds = array<i64: 4, 2, 8>}, {pipeline_mode = #tpu.pipeline_mode<synchronous>, transform_indices = @transform_10, window_bounds = array<i64: 4, 64, 128>}, {pipeline_mode = #tpu.pipeline_mode<synchronous>, transform_indices = @transform_11, window_bounds = array<i64: 1, 128>}, {pipeline_mode = #tpu.pipeline_mode<synchronous>, transform_indices = @transform_12, window_bounds = array<i64: 128, 25>}, {pipeline_mode = #tpu.pipeline_mode<synchronous>, transform_indices = @transform_13, window_bounds = array<i64: 1, 25>}, {pipeline_mode = #tpu.pipeline_mode<synchronous>, transform_indices = @transform_14, window_bounds = array<i64: 2, 25>}]} {
    %c0 = arith.constant 0 : index
    %c0_0 = arith.constant 0 : index
    %0 = vector.load %arg1[%c0, %c0_0] : memref<50x1xf32, #tpu.memory_space<vmem>>, vector<50x1xf32>
    %c0_1 = arith.constant 0 : index
    %c0_2 = arith.constant 0 : index
    %c0_3 = arith.constant 0 : index
    %1 = vector.load %arg3[%c0_1, %c0_2, %c0_3] : memref<9x1x32xf32, #tpu.memory_space<vmem>>, vector<1x1x32xf32>
    %2 = vector.shape_cast %1 : vector<1x1x32xf32> to vector<1x32xf32>
    %3 = vector.broadcast %0 : vector<50x1xf32> to vector<50x32xf32>
    %4 = vector.broadcast %2 : vector<1x32xf32> to vector<50x32xf32>
    %5 = arith.mulf %3, %4 : vector<50x32xf32>
    %c0_4 = arith.constant 0 : index
    %c0_5 = arith.constant 0 : index
    %c0_6 = arith.constant 0 : index
    %6 = vector.load %arg2[%c0_4, %c0_5, %c0_6] : memref<9x72x50xf32, #tpu.memory_space<vmem>>, vector<1x72x50xf32>
    %7 = vector.shape_cast %6 : vector<1x72x50xf32> to vector<72x50xf32>
    %cst = arith.constant dense<0.000000e+00> : vector<72x32xf32>
    %8 = tpu.matmul %7, %5, %cst {dimension_numbers = #tpu.dot_dimension_numbers<[1], [0], [0], [1], [0, 0, 1, 1], [], []>} : vector<72x50xf32>, vector<50x32xf32>, vector<72x32xf32> -> vector<72x32xf32>
    %c1 = arith.constant 1 : index
    %c0_7 = arith.constant 0 : index
    %c0_8 = arith.constant 0 : index
    %9 = vector.load %arg3[%c1, %c0_7, %c0_8] : memref<9x1x32xf32, #tpu.memory_space<vmem>>, vector<1x1x32xf32>
    %10 = vector.shape_cast %9 : vector<1x1x32xf32> to vector<1x32xf32>
    %11 = vector.broadcast %0 : vector<50x1xf32> to vector<50x32xf32>
    %12 = vector.broadcast %10 : vector<1x32xf32> to vector<50x32xf32>
    %13 = arith.mulf %11, %12 : vector<50x32xf32>
    %c1_9 = arith.constant 1 : index
    %c0_10 = arith.constant 0 : index
    %c0_11 = arith.constant 0 : index
    %14 = vector.load %arg2[%c1_9, %c0_10, %c0_11] : memref<9x72x50xf32, #tpu.memory_space<vmem>>, vector<1x72x50xf32>
    %15 = vector.shape_cast %14 : vector<1x72x50xf32> to vector<72x50xf32>
    %cst_12 = arith.constant dense<0.000000e+00> : vector<72x32xf32>
    %16 = tpu.matmul %15, %13, %cst_12 {dimension_numbers = #tpu.dot_dimension_numbers<[1], [0], [0], [1], [0, 0, 1, 1], [], []>} : vector<72x50xf32>, vector<50x32xf32>, vector<72x32xf32> -> vector<72x32xf32>
    %17 = arith.addf %8, %16 : vector<72x32xf32>
    %c2 = arith.constant 2 : index
    %c0_13 = arith.constant 0 : index
    %c0_14 = arith.constant 0 : index
    %18 = vector.load %arg3[%c2, %c0_13, %c0_14] : memref<9x1x32xf32, #tpu.memory_space<vmem>>, vector<1x1x32xf32>
    %19 = vector.shape_cast %18 : vector<1x1x32xf32> to vector<1x32xf32>
    %20 = vector.broadcast %0 : vector<50x1xf32> to vector<50x32xf32>
    %21 = vector.broadcast %19 : vector<1x32xf32> to vector<50x32xf32>
    %22 = arith.mulf %20, %21 : vector<50x32xf32>
    %c2_15 = arith.constant 2 : index
    %c0_16 = arith.constant 0 : index
    %c0_17 = arith.constant 0 : index
    %23 = vector.load %arg2[%c2_15, %c0_16, %c0_17] : memref<9x72x50xf32, #tpu.memory_space<vmem>>, vector<1x72x50xf32>
    %24 = vector.shape_cast %23 : vector<1x72x50xf32> to vector<72x50xf32>
    %cst_18 = arith.constant dense<0.000000e+00> : vector<72x32xf32>
    %25 = tpu.matmul %24, %22, %cst_18 {dimension_numbers = #tpu.dot_dimension_numbers<[1], [0], [0], [1], [0, 0, 1, 1], [], []>} : vector<72x50xf32>, vector<50x32xf32>, vector<72x32xf32> -> vector<72x32xf32>
    %26 = arith.addf %17, %25 : vector<72x32xf32>
    %c3 = arith.constant 3 : index
    %c0_19 = arith.constant 0 : index
    %c0_20 = arith.constant 0 : index
    %27 = vector.load %arg3[%c3, %c0_19, %c0_20] : memref<9x1x32xf32, #tpu.memory_space<vmem>>, vector<1x1x32xf32>
    %28 = vector.shape_cast %27 : vector<1x1x32xf32> to vector<1x32xf32>
    %29 = vector.broadcast %0 : vector<50x1xf32> to vector<50x32xf32>
    %30 = vector.broadcast %28 : vector<1x32xf32> to vector<50x32xf32>
    %31 = arith.mulf %29, %30 : vector<50x32xf32>
    %c3_21 = arith.constant 3 : index
    %c0_22 = arith.constant 0 : index
    %c0_23 = arith.constant 0 : index
    %32 = vector.load %arg2[%c3_21, %c0_22, %c0_23] : memref<9x72x50xf32, #tpu.memory_space<vmem>>, vector<1x72x50xf32>
    %33 = vector.shape_cast %32 : vector<1x72x50xf32> to vector<72x50xf32>
    %cst_24 = arith.constant dense<0.000000e+00> : vector<72x32xf32>
    %34 = tpu.matmul %33, %31, %cst_24 {dimension_numbers = #tpu.dot_dimension_numbers<[1], [0], [0], [1], [0, 0, 1, 1], [], []>} : vector<72x50xf32>, vector<50x32xf32>, vector<72x32xf32> -> vector<72x32xf32>
    %35 = arith.addf %26, %34 : vector<72x32xf32>
    %c4 = arith.constant 4 : index
    %c0_25 = arith.constant 0 : index
    %c0_26 = arith.constant 0 : index
    %36 = vector.load %arg3[%c4, %c0_25, %c0_26] : memref<9x1x32xf32, #tpu.memory_space<vmem>>, vector<1x1x32xf32>
    %37 = vector.shape_cast %36 : vector<1x1x32xf32> to vector<1x32xf32>
    %38 = vector.broadcast %0 : vector<50x1xf32> to vector<50x32xf32>
    %39 = vector.broadcast %37 : vector<1x32xf32> to vector<50x32xf32>
    %40 = arith.mulf %38, %39 : vector<50x32xf32>
    %c4_27 = arith.constant 4 : index
    %c0_28 = arith.constant 0 : index
    %c0_29 = arith.constant 0 : index
    %41 = vector.load %arg2[%c4_27, %c0_28, %c0_29] : memref<9x72x50xf32, #tpu.memory_space<vmem>>, vector<1x72x50xf32>
    %42 = vector.shape_cast %41 : vector<1x72x50xf32> to vector<72x50xf32>
    %cst_30 = arith.constant dense<0.000000e+00> : vector<72x32xf32>
    %43 = tpu.matmul %42, %40, %cst_30 {dimension_numbers = #tpu.dot_dimension_numbers<[1], [0], [0], [1], [0, 0, 1, 1], [], []>} : vector<72x50xf32>, vector<50x32xf32>, vector<72x32xf32> -> vector<72x32xf32>
    %44 = arith.addf %35, %43 : vector<72x32xf32>
    %c5 = arith.constant 5 : index
    %c0_31 = arith.constant 0 : index
    %c0_32 = arith.constant 0 : index
    %45 = vector.load %arg3[%c5, %c0_31, %c0_32] : memref<9x1x32xf32, #tpu.memory_space<vmem>>, vector<1x1x32xf32>
    %46 = vector.shape_cast %45 : vector<1x1x32xf32> to vector<1x32xf32>
    %47 = vector.broadcast %0 : vector<50x1xf32> to vector<50x32xf32>
    %48 = vector.broadcast %46 : vector<1x32xf32> to vector<50x32xf32>
    %49 = arith.mulf %47, %48 : vector<50x32xf32>
    %c5_33 = arith.constant 5 : index
    %c0_34 = arith.constant 0 : index
    %c0_35 = arith.constant 0 : index
    %50 = vector.load %arg2[%c5_33, %c0_34, %c0_35] : memref<9x72x50xf32, #tpu.memory_space<vmem>>, vector<1x72x50xf32>
    %51 = vector.shape_cast %50 : vector<1x72x50xf32> to vector<72x50xf32>
    %cst_36 = arith.constant dense<0.000000e+00> : vector<72x32xf32>
    %52 = tpu.matmul %51, %49, %cst_36 {dimension_numbers = #tpu.dot_dimension_numbers<[1], [0], [0], [1], [0, 0, 1, 1], [], []>} : vector<72x50xf32>, vector<50x32xf32>, vector<72x32xf32> -> vector<72x32xf32>
    %53 = arith.addf %44, %52 : vector<72x32xf32>
    %c6 = arith.constant 6 : index
    %c0_37 = arith.constant 0 : index
    %c0_38 = arith.constant 0 : index
    %54 = vector.load %arg3[%c6, %c0_37, %c0_38] : memref<9x1x32xf32, #tpu.memory_space<vmem>>, vector<1x1x32xf32>
    %55 = vector.shape_cast %54 : vector<1x1x32xf32> to vector<1x32xf32>
    %56 = vector.broadcast %0 : vector<50x1xf32> to vector<50x32xf32>
    %57 = vector.broadcast %55 : vector<1x32xf32> to vector<50x32xf32>
    %58 = arith.mulf %56, %57 : vector<50x32xf32>
    %c6_39 = arith.constant 6 : index
    %c0_40 = arith.constant 0 : index
    %c0_41 = arith.constant 0 : index
    %59 = vector.load %arg2[%c6_39, %c0_40, %c0_41] : memref<9x72x50xf32, #tpu.memory_space<vmem>>, vector<1x72x50xf32>
    %60 = vector.shape_cast %59 : vector<1x72x50xf32> to vector<72x50xf32>
    %cst_42 = arith.constant dense<0.000000e+00> : vector<72x32xf32>
    %61 = tpu.matmul %60, %58, %cst_42 {dimension_numbers = #tpu.dot_dimension_numbers<[1], [0], [0], [1], [0, 0, 1, 1], [], []>} : vector<72x50xf32>, vector<50x32xf32>, vector<72x32xf32> -> vector<72x32xf32>
    %62 = arith.addf %53, %61 : vector<72x32xf32>
    %c7 = arith.constant 7 : index
    %c0_43 = arith.constant 0 : index
    %c0_44 = arith.constant 0 : index
    %63 = vector.load %arg3[%c7, %c0_43, %c0_44] : memref<9x1x32xf32, #tpu.memory_space<vmem>>, vector<1x1x32xf32>
    %64 = vector.shape_cast %63 : vector<1x1x32xf32> to vector<1x32xf32>
    %65 = vector.broadcast %0 : vector<50x1xf32> to vector<50x32xf32>
    %66 = vector.broadcast %64 : vector<1x32xf32> to vector<50x32xf32>
    %67 = arith.mulf %65, %66 : vector<50x32xf32>
    %c7_45 = arith.constant 7 : index
    %c0_46 = arith.constant 0 : index
    %c0_47 = arith.constant 0 : index
    %68 = vector.load %arg2[%c7_45, %c0_46, %c0_47] : memref<9x72x50xf32, #tpu.memory_space<vmem>>, vector<1x72x50xf32>
    %69 = vector.shape_cast %68 : vector<1x72x50xf32> to vector<72x50xf32>
    %cst_48 = arith.constant dense<0.000000e+00> : vector<72x32xf32>
    %70 = tpu.matmul %69, %67, %cst_48 {dimension_numbers = #tpu.dot_dimension_numbers<[1], [0], [0], [1], [0, 0, 1, 1], [], []>} : vector<72x50xf32>, vector<50x32xf32>, vector<72x32xf32> -> vector<72x32xf32>
    %71 = arith.addf %62, %70 : vector<72x32xf32>
    %c8 = arith.constant 8 : index
    %c0_49 = arith.constant 0 : index
    %c0_50 = arith.constant 0 : index
    %72 = vector.load %arg3[%c8, %c0_49, %c0_50] : memref<9x1x32xf32, #tpu.memory_space<vmem>>, vector<1x1x32xf32>
    %73 = vector.shape_cast %72 : vector<1x1x32xf32> to vector<1x32xf32>
    %74 = vector.broadcast %0 : vector<50x1xf32> to vector<50x32xf32>
    %75 = vector.broadcast %73 : vector<1x32xf32> to vector<50x32xf32>
    %76 = arith.mulf %74, %75 : vector<50x32xf32>
    %c8_51 = arith.constant 8 : index
    %c0_52 = arith.constant 0 : index
    %c0_53 = arith.constant 0 : index
    %77 = vector.load %arg2[%c8_51, %c0_52, %c0_53] : memref<9x72x50xf32, #tpu.memory_space<vmem>>, vector<1x72x50xf32>
    %78 = vector.shape_cast %77 : vector<1x72x50xf32> to vector<72x50xf32>
    %cst_54 = arith.constant dense<0.000000e+00> : vector<72x32xf32>
    %79 = tpu.matmul %78, %76, %cst_54 {dimension_numbers = #tpu.dot_dimension_numbers<[1], [0], [0], [1], [0, 0, 1, 1], [], []>} : vector<72x50xf32>, vector<50x32xf32>, vector<72x32xf32> -> vector<72x32xf32>
    %80 = arith.addf %71, %79 : vector<72x32xf32>
    %c0_55 = arith.constant 0 : index
    %c0_56 = arith.constant 0 : index
    %81 = vector.load %arg4[%c0_55, %c0_56] : memref<1x32xf32, #tpu.memory_space<vmem>>, vector<1x32xf32>
    %82 = vector.broadcast %81 : vector<1x32xf32> to vector<72x32xf32>
    %83 = arith.addf %80, %82 : vector<72x32xf32>
    %cst_57 = arith.constant 0.000000e+00 : f32
    %84 = vector.broadcast %cst_57 : f32 to vector<72x32xf32>
    %85 = arith.maximumf %83, %84 : vector<72x32xf32>
    %c0_58 = arith.constant 0 : index
    %c0_59 = arith.constant 0 : index
    %c0_60 = arith.constant 0 : index
    %86 = vector.load %arg5[%c0_58, %c0_59, %c0_60] : memref<4x18x72xf32, #tpu.memory_space<vmem>>, vector<1x18x72xf32>
    %87 = vector.shape_cast %86 : vector<1x18x72xf32> to vector<18x72xf32>
    %cst_61 = arith.constant dense<0.000000e+00> : vector<18x32xf32>
    %88 = tpu.matmul %87, %85, %cst_61 {dimension_numbers = #tpu.dot_dimension_numbers<[1], [0], [0], [1], [0, 0, 1, 1], [], []>} : vector<18x72xf32>, vector<72x32xf32>, vector<18x32xf32> -> vector<18x32xf32>
    %c1_62 = arith.constant 1 : index
    %c0_63 = arith.constant 0 : index
    %c0_64 = arith.constant 0 : index
    %89 = vector.load %arg5[%c1_62, %c0_63, %c0_64] : memref<4x18x72xf32, #tpu.memory_space<vmem>>, vector<1x18x72xf32>
    %90 = vector.shape_cast %89 : vector<1x18x72xf32> to vector<18x72xf32>
    %cst_65 = arith.constant dense<0.000000e+00> : vector<18x32xf32>
    %91 = tpu.matmul %90, %85, %cst_65 {dimension_numbers = #tpu.dot_dimension_numbers<[1], [0], [0], [1], [0, 0, 1, 1], [], []>} : vector<18x72xf32>, vector<72x32xf32>, vector<18x32xf32> -> vector<18x32xf32>
    %92 = arith.maximumf %88, %91 : vector<18x32xf32>
    %c2_66 = arith.constant 2 : index
    %c0_67 = arith.constant 0 : index
    %c0_68 = arith.constant 0 : index
    %93 = vector.load %arg5[%c2_66, %c0_67, %c0_68] : memref<4x18x72xf32, #tpu.memory_space<vmem>>, vector<1x18x72xf32>
    %94 = vector.shape_cast %93 : vector<1x18x72xf32> to vector<18x72xf32>
    %cst_69 = arith.constant dense<0.000000e+00> : vector<18x32xf32>
    %95 = tpu.matmul %94, %85, %cst_69 {dimension_numbers = #tpu.dot_dimension_numbers<[1], [0], [0], [1], [0, 0, 1, 1], [], []>} : vector<18x72xf32>, vector<72x32xf32>, vector<18x32xf32> -> vector<18x32xf32>
    %96 = arith.maximumf %92, %95 : vector<18x32xf32>
    %c3_70 = arith.constant 3 : index
    %c0_71 = arith.constant 0 : index
    %c0_72 = arith.constant 0 : index
    %97 = vector.load %arg5[%c3_70, %c0_71, %c0_72] : memref<4x18x72xf32, #tpu.memory_space<vmem>>, vector<1x18x72xf32>
    %98 = vector.shape_cast %97 : vector<1x18x72xf32> to vector<18x72xf32>
    %cst_73 = arith.constant dense<0.000000e+00> : vector<18x32xf32>
    %99 = tpu.matmul %98, %85, %cst_73 {dimension_numbers = #tpu.dot_dimension_numbers<[1], [0], [0], [1], [0, 0, 1, 1], [], []>} : vector<18x72xf32>, vector<72x32xf32>, vector<18x32xf32> -> vector<18x32xf32>
    %100 = arith.maximumf %96, %99 : vector<18x32xf32>
    %c0_74 = arith.constant 0 : index
    %c0_75 = arith.constant 0 : index
    %c0_76 = arith.constant 0 : index
    %101 = vector.load %arg7[%c0_74, %c0_75, %c0_76] : memref<9x32x64xf32, #tpu.memory_space<vmem>>, vector<1x32x64xf32>
    %102 = vector.shape_cast %101 : vector<1x32x64xf32> to vector<32x64xf32>
    %cst_77 = arith.constant dense<0.000000e+00> : vector<18x64xf32>
    %103 = tpu.matmul %100, %102, %cst_77 {dimension_numbers = #tpu.dot_dimension_numbers<[1], [0], [0], [1], [0, 0, 1, 1], [], []>} : vector<18x32xf32>, vector<32x64xf32>, vector<18x64xf32> -> vector<18x64xf32>
    %c0_78 = arith.constant 0 : index
    %c0_79 = arith.constant 0 : index
    %c0_80 = arith.constant 0 : index
    %104 = vector.load %arg6[%c0_78, %c0_79, %c0_80] : memref<9x32x18xf32, #tpu.memory_space<vmem>>, vector<1x32x18xf32>
    %105 = vector.shape_cast %104 : vector<1x32x18xf32> to vector<32x18xf32>
    %cst_81 = arith.constant dense<0.000000e+00> : vector<32x64xf32>
    %106 = tpu.matmul %105, %103, %cst_81 {dimension_numbers = #tpu.dot_dimension_numbers<[1], [0], [0], [1], [0, 0, 1, 1], [], []>} : vector<32x18xf32>, vector<18x64xf32>, vector<32x64xf32> -> vector<32x64xf32>
    %c1_82 = arith.constant 1 : index
    %c0_83 = arith.constant 0 : index
    %c0_84 = arith.constant 0 : index
    %107 = vector.load %arg7[%c1_82, %c0_83, %c0_84] : memref<9x32x64xf32, #tpu.memory_space<vmem>>, vector<1x32x64xf32>
    %108 = vector.shape_cast %107 : vector<1x32x64xf32> to vector<32x64xf32>
    %cst_85 = arith.constant dense<0.000000e+00> : vector<18x64xf32>
    %109 = tpu.matmul %100, %108, %cst_85 {dimension_numbers = #tpu.dot_dimension_numbers<[1], [0], [0], [1], [0, 0, 1, 1], [], []>} : vector<18x32xf32>, vector<32x64xf32>, vector<18x64xf32> -> vector<18x64xf32>
    %c1_86 = arith.constant 1 : index
    %c0_87 = arith.constant 0 : index
    %c0_88 = arith.constant 0 : index
    %110 = vector.load %arg6[%c1_86, %c0_87, %c0_88] : memref<9x32x18xf32, #tpu.memory_space<vmem>>, vector<1x32x18xf32>
    %111 = vector.shape_cast %110 : vector<1x32x18xf32> to vector<32x18xf32>
    %cst_89 = arith.constant dense<0.000000e+00> : vector<32x64xf32>
    %112 = tpu.matmul %111, %109, %cst_89 {dimension_numbers = #tpu.dot_dimension_numbers<[1], [0], [0], [1], [0, 0, 1, 1], [], []>} : vector<32x18xf32>, vector<18x64xf32>, vector<32x64xf32> -> vector<32x64xf32>
    %113 = arith.addf %106, %112 : vector<32x64xf32>
    %c2_90 = arith.constant 2 : index
    %c0_91 = arith.constant 0 : index
    %c0_92 = arith.constant 0 : index
    %114 = vector.load %arg7[%c2_90, %c0_91, %c0_92] : memref<9x32x64xf32, #tpu.memory_space<vmem>>, vector<1x32x64xf32>
    %115 = vector.shape_cast %114 : vector<1x32x64xf32> to vector<32x64xf32>
    %cst_93 = arith.constant dense<0.000000e+00> : vector<18x64xf32>
    %116 = tpu.matmul %100, %115, %cst_93 {dimension_numbers = #tpu.dot_dimension_numbers<[1], [0], [0], [1], [0, 0, 1, 1], [], []>} : vector<18x32xf32>, vector<32x64xf32>, vector<18x64xf32> -> vector<18x64xf32>
    %c2_94 = arith.constant 2 : index
    %c0_95 = arith.constant 0 : index
    %c0_96 = arith.constant 0 : index
    %117 = vector.load %arg6[%c2_94, %c0_95, %c0_96] : memref<9x32x18xf32, #tpu.memory_space<vmem>>, vector<1x32x18xf32>
    %118 = vector.shape_cast %117 : vector<1x32x18xf32> to vector<32x18xf32>
    %cst_97 = arith.constant dense<0.000000e+00> : vector<32x64xf32>
    %119 = tpu.matmul %118, %116, %cst_97 {dimension_numbers = #tpu.dot_dimension_numbers<[1], [0], [0], [1], [0, 0, 1, 1], [], []>} : vector<32x18xf32>, vector<18x64xf32>, vector<32x64xf32> -> vector<32x64xf32>
    %120 = arith.addf %113, %119 : vector<32x64xf32>
    %c3_98 = arith.constant 3 : index
    %c0_99 = arith.constant 0 : index
    %c0_100 = arith.constant 0 : index
    %121 = vector.load %arg7[%c3_98, %c0_99, %c0_100] : memref<9x32x64xf32, #tpu.memory_space<vmem>>, vector<1x32x64xf32>
    %122 = vector.shape_cast %121 : vector<1x32x64xf32> to vector<32x64xf32>
    %cst_101 = arith.constant dense<0.000000e+00> : vector<18x64xf32>
    %123 = tpu.matmul %100, %122, %cst_101 {dimension_numbers = #tpu.dot_dimension_numbers<[1], [0], [0], [1], [0, 0, 1, 1], [], []>} : vector<18x32xf32>, vector<32x64xf32>, vector<18x64xf32> -> vector<18x64xf32>
    %c3_102 = arith.constant 3 : index
    %c0_103 = arith.constant 0 : index
    %c0_104 = arith.constant 0 : index
    %124 = vector.load %arg6[%c3_102, %c0_103, %c0_104] : memref<9x32x18xf32, #tpu.memory_space<vmem>>, vector<1x32x18xf32>
    %125 = vector.shape_cast %124 : vector<1x32x18xf32> to vector<32x18xf32>
    %cst_105 = arith.constant dense<0.000000e+00> : vector<32x64xf32>
    %126 = tpu.matmul %125, %123, %cst_105 {dimension_numbers = #tpu.dot_dimension_numbers<[1], [0], [0], [1], [0, 0, 1, 1], [], []>} : vector<32x18xf32>, vector<18x64xf32>, vector<32x64xf32> -> vector<32x64xf32>
    %127 = arith.addf %120, %126 : vector<32x64xf32>
    %c4_106 = arith.constant 4 : index
    %c0_107 = arith.constant 0 : index
    %c0_108 = arith.constant 0 : index
    %128 = vector.load %arg7[%c4_106, %c0_107, %c0_108] : memref<9x32x64xf32, #tpu.memory_space<vmem>>, vector<1x32x64xf32>
    %129 = vector.shape_cast %128 : vector<1x32x64xf32> to vector<32x64xf32>
    %cst_109 = arith.constant dense<0.000000e+00> : vector<18x64xf32>
    %130 = tpu.matmul %100, %129, %cst_109 {dimension_numbers = #tpu.dot_dimension_numbers<[1], [0], [0], [1], [0, 0, 1, 1], [], []>} : vector<18x32xf32>, vector<32x64xf32>, vector<18x64xf32> -> vector<18x64xf32>
    %c4_110 = arith.constant 4 : index
    %c0_111 = arith.constant 0 : index
    %c0_112 = arith.constant 0 : index
    %131 = vector.load %arg6[%c4_110, %c0_111, %c0_112] : memref<9x32x18xf32, #tpu.memory_space<vmem>>, vector<1x32x18xf32>
    %132 = vector.shape_cast %131 : vector<1x32x18xf32> to vector<32x18xf32>
    %cst_113 = arith.constant dense<0.000000e+00> : vector<32x64xf32>
    %133 = tpu.matmul %132, %130, %cst_113 {dimension_numbers = #tpu.dot_dimension_numbers<[1], [0], [0], [1], [0, 0, 1, 1], [], []>} : vector<32x18xf32>, vector<18x64xf32>, vector<32x64xf32> -> vector<32x64xf32>
    %134 = arith.addf %127, %133 : vector<32x64xf32>
    %c5_114 = arith.constant 5 : index
    %c0_115 = arith.constant 0 : index
    %c0_116 = arith.constant 0 : index
    %135 = vector.load %arg7[%c5_114, %c0_115, %c0_116] : memref<9x32x64xf32, #tpu.memory_space<vmem>>, vector<1x32x64xf32>
    %136 = vector.shape_cast %135 : vector<1x32x64xf32> to vector<32x64xf32>
    %cst_117 = arith.constant dense<0.000000e+00> : vector<18x64xf32>
    %137 = tpu.matmul %100, %136, %cst_117 {dimension_numbers = #tpu.dot_dimension_numbers<[1], [0], [0], [1], [0, 0, 1, 1], [], []>} : vector<18x32xf32>, vector<32x64xf32>, vector<18x64xf32> -> vector<18x64xf32>
    %c5_118 = arith.constant 5 : index
    %c0_119 = arith.constant 0 : index
    %c0_120 = arith.constant 0 : index
    %138 = vector.load %arg6[%c5_118, %c0_119, %c0_120] : memref<9x32x18xf32, #tpu.memory_space<vmem>>, vector<1x32x18xf32>
    %139 = vector.shape_cast %138 : vector<1x32x18xf32> to vector<32x18xf32>
    %cst_121 = arith.constant dense<0.000000e+00> : vector<32x64xf32>
    %140 = tpu.matmul %139, %137, %cst_121 {dimension_numbers = #tpu.dot_dimension_numbers<[1], [0], [0], [1], [0, 0, 1, 1], [], []>} : vector<32x18xf32>, vector<18x64xf32>, vector<32x64xf32> -> vector<32x64xf32>
    %141 = arith.addf %134, %140 : vector<32x64xf32>
    %c6_122 = arith.constant 6 : index
    %c0_123 = arith.constant 0 : index
    %c0_124 = arith.constant 0 : index
    %142 = vector.load %arg7[%c6_122, %c0_123, %c0_124] : memref<9x32x64xf32, #tpu.memory_space<vmem>>, vector<1x32x64xf32>
    %143 = vector.shape_cast %142 : vector<1x32x64xf32> to vector<32x64xf32>
    %cst_125 = arith.constant dense<0.000000e+00> : vector<18x64xf32>
    %144 = tpu.matmul %100, %143, %cst_125 {dimension_numbers = #tpu.dot_dimension_numbers<[1], [0], [0], [1], [0, 0, 1, 1], [], []>} : vector<18x32xf32>, vector<32x64xf32>, vector<18x64xf32> -> vector<18x64xf32>
    %c6_126 = arith.constant 6 : index
    %c0_127 = arith.constant 0 : index
    %c0_128 = arith.constant 0 : index
    %145 = vector.load %arg6[%c6_126, %c0_127, %c0_128] : memref<9x32x18xf32, #tpu.memory_space<vmem>>, vector<1x32x18xf32>
    %146 = vector.shape_cast %145 : vector<1x32x18xf32> to vector<32x18xf32>
    %cst_129 = arith.constant dense<0.000000e+00> : vector<32x64xf32>
    %147 = tpu.matmul %146, %144, %cst_129 {dimension_numbers = #tpu.dot_dimension_numbers<[1], [0], [0], [1], [0, 0, 1, 1], [], []>} : vector<32x18xf32>, vector<18x64xf32>, vector<32x64xf32> -> vector<32x64xf32>
    %148 = arith.addf %141, %147 : vector<32x64xf32>
    %c7_130 = arith.constant 7 : index
    %c0_131 = arith.constant 0 : index
    %c0_132 = arith.constant 0 : index
    %149 = vector.load %arg7[%c7_130, %c0_131, %c0_132] : memref<9x32x64xf32, #tpu.memory_space<vmem>>, vector<1x32x64xf32>
    %150 = vector.shape_cast %149 : vector<1x32x64xf32> to vector<32x64xf32>
    %cst_133 = arith.constant dense<0.000000e+00> : vector<18x64xf32>
    %151 = tpu.matmul %100, %150, %cst_133 {dimension_numbers = #tpu.dot_dimension_numbers<[1], [0], [0], [1], [0, 0, 1, 1], [], []>} : vector<18x32xf32>, vector<32x64xf32>, vector<18x64xf32> -> vector<18x64xf32>
    %c7_134 = arith.constant 7 : index
    %c0_135 = arith.constant 0 : index
    %c0_136 = arith.constant 0 : index
    %152 = vector.load %arg6[%c7_134, %c0_135, %c0_136] : memref<9x32x18xf32, #tpu.memory_space<vmem>>, vector<1x32x18xf32>
    %153 = vector.shape_cast %152 : vector<1x32x18xf32> to vector<32x18xf32>
    %cst_137 = arith.constant dense<0.000000e+00> : vector<32x64xf32>
    %154 = tpu.matmul %153, %151, %cst_137 {dimension_numbers = #tpu.dot_dimension_numbers<[1], [0], [0], [1], [0, 0, 1, 1], [], []>} : vector<32x18xf32>, vector<18x64xf32>, vector<32x64xf32> -> vector<32x64xf32>
    %155 = arith.addf %148, %154 : vector<32x64xf32>
    %c8_138 = arith.constant 8 : index
    %c0_139 = arith.constant 0 : index
    %c0_140 = arith.constant 0 : index
    %156 = vector.load %arg7[%c8_138, %c0_139, %c0_140] : memref<9x32x64xf32, #tpu.memory_space<vmem>>, vector<1x32x64xf32>
    %157 = vector.shape_cast %156 : vector<1x32x64xf32> to vector<32x64xf32>
    %cst_141 = arith.constant dense<0.000000e+00> : vector<18x64xf32>
    %158 = tpu.matmul %100, %157, %cst_141 {dimension_numbers = #tpu.dot_dimension_numbers<[1], [0], [0], [1], [0, 0, 1, 1], [], []>} : vector<18x32xf32>, vector<32x64xf32>, vector<18x64xf32> -> vector<18x64xf32>
    %c8_142 = arith.constant 8 : index
    %c0_143 = arith.constant 0 : index
    %c0_144 = arith.constant 0 : index
    %159 = vector.load %arg6[%c8_142, %c0_143, %c0_144] : memref<9x32x18xf32, #tpu.memory_space<vmem>>, vector<1x32x18xf32>
    %160 = vector.shape_cast %159 : vector<1x32x18xf32> to vector<32x18xf32>
    %cst_145 = arith.constant dense<0.000000e+00> : vector<32x64xf32>
    %161 = tpu.matmul %160, %158, %cst_145 {dimension_numbers = #tpu.dot_dimension_numbers<[1], [0], [0], [1], [0, 0, 1, 1], [], []>} : vector<32x18xf32>, vector<18x64xf32>, vector<32x64xf32> -> vector<32x64xf32>
    %162 = arith.addf %155, %161 : vector<32x64xf32>
    %c0_146 = arith.constant 0 : index
    %c0_147 = arith.constant 0 : index
    %163 = vector.load %arg8[%c0_146, %c0_147] : memref<1x64xf32, #tpu.memory_space<vmem>>, vector<1x64xf32>
    %164 = vector.broadcast %163 : vector<1x64xf32> to vector<32x64xf32>
    %165 = arith.addf %162, %164 : vector<32x64xf32>
    %cst_148 = arith.constant 0.000000e+00 : f32
    %166 = vector.broadcast %cst_148 : f32 to vector<32x64xf32>
    %167 = arith.maximumf %165, %166 : vector<32x64xf32>
    %c0_149 = arith.constant 0 : index
    %c0_150 = arith.constant 0 : index
    %c0_151 = arith.constant 0 : index
    %168 = vector.load %arg9[%c0_149, %c0_150, %c0_151] : memref<4x8x32xf32, #tpu.memory_space<vmem>>, vector<1x8x32xf32>
    %169 = vector.shape_cast %168 : vector<1x8x32xf32> to vector<8x32xf32>
    %cst_152 = arith.constant dense<0.000000e+00> : vector<8x64xf32>
    %170 = tpu.matmul %169, %167, %cst_152 {dimension_numbers = #tpu.dot_dimension_numbers<[1], [0], [0], [1], [0, 0, 1, 1], [], []>} : vector<8x32xf32>, vector<32x64xf32>, vector<8x64xf32> -> vector<8x64xf32>
    %c1_153 = arith.constant 1 : index
    %c0_154 = arith.constant 0 : index
    %c0_155 = arith.constant 0 : index
    %171 = vector.load %arg9[%c1_153, %c0_154, %c0_155] : memref<4x8x32xf32, #tpu.memory_space<vmem>>, vector<1x8x32xf32>
    %172 = vector.shape_cast %171 : vector<1x8x32xf32> to vector<8x32xf32>
    %cst_156 = arith.constant dense<0.000000e+00> : vector<8x64xf32>
    %173 = tpu.matmul %172, %167, %cst_156 {dimension_numbers = #tpu.dot_dimension_numbers<[1], [0], [0], [1], [0, 0, 1, 1], [], []>} : vector<8x32xf32>, vector<32x64xf32>, vector<8x64xf32> -> vector<8x64xf32>
    %174 = arith.maximumf %170, %173 : vector<8x64xf32>
    %c2_157 = arith.constant 2 : index
    %c0_158 = arith.constant 0 : index
    %c0_159 = arith.constant 0 : index
    %175 = vector.load %arg9[%c2_157, %c0_158, %c0_159] : memref<4x8x32xf32, #tpu.memory_space<vmem>>, vector<1x8x32xf32>
    %176 = vector.shape_cast %175 : vector<1x8x32xf32> to vector<8x32xf32>
    %cst_160 = arith.constant dense<0.000000e+00> : vector<8x64xf32>
    %177 = tpu.matmul %176, %167, %cst_160 {dimension_numbers = #tpu.dot_dimension_numbers<[1], [0], [0], [1], [0, 0, 1, 1], [], []>} : vector<8x32xf32>, vector<32x64xf32>, vector<8x64xf32> -> vector<8x64xf32>
    %178 = arith.maximumf %174, %177 : vector<8x64xf32>
    %c3_161 = arith.constant 3 : index
    %c0_162 = arith.constant 0 : index
    %c0_163 = arith.constant 0 : index
    %179 = vector.load %arg9[%c3_161, %c0_162, %c0_163] : memref<4x8x32xf32, #tpu.memory_space<vmem>>, vector<1x8x32xf32>
    %180 = vector.shape_cast %179 : vector<1x8x32xf32> to vector<8x32xf32>
    %cst_164 = arith.constant dense<0.000000e+00> : vector<8x64xf32>
    %181 = tpu.matmul %180, %167, %cst_164 {dimension_numbers = #tpu.dot_dimension_numbers<[1], [0], [0], [1], [0, 0, 1, 1], [], []>} : vector<8x32xf32>, vector<32x64xf32>, vector<8x64xf32> -> vector<8x64xf32>
    %182 = arith.maximumf %178, %181 : vector<8x64xf32>
    %c0_165 = arith.constant 0 : index
    %c0_166 = arith.constant 0 : index
    %c0_167 = arith.constant 0 : index
    %183 = vector.load %arg10[%c0_165, %c0_166, %c0_167] : memref<4x2x8xf32, #tpu.memory_space<vmem>>, vector<1x2x8xf32>
    %184 = vector.shape_cast %183 : vector<1x2x8xf32> to vector<2x8xf32>
    %cst_168 = arith.constant dense<0.000000e+00> : vector<2x64xf32>
    %185 = tpu.matmul %184, %182, %cst_168 {dimension_numbers = #tpu.dot_dimension_numbers<[1], [0], [0], [1], [0, 0, 1, 1], [], []>} : vector<2x8xf32>, vector<8x64xf32>, vector<2x64xf32> -> vector<2x64xf32>
    %c0_169 = arith.constant 0 : index
    %c0_170 = arith.constant 0 : index
    %c0_171 = arith.constant 0 : index
    %186 = vector.load %arg11[%c0_169, %c0_170, %c0_171] : memref<4x64x128xf32, #tpu.memory_space<vmem>>, vector<1x64x128xf32>
    %187 = vector.shape_cast %186 : vector<1x64x128xf32> to vector<64x128xf32>
    %cst_172 = arith.constant dense<0.000000e+00> : vector<2x128xf32>
    %188 = tpu.matmul %185, %187, %cst_172 {dimension_numbers = #tpu.dot_dimension_numbers<[1], [0], [0], [1], [0, 0, 1, 1], [], []>} : vector<2x64xf32>, vector<64x128xf32>, vector<2x128xf32> -> vector<2x128xf32>
    %c1_173 = arith.constant 1 : index
    %c0_174 = arith.constant 0 : index
    %c0_175 = arith.constant 0 : index
    %189 = vector.load %arg10[%c1_173, %c0_174, %c0_175] : memref<4x2x8xf32, #tpu.memory_space<vmem>>, vector<1x2x8xf32>
    %190 = vector.shape_cast %189 : vector<1x2x8xf32> to vector<2x8xf32>
    %cst_176 = arith.constant dense<0.000000e+00> : vector<2x64xf32>
    %191 = tpu.matmul %190, %182, %cst_176 {dimension_numbers = #tpu.dot_dimension_numbers<[1], [0], [0], [1], [0, 0, 1, 1], [], []>} : vector<2x8xf32>, vector<8x64xf32>, vector<2x64xf32> -> vector<2x64xf32>
    %c1_177 = arith.constant 1 : index
    %c0_178 = arith.constant 0 : index
    %c0_179 = arith.constant 0 : index
    %192 = vector.load %arg11[%c1_177, %c0_178, %c0_179] : memref<4x64x128xf32, #tpu.memory_space<vmem>>, vector<1x64x128xf32>
    %193 = vector.shape_cast %192 : vector<1x64x128xf32> to vector<64x128xf32>
    %cst_180 = arith.constant dense<0.000000e+00> : vector<2x128xf32>
    %194 = tpu.matmul %191, %193, %cst_180 {dimension_numbers = #tpu.dot_dimension_numbers<[1], [0], [0], [1], [0, 0, 1, 1], [], []>} : vector<2x64xf32>, vector<64x128xf32>, vector<2x128xf32> -> vector<2x128xf32>
    %195 = arith.addf %188, %194 : vector<2x128xf32>
    %c2_181 = arith.constant 2 : index
    %c0_182 = arith.constant 0 : index
    %c0_183 = arith.constant 0 : index
    %196 = vector.load %arg10[%c2_181, %c0_182, %c0_183] : memref<4x2x8xf32, #tpu.memory_space<vmem>>, vector<1x2x8xf32>
    %197 = vector.shape_cast %196 : vector<1x2x8xf32> to vector<2x8xf32>
    %cst_184 = arith.constant dense<0.000000e+00> : vector<2x64xf32>
    %198 = tpu.matmul %197, %182, %cst_184 {dimension_numbers = #tpu.dot_dimension_numbers<[1], [0], [0], [1], [0, 0, 1, 1], [], []>} : vector<2x8xf32>, vector<8x64xf32>, vector<2x64xf32> -> vector<2x64xf32>
    %c2_185 = arith.constant 2 : index
    %c0_186 = arith.constant 0 : index
    %c0_187 = arith.constant 0 : index
    %199 = vector.load %arg11[%c2_185, %c0_186, %c0_187] : memref<4x64x128xf32, #tpu.memory_space<vmem>>, vector<1x64x128xf32>
    %200 = vector.shape_cast %199 : vector<1x64x128xf32> to vector<64x128xf32>
    %cst_188 = arith.constant dense<0.000000e+00> : vector<2x128xf32>
    %201 = tpu.matmul %198, %200, %cst_188 {dimension_numbers = #tpu.dot_dimension_numbers<[1], [0], [0], [1], [0, 0, 1, 1], [], []>} : vector<2x64xf32>, vector<64x128xf32>, vector<2x128xf32> -> vector<2x128xf32>
    %202 = arith.addf %195, %201 : vector<2x128xf32>
    %c3_189 = arith.constant 3 : index
    %c0_190 = arith.constant 0 : index
    %c0_191 = arith.constant 0 : index
    %203 = vector.load %arg10[%c3_189, %c0_190, %c0_191] : memref<4x2x8xf32, #tpu.memory_space<vmem>>, vector<1x2x8xf32>
    %204 = vector.shape_cast %203 : vector<1x2x8xf32> to vector<2x8xf32>
    %cst_192 = arith.constant dense<0.000000e+00> : vector<2x64xf32>
    %205 = tpu.matmul %204, %182, %cst_192 {dimension_numbers = #tpu.dot_dimension_numbers<[1], [0], [0], [1], [0, 0, 1, 1], [], []>} : vector<2x8xf32>, vector<8x64xf32>, vector<2x64xf32> -> vector<2x64xf32>
    %c3_193 = arith.constant 3 : index
    %c0_194 = arith.constant 0 : index
    %c0_195 = arith.constant 0 : index
    %206 = vector.load %arg11[%c3_193, %c0_194, %c0_195] : memref<4x64x128xf32, #tpu.memory_space<vmem>>, vector<1x64x128xf32>
    %207 = vector.shape_cast %206 : vector<1x64x128xf32> to vector<64x128xf32>
    %cst_196 = arith.constant dense<0.000000e+00> : vector<2x128xf32>
    %208 = tpu.matmul %205, %207, %cst_196 {dimension_numbers = #tpu.dot_dimension_numbers<[1], [0], [0], [1], [0, 0, 1, 1], [], []>} : vector<2x64xf32>, vector<64x128xf32>, vector<2x128xf32> -> vector<2x128xf32>
    %209 = arith.addf %202, %208 : vector<2x128xf32>
    %c0_197 = arith.constant 0 : index
    %c0_198 = arith.constant 0 : index
    %210 = vector.load %arg12[%c0_197, %c0_198] : memref<1x128xf32, #tpu.memory_space<vmem>>, vector<1x128xf32>
    %211 = vector.broadcast %210 : vector<1x128xf32> to vector<2x128xf32>
    %212 = arith.addf %209, %211 : vector<2x128xf32>
    %cst_199 = arith.constant 0.000000e+00 : f32
    %213 = vector.broadcast %cst_199 : f32 to vector<2x128xf32>
    %214 = arith.maximumf %212, %213 : vector<2x128xf32>
    %c0_200 = arith.constant 0 : index
    %c0_201 = arith.constant 0 : index
    %215 = vector.load %arg13[%c0_200, %c0_201] : memref<128x25xf32, #tpu.memory_space<vmem>>, vector<128x25xf32>
    %cst_202 = arith.constant dense<0.000000e+00> : vector<2x25xf32>
    %216 = tpu.matmul %214, %215, %cst_202 {dimension_numbers = #tpu.dot_dimension_numbers<[1], [0], [0], [1], [0, 0, 1, 1], [], []>} : vector<2x128xf32>, vector<128x25xf32>, vector<2x25xf32> -> vector<2x25xf32>
    %c0_203 = arith.constant 0 : index
    %c0_204 = arith.constant 0 : index
    %217 = vector.load %arg14[%c0_203, %c0_204] : memref<1x25xf32, #tpu.memory_space<vmem>>, vector<1x25xf32>
    %218 = vector.broadcast %217 : vector<1x25xf32> to vector<2x25xf32>
    %219 = arith.addf %216, %218 : vector<2x25xf32>
    %c0_205 = arith.constant 0 : index
    %c0_206 = arith.constant 0 : index
    %220 = vector.load %arg15[%c0_205, %c0_206] : memref<2x25xf32, #tpu.memory_space<vmem>>, vector<2x25xf32>
    tpu.vector_store %arg15[%c0_205, %c0_206], %219 {strides = array<i32>} : memref<2x25xf32, #tpu.memory_space<vmem>>, vector<2x25xf32>,
    return
  }
  func.func @transform_0(%arg0: i32) -> (i32, i32) {
    %c0_i32 = arith.constant 0 : i32
    %c0_i32_0 = arith.constant 0 : i32
    %c0_i32_1 = arith.constant 0 : i32
    return %c0_i32, %c0_i32_0 : i32, i32
  }
  func.func @transform_1(%arg0: i32) -> (i32, i32, i32) {
    %c0_i32 = arith.constant 0 : i32
    %c0_i32_0 = arith.constant 0 : i32
    %c0_i32_1 = arith.constant 0 : i32
    %c0_i32_2 = arith.constant 0 : i32
    return %c0_i32, %c0_i32_0, %c0_i32_1 : i32, i32, i32
  }
  func.func @transform_2(%arg0: i32) -> (i32, i32, i32) {
    %c0_i32 = arith.constant 0 : i32
    %c0_i32_0 = arith.constant 0 : i32
    %c0_i32_1 = arith.constant 0 : i32
    %c0_i32_2 = arith.constant 0 : i32
    return %c0_i32, %c0_i32_0, %c0_i32_1 : i32, i32, i32
  }
  func.func @transform_3(%arg0: i32) -> (i32, i32) {
    %c0_i32 = arith.constant 0 : i32
    %c0_i32_0 = arith.constant 0 : i32
    %c0_i32_1 = arith.constant 0 : i32
    return %c0_i32, %c0_i32_0 : i32, i32
  }
  func.func @transform_4(%arg0: i32) -> (i32, i32, i32) {
    %c0_i32 = arith.constant 0 : i32
    %c0_i32_0 = arith.constant 0 : i32
    %c0_i32_1 = arith.constant 0 : i32
    %c0_i32_2 = arith.constant 0 : i32
    return %c0_i32, %c0_i32_0, %c0_i32_1 : i32, i32, i32
  }
  func.func @transform_5(%arg0: i32) -> (i32, i32, i32) {
    %c0_i32 = arith.constant 0 : i32
    %c0_i32_0 = arith.constant 0 : i32
    %c0_i32_1 = arith.constant 0 : i32
    %c0_i32_2 = arith.constant 0 : i32
    return %c0_i32, %c0_i32_0, %c0_i32_1 : i32, i32, i32
  }
  func.func @transform_6(%arg0: i32) -> (i32, i32, i32) {
    %c0_i32 = arith.constant 0 : i32
    %c0_i32_0 = arith.constant 0 : i32
    %c0_i32_1 = arith.constant 0 : i32
    %c0_i32_2 = arith.constant 0 : i32
    return %c0_i32, %c0_i32_0, %c0_i32_1 : i32, i32, i32
  }
  func.func @transform_7(%arg0: i32) -> (i32, i32) {
    %c0_i32 = arith.constant 0 : i32
    %c0_i32_0 = arith.constant 0 : i32
    %c0_i32_1 = arith.constant 0 : i32
    return %c0_i32, %c0_i32_0 : i32, i32
  }
  func.func @transform_8(%arg0: i32) -> (i32, i32, i32) {
    %c0_i32 = arith.constant 0 : i32
    %c0_i32_0 = arith.constant 0 : i32
    %c0_i32_1 = arith.constant 0 : i32
    %c0_i32_2 = arith.constant 0 : i32
    return %c0_i32, %c0_i32_0, %c0_i32_1 : i32, i32, i32
  }
  func.func @transform_9(%arg0: i32) -> (i32, i32, i32) {
    %c0_i32 = arith.constant 0 : i32
    %c0_i32_0 = arith.constant 0 : i32
    %c0_i32_1 = arith.constant 0 : i32
    %c0_i32_2 = arith.constant 0 : i32
    return %c0_i32, %c0_i32_0, %c0_i32_1 : i32, i32, i32
  }
  func.func @transform_10(%arg0: i32) -> (i32, i32, i32) {
    %c0_i32 = arith.constant 0 : i32
    %c0_i32_0 = arith.constant 0 : i32
    %c0_i32_1 = arith.constant 0 : i32
    %c0_i32_2 = arith.constant 0 : i32
    return %c0_i32, %c0_i32_0, %c0_i32_1 : i32, i32, i32
  }
  func.func @transform_11(%arg0: i32) -> (i32, i32) {
    %c0_i32 = arith.constant 0 : i32
    %c0_i32_0 = arith.constant 0 : i32
    %c0_i32_1 = arith.constant 0 : i32
    return %c0_i32, %c0_i32_0 : i32, i32
  }
  func.func @transform_12(%arg0: i32) -> (i32, i32) {
    %c0_i32 = arith.constant 0 : i32
    %c0_i32_0 = arith.constant 0 : i32
    %c0_i32_1 = arith.constant 0 : i32
    return %c0_i32, %c0_i32_0 : i32, i32
  }
  func.func @transform_13(%arg0: i32) -> (i32, i32) {
    %c0_i32 = arith.constant 0 : i32
    %c0_i32_0 = arith.constant 0 : i32
    %c0_i32_1 = arith.constant 0 : i32
    return %c0_i32, %c0_i32_0 : i32, i32
  }
  func.func @transform_14(%arg0: i32) -> (i32, i32) {
    %c0_i32 = arith.constant 0 : i32
    %c0_i32_0 = arith.constant 0 : i32
    %c0_i32_1 = arith.constant 0 : i32
    return %c0_i32, %c0_i32_0 : i32, i32
  }
}

</mosaic_0001>

<llo_original>
// kernel: fused_forward.1
$region0: #{fused_forward.1}
  #allocation0 [shape = 'u32[]', space=smem, size = 0x4, offset = 0x4, fixed_abs, tag = 'smem constant byte address 0x4 - core index']
  #allocation1 [shape = 'u32[144,128]{1,0:T(1,128)}', space=vmem, size = 0x12000, scoped, tag = 'internal scratch']
  %s0 = inlined_call_operand.vmem [shape: f32[50,1], index: 0, kind: input, shape index: {}]
  %s1 = inlined_call_operand.vmem [shape: f32[9,72,50], index: 1, kind: input, shape index: {}]
  %s2 = inlined_call_operand.vmem [shape: f32[9,1,32], index: 2, kind: input, shape index: {}]
  %s3 = inlined_call_operand.vmem [shape: f32[1,32], index: 3, kind: input, shape index: {}]
  %s4 = inlined_call_operand.vmem [shape: f32[4,18,72], index: 4, kind: input, shape index: {}]
  %s5 = inlined_call_operand.vmem [shape: f32[9,32,18], index: 5, kind: input, shape index: {}]
  %s6 = inlined_call_operand.vmem [shape: f32[9,32,64], index: 6, kind: input, shape index: {}]
  %s7 = inlined_call_operand.vmem [shape: f32[1,64], index: 7, kind: input, shape index: {}]
  %s8 = inlined_call_operand.vmem [shape: f32[4,8,32], index: 8, kind: input, shape index: {}]
  %s9 = inlined_call_operand.vmem [shape: f32[4,2,8], index: 9, kind: input, shape index: {}]
  %s10 = inlined_call_operand.vmem [shape: f32[4,64,128], index: 10, kind: input, shape index: {}]
  %s11 = inlined_call_operand.vmem [shape: f32[1,128], index: 11, kind: input, shape index: {}]
  %s12 = inlined_call_operand.vmem [shape: f32[128,25], index: 12, kind: input, shape index: {}]
  %s13 = inlined_call_operand.vmem [shape: f32[1,25], index: 13, kind: input, shape index: {}]
  %s14 = inlined_call_operand.hbm [shape: f32[2,25], index: 14, kind: output, shape index: {}]
  %s15 = sld [smem:[#allocation0]]
  $region66: #{fused_forward.1} parent=0
    _
  %s17 = ssub.s32 1, %s15
  %s18 = scalar_select 0, %s17, %s15
  $region1: #{fused_forward.1} parent=0
    #allocation2 [shape = 'u8[1024]{0}', space=vmem, size = 0x400, scoped, tag = 'output window, operand 0, single buffered']
    #allocation3 [shape = 's32[1]{0}', space=sflag, size = 0x4, scoped, tag = 'scoped memory for fused_forward.1']
    %19 = vsyncpa [#allocation3], 0
    // Predicated region
    $region2: #{fused_forward.1} parent=1 // pred_check
      _
    $region3: #{fused_forward.1} parent=1 // pred_check_branch
      %21 = sbr.rel (0) target = $region5
    $region4: #{fused_forward.1} parent=1 // pred_region
      _
    $region5: #{fused_forward.1} parent=1 // pred_fallthru
      _
    // Predicated region
    $region6: #{fused_forward.1} parent=1 // pred_check
      _
    $region7: #{fused_forward.1} parent=1 // pred_check_branch
      %23 = sbr.rel (0) target = $region9
    $region8: #{fused_forward.1} parent=1 // pred_region
      _
    $region9: #{fused_forward.1} parent=1 // pred_fallthru
      _
    // Predicated region
    $region10: #{fused_forward.1} parent=1 // pred_check
      _
    $region11: #{fused_forward.1} parent=1 // pred_check_branch
      %25 = sbr.rel (0) target = $region13
    $region12: #{fused_forward.1} parent=1 // pred_region
      _
    $region13: #{fused_forward.1} parent=1 // pred_fallthru
      _
    // Predicated region
    $region14: #{fused_forward.1} parent=1 // pred_check
      _
    $region15: #{fused_forward.1} parent=1 // pred_check_branch
      %27 = sbr.rel (0) target = $region17
    $region16: #{fused_forward.1} parent=1 // pred_region
      _
    $region17: #{fused_forward.1} parent=1 // pred_fallthru
      _
    // Predicated region
    $region18: #{fused_forward.1} parent=1 // pred_check
      _
    $region19: #{fused_forward.1} parent=1 // pred_check_branch
      %29 = sbr.rel (0) target = $region21
    $region20: #{fused_forward.1} parent=1 // pred_region
      _
    $region21: #{fused_forward.1} parent=1 // pred_fallthru
      _
    // Predicated region
    $region22: #{fused_forward.1} parent=1 // pred_check
      _
    $region23: #{fused_forward.1} parent=1 // pred_check_branch
      %31 = sbr.rel (0) target = $region25
    $region24: #{fused_forward.1} parent=1 // pred_region
      _
    $region25: #{fused_forward.1} parent=1 // pred_fallthru
      _
    // Predicated region
    $region26: #{fused_forward.1} parent=1 // pred_check
      _
    $region27: #{fused_forward.1} parent=1 // pred_check_branch
      %33 = sbr.rel (0) target = $region29
    $region28: #{fused_forward.1} parent=1 // pred_region
      _
    $region29: #{fused_forward.1} parent=1 // pred_fallthru
      _
    // Predicated region
    $region30: #{fused_forward.1} parent=1 // pred_check
      _
    $region31: #{fused_forward.1} parent=1 // pred_check_branch
      %35 = sbr.rel (0) target = $region33
    $region32: #{fused_forward.1} parent=1 // pred_region
      _
    $region33: #{fused_forward.1} parent=1 // pred_fallthru
      _
    // Predicated region
    $region34: #{fused_forward.1} parent=1 // pred_check
      _
    $region35: #{fused_forward.1} parent=1 // pred_check_branch
      %37 = sbr.rel (0) target = $region37
    $region36: #{fused_forward.1} parent=1 // pred_region
      _
    $region37: #{fused_forward.1} parent=1 // pred_fallthru
      _
    // Predicated region
    $region38: #{fused_forward.1} parent=1 // pred_check
      _
    $region39: #{fused_forward.1} parent=1 // pred_check_branch
      %39 = sbr.rel (0) target = $region41
    $region40: #{fused_forward.1} parent=1 // pred_region
      _
    $region41: #{fused_forward.1} parent=1 // pred_fallthru
      _
    // Predicated region
    $region42: #{fused_forward.1} parent=1 // pred_check
      _
    $region43: #{fused_forward.1} parent=1 // pred_check_branch
      %41 = sbr.rel (0) target = $region45
    $region44: #{fused_forward.1} parent=1 // pred_region
      _
    $region45: #{fused_forward.1} parent=1 // pred_fallthru
      _
    // Predicated region
    $region46: #{fused_forward.1} parent=1 // pred_check
      _
    $region47: #{fused_forward.1} parent=1 // pred_check_branch
      %43 = sbr.rel (0) target = $region49
    $region48: #{fused_forward.1} parent=1 // pred_region
      _
    $region49: #{fused_forward.1} parent=1 // pred_fallthru
      _
    // Predicated region
    $region50: #{fused_forward.1} parent=1 // pred_check
      _
    $region51: #{fused_forward.1} parent=1 // pred_check_branch
      %45 = sbr.rel (0) target = $region53
    $region52: #{fused_forward.1} parent=1 // pred_region
      _
    $region53: #{fused_forward.1} parent=1 // pred_fallthru
      _
    // Predicated region
    $region54: #{fused_forward.1} parent=1 // pred_check
      _
    $region55: #{fused_forward.1} parent=1 // pred_check_branch
      %47 = sbr.rel (0) target = $region57
    $region56: #{fused_forward.1} parent=1 // pred_region
      _
    $region57: #{fused_forward.1} parent=1 // pred_fallthru
      _
    %v48 = vld [vmem:[%s0] sm:$0xff]
    %v49 = vld [vmem:[%s0 + $0x8] sm:$0xff]
    %v50 = vld [vmem:[%s0 + $0x10] sm:$0xff]
    %v51 = vld [vmem:[%s0 + $0x18] sm:$0xff]
    %v52 = vld [vmem:[%s0 + $0x20] sm:$0xff]
    %v53 = vld [vmem:[%s0 + $0x28] sm:$0xff]
    %v54 = vld [vmem:[%s0 + $0x30] sm:$0x3]
    %v55 = vld [vmem:[%s2] sm:$0x1]
    %57 = vset.pattern.permute.xlu0 0
    %58 = vperm.xlu0 %57, %v48
    %v59 = vpop.permute.xlu0 %58
    %62 = vset.pattern.permute.xlu0 0
    %63 = vperm.xlu0 %62, %v49
    %v64 = vpop.permute.xlu0 %63
    %67 = vset.pattern.permute.xlu0 0
    %68 = vperm.xlu0 %67, %v50
    %v69 = vpop.permute.xlu0 %68
    %72 = vset.pattern.permute.xlu0 0
    %73 = vperm.xlu0 %72, %v51
    %v74 = vpop.permute.xlu0 %73
    %77 = vset.pattern.permute.xlu0 0
    %78 = vperm.xlu0 %77, %v52
    %v79 = vpop.permute.xlu0 %78
    %82 = vset.pattern.permute.xlu0 0
    %83 = vperm.xlu0 %82, %v53
    %v84 = vpop.permute.xlu0 %83
    %87 = vset.pattern.permute.xlu0 0
    %88 = vperm.xlu0 %87, %v54
    %v89 = vpop.permute.xlu0 %88
    %v92 = vlaneseq
    %v93 = vshrl.u32 %v92, 7
    %v94 = vsub.s32 0, %v93
    %v95 = vrot.slane %v55, %v94
    %v97 = vmul.f32 %v59, %v95
    %v98 = vmul.f32 %v64, %v95
    %v99 = vmul.f32 %v69, %v95
    %v100 = vmul.f32 %v74, %v95
    %v101 = vmul.f32 %v79, %v95
    %v102 = vmul.f32 %v84, %v95
    %v103 = vmul.f32 %v89, %v95
    %v104 = vld [vmem:[%s1] sm:$0xff]
    %v105 = vld [vmem:[%s1 + $0x8] sm:$0xff]
    %v106 = vld [vmem:[%s1 + $0x10] sm:$0xff]
    %v107 = vld [vmem:[%s1 + $0x18] sm:$0xff]
    %v108 = vld [vmem:[%s1 + $0x20] sm:$0xff]
    %v109 = vld [vmem:[%s1 + $0x28] sm:$0xff]
    %v110 = vld [vmem:[%s1 + $0x30] sm:$0xff]
    %v111 = vld [vmem:[%s1 + $0x38] sm:$0xff]
    %v112 = vld [vmem:[%s1 + $0x40] sm:$0xff]
    %s113 = scalar_lea.vmem %s2, 1
    %v114 = vld [vmem:[%s113] sm:$0x1]
    %v116 = vlaneseq
    %v117 = vshrl.u32 %v116, 7
    %v118 = vsub.s32 0, %v117
    %v119 = vrot.slane %v114, %v118
    %v121 = vmul.f32 %v59, %v119
    %v122 = vmul.f32 %v64, %v119
    %v123 = vmul.f32 %v69, %v119
    %v124 = vmul.f32 %v74, %v119
    %v125 = vmul.f32 %v79, %v119
    %v126 = vmul.f32 %v84, %v119
    %v127 = vmul.f32 %v89, %v119
    %s128 = scalar_lea.vmem %s1, 72
    %v129 = vld [vmem:[%s128] sm:$0xff]
    %v130 = vld [vmem:[%s128 + $0x8] sm:$0xff]
    %v131 = vld [vmem:[%s128 + $0x10] sm:$0xff]
    %v132 = vld [vmem:[%s128 + $0x18] sm:$0xff]
    %v133 = vld [vmem:[%s128 + $0x20] sm:$0xff]
    %v134 = vld [vmem:[%s128 + $0x28] sm:$0xff]
    %v135 = vld [vmem:[%s128 + $0x30] sm:$0xff]
    %v136 = vld [vmem:[%s128 + $0x38] sm:$0xff]
    %v137 = vld [vmem:[%s128 + $0x40] sm:$0xff]
    %vm138 = vcmask 408576
    %v140 = vsel %vm138, %v129, 0
    %v143 = vsel %vm138, %v130, 0
    %v146 = vsel %vm138, %v131, 0
    %v149 = vsel %vm138, %v132, 0
    %v152 = vsel %vm138, %v133, 0
    %v155 = vsel %vm138, %v134, 0
    %v158 = vsel %vm138, %v135, 0
    %v161 = vsel %vm138, %v136, 0
    %v164 = vsel %vm138, %v137, 0
    %vm166 = vcmask 1041408
    %v168 = vsel %vm166, %v127, 0
    %170 = vmatprep.subr.mxu0 0.0
    %171 = vmatpush1.msra.mxu0 %v121
    %172 = vmatprep.subr.mxu0 0.0
    %173 = vmatpush1.msra.mxu0 %v122
    %174 = vmatprep.subr.mxu0 0.0
    %175 = vmatpush1.msra.mxu0 %v123
    %176 = vmatprep.subr.mxu0 0.0
    %177 = vmatpush1.msra.mxu0 %v124
    %178 = vmatprep.subr.mxu0 0.0
    %179 = vmatpush1.msra.mxu0 %v125
    %180 = vmatprep.subr.mxu0 0.0
    %181 = vmatpush1.msra.mxu0 %v126
    %182 = vmatprep.subr.mxu0 0.0
    %183 = vmatpush1.msra.mxu0 %v168
    %184 = vmatprep.subr.mxu0 0.0
    %185 = vmatpush1.msra.mxu0 0.0
    %186 = vmatprep.subr.mxu0 0.0
    %187 = vmatpush1.msra.mxu0 0.0
    %188 = vmatprep.subr.mxu0 0.0
    %189 = vmatpush1.msra.mxu0 0.0
    %190 = vmatprep.subr.mxu0 0.0
    %191 = vmatpush1.msra.mxu0 0.0
    %192 = vmatprep.subr.mxu0 0.0
    %193 = vmatpush1.msra.mxu0 0.0
    %194 = vmatprep.subr.mxu0 0.0
    %195 = vmatpush1.msra.mxu0 0.0
    %196 = vmatprep.subr.mxu0 0.0
    %197 = vmatpush1.msra.mxu0 0.0
    %198 = vmatprep.subr.mxu0 0.0
    %199 = vmatpush1.msra.mxu0 0.0
    %200 = vmatprep.subr.mxu0 0.0
    %201 = vmatpush1.msra.mxu0 0.0
    %202 = vmatprep.subr.mxu0 0.0
    %203 = vmatpush1.msra.mxu0 0.0
    %204 = vmatprep.subr.mxu0 0.0
    %205 = vmatpush1.msra.mxu0 0.0
    %206 = vmatprep.subr.mxu0 0.0
    %207 = vmatpush1.msra.mxu0 0.0
    %208 = vmatprep.subr.mxu0 0.0
    %209 = vmatpush1.msra.mxu0 0.0
    %210 = vmatprep.subr.mxu0 0.0
    %211 = vmatpush1.msra.mxu0 0.0
    %212 = vmatprep.subr.mxu0 0.0
    %213 = vmatpush1.msra.mxu0 0.0
    %214 = vmatprep.subr.mxu0 0.0
    %215 = vmatpush1.msra.mxu0 0.0
    %216 = vmatprep.subr.mxu0 0.0
    %217 = vmatpush1.msra.mxu0 0.0
    %218 = vmatprep.subr.mxu0 0.0
    %219 = vmatpush1.msra.mxu0 0.0
    %220 = vmatprep.subr.mxu0 0.0
    %221 = vmatpush1.msra.mxu0 0.0
    %222 = vmatprep.subr.mxu0 0.0
    %223 = vmatpush1.msra.mxu0 0.0
    %224 = vmatprep.subr.mxu0 0.0
    %225 = vmatpush1.msra.mxu0 0.0
    %226 = vmatprep.subr.mxu0 0.0
    %227 = vmatpush1.msra.mxu0 0.0
    %228 = vmatprep.subr.mxu0 0.0
    %229 = vmatpush1.msra.mxu0 0.0
    %230 = vmatprep.subr.mxu0 0.0
    %231 = vmatpush1.msra.mxu0 0.0
    %232 = vmatprep.subr.mxu0 0.0
    %233 = vmatpush1.msra.mxu0 0.0
    %234 = vmatprep.mubr.f32.mxu0 0.0
    %235 = vmatmul.mubr.f32.gmra.mrb[0].mxu0 %v140
    %v236 = vpop.f32.mrb[0].mxu0
    %v237 = vadd.f32 0.0, %v236
    %v238 = vpop.f32.mrb[0].mxu0
    %239 = vmatprep.mubr.f32.mxu0 0.0
    %240 = vmatmul.mubr.f32.gmra.mrb[0].mxu0 %v143
    %v241 = vpop.f32.mrb[0].mxu0
    %v242 = vadd.f32 0.0, %v241
    %v243 = vpop.f32.mrb[0].mxu0
    %244 = vmatprep.mubr.f32.mxu0 0.0
    %245 = vmatmul.mubr.f32.gmra.mrb[0].mxu0 %v146
    %v246 = vpop.f32.mrb[0].mxu0
    %v247 = vadd.f32 0.0, %v246
    %v248 = vpop.f32.mrb[0].mxu0
    %249 = vmatprep.mubr.f32.mxu0 0.0
    %250 = vmatmul.mubr.f32.gmra.mrb[0].mxu0 %v149
    %v251 = vpop.f32.mrb[0].mxu0
    %v252 = vadd.f32 0.0, %v251
    %v253 = vpop.f32.mrb[0].mxu0
    %254 = vmatprep.mubr.f32.mxu0 0.0
    %255 = vmatmul.mubr.f32.gmra.mrb[0].mxu0 %v152
    %v256 = vpop.f32.mrb[0].mxu0
    %v257 = vadd.f32 0.0, %v256
    %v258 = vpop.f32.mrb[0].mxu0
    %259 = vmatprep.mubr.f32.mxu0 0.0
    %260 = vmatmul.mubr.f32.gmra.mrb[0].mxu0 %v155
    %v261 = vpop.f32.mrb[0].mxu0
    %v262 = vadd.f32 0.0, %v261
    %v263 = vpop.f32.mrb[0].mxu0
    %264 = vmatprep.mubr.f32.mxu0 0.0
    %265 = vmatmul.mubr.f32.gmra.mrb[0].mxu0 %v158
    %v266 = vpop.f32.mrb[0].mxu0
    %v267 = vadd.f32 0.0, %v266
    %v268 = vpop.f32.mrb[0].mxu0
    %269 = vmatprep.mubr.f32.mxu0 0.0
    %270 = vmatmul.mubr.f32.gmra.mrb[0].mxu0 %v161
    %v271 = vpop.f32.mrb[0].mxu0
    %v272 = vadd.f32 0.0, %v271
    %v273 = vpop.f32.mrb[0].mxu0
    %274 = vmatprep.mubr.f32.mxu0 0.0
    %275 = vmatmul.mubr.f32.gmra.mrb[0].mxu0 %v164
    %v276 = vpop.f32.mrb[0].mxu0
    %v277 = vadd.f32 0.0, %v276
    %v278 = vpop.f32.mrb[0].mxu0
    %279 = vdwg.mxu0
    %v281 = vsel %vm138, %v104, 0
    %v284 = vsel %vm138, %v105, 0
    %v287 = vsel %vm138, %v106, 0
    %v290 = vsel %vm138, %v107, 0
    %v293 = vsel %vm138, %v108, 0
    %v296 = vsel %vm138, %v109, 0
    %v299 = vsel %vm138, %v110, 0
    %v302 = vsel %vm138, %v111, 0
    %v305 = vsel %vm138, %v112, 0
    %v308 = vsel %vm166, %v103, 0
    %310 = vmatprep.subr.mxu0 0.0
    %311 = vmatpush1.msra.mxu0 %v97
    %312 = vmatprep.subr.mxu0 0.0
    %313 = vmatpush1.msra.mxu0 %v98
    %314 = vmatprep.subr.mxu0 0.0
    %315 = vmatpush1.msra.mxu0 %v99
    %316 = vmatprep.subr.mxu0 0.0
    %317 = vmatpush1.msra.mxu0 %v100
    %318 = vmatprep.subr.mxu0 0.0
    %319 = vmatpush1.msra.mxu0 %v101
    %320 = vmatprep.subr.mxu0 0.0
    %321 = vmatpush1.msra.mxu0 %v102
    %322 = vmatprep.subr.mxu0 0.0
    %323 = vmatpush1.msra.mxu0 %v308
    %324 = vmatprep.subr.mxu0 0.0
    %325 = vmatpush1.msra.mxu0 0.0
    %326 = vmatprep.subr.mxu0 0.0
    %327 = vmatpush1.msra.mxu0 0.0
    %328 = vmatprep.subr.mxu0 0.0
    %329 = vmatpush1.msra.mxu0 0.0
    %330 = vmatprep.subr.mxu0 0.0
    %331 = vmatpush1.msra.mxu0 0.0
    %332 = vmatprep.subr.mxu0 0.0
    %333 = vmatpush1.msra.mxu0 0.0
    %334 = vmatprep.subr.mxu0 0.0
    %335 = vmatpush1.msra.mxu0 0.0
    %336 = vmatprep.subr.mxu0 0.0
    %337 = vmatpush1.msra.mxu0 0.0
    %338 = vmatprep.subr.mxu0 0.0
    %339 = vmatpush1.msra.mxu0 0.0
    %340 = vmatprep.subr.mxu0 0.0
    %341 = vmatpush1.msra.mxu0 0.0
    %342 = vmatprep.subr.mxu0 0.0
    %343 = vmatpush1.msra.mxu0 0.0
    %344 = vmatprep.subr.mxu0 0.0
    %345 = vmatpush1.msra.mxu0 0.0
    %346 = vmatprep.subr.mxu0 0.0
    %347 = vmatpush1.msra.mxu0 0.0
    %348 = vmatprep.subr.mxu0 0.0
    %349 = vmatpush1.msra.mxu0 0.0
    %350 = vmatprep.subr.mxu0 0.0
    %351 = vmatpush1.msra.mxu0 0.0
    %352 = vmatprep.subr.mxu0 0.0
    %353 = vmatpush1.msra.mxu0 0.0
    %354 = vmatprep.subr.mxu0 0.0
    %355 = vmatpush1.msra.mxu0 0.0
    %356 = vmatprep.subr.mxu0 0.0
    %357 = vmatpush1.msra.mxu0 0.0
    %358 = vmatprep.subr.mxu0 0.0
    %359 = vmatpush1.msra.mxu0 0.0
    %360 = vmatprep.subr.mxu0 0.0
    %361 = vmatpush1.msra.mxu0 0.0
    %362 = vmatprep.subr.mxu0 0.0
    %363 = vmatpush1.msra.mxu0 0.0
    %364 = vmatprep.subr.mxu0 0.0
    %365 = vmatpush1.msra.mxu0 0.0
    %366 = vmatprep.subr.mxu0 0.0
    %367 = vmatpush1.msra.mxu0 0.0
    %368 = vmatprep.subr.mxu0 0.0
    %369 = vmatpush1.msra.mxu0 0.0
    %370 = vmatprep.subr.mxu0 0.0
    %371 = vmatpush1.msra.mxu0 0.0
    %372 = vmatprep.subr.mxu0 0.0
    %373 = vmatpush1.msra.mxu0 0.0
    %374 = vmatprep.mubr.f32.mxu0 0.0
    %375 = vmatmul.mubr.f32.gmra.mrb[0].mxu0 %v281
    %v376 = vpop.f32.mrb[0].mxu0
    %v377 = vadd.f32 %v237, %v376
    %v378 = vpop.f32.mrb[0].mxu0
    %379 = vmatprep.mubr.f32.mxu0 0.0
    %380 = vmatmul.mubr.f32.gmra.mrb[0].mxu0 %v284
    %v381 = vpop.f32.mrb[0].mxu0
    %v382 = vadd.f32 %v242, %v381
    %v383 = vpop.f32.mrb[0].mxu0
    %384 = vmatprep.mubr.f32.mxu0 0.0
    %385 = vmatmul.mubr.f32.gmra.mrb[0].mxu0 %v287
    %v386 = vpop.f32.mrb[0].mxu0
    %v387 = vadd.f32 %v247, %v386
    %v388 = vpop.f32.mrb[0].mxu0
    %389 = vmatprep.mubr.f32.mxu0 0.0
    %390 = vmatmul.mubr.f32.gmra.mrb[0].mxu0 %v290
    %v391 = vpop.f32.mrb[0].mxu0
    %v392 = vadd.f32 %v252, %v391
    %v393 = vpop.f32.mrb[0].mxu0
    %394 = vmatprep.mubr.f32.mxu0 0.0
    %395 = vmatmul.mubr.f32.gmra.mrb[0].mxu0 %v293
    %v396 = vpop.f32.mrb[0].mxu0
    %v397 = vadd.f32 %v257, %v396
    %v398 = vpop.f32.mrb[0].mxu0
    %399 = vmatprep.mubr.f32.mxu0 0.0
    %400 = vmatmul.mubr.f32.gmra.mrb[0].mxu0 %v296
    %v401 = vpop.f32.mrb[0].mxu0
    %v402 = vadd.f32 %v262, %v401
    %v403 = vpop.f32.mrb[0].mxu0
    %404 = vmatprep.mubr.f32.mxu0 0.0
    %405 = vmatmul.mubr.f32.gmra.mrb[0].mxu0 %v299
    %v406 = vpop.f32.mrb[0].mxu0
    %v407 = vadd.f32 %v267, %v406
    %v408 = vpop.f32.mrb[0].mxu0
    %409 = vmatprep.mubr.f32.mxu0 0.0
    %410 = vmatmul.mubr.f32.gmra.mrb[0].mxu0 %v302
    %v411 = vpop.f32.mrb[0].mxu0
    %v412 = vadd.f32 %v272, %v411
    %v413 = vpop.f32.mrb[0].mxu0
    %414 = vmatprep.mubr.f32.mxu0 0.0
    %415 = vmatmul.mubr.f32.gmra.mrb[0].mxu0 %v305
    %v416 = vpop.f32.mrb[0].mxu0
    %v417 = vadd.f32 %v277, %v416
    %v418 = vpop.f32.mrb[0].mxu0
    %419 = vdwg.mxu0
    %s420 = scalar_lea.vmem %s2, 2
    %v421 = vld [vmem:[%s420] sm:$0x1]
    %v423 = vlaneseq
    %v424 = vshrl.u32 %v423, 7
    %v425 = vsub.s32 0, %v424
    %v426 = vrot.slane %v421, %v425
    %v428 = vmul.f32 %v59, %v426
    %v429 = vmul.f32 %v64, %v426
    %v430 = vmul.f32 %v69, %v426
    %v431 = vmul.f32 %v74, %v426
    %v432 = vmul.f32 %v79, %v426
    %v433 = vmul.f32 %v84, %v426
    %v434 = vmul.f32 %v89, %v426
    %s435 = scalar_lea.vmem %s1, 144
    %v436 = vld [vmem:[%s435] sm:$0xff]
    %v437 = vld [vmem:[%s435 + $0x8] sm:$0xff]
    %v438 = vld [vmem:[%s435 + $0x10] sm:$0xff]
    %v439 = vld [vmem:[%s435 + $0x18] sm:$0xff]
    %v440 = vld [vmem:[%s435 + $0x20] sm:$0xff]
    %v441 = vld [vmem:[%s435 + $0x28] sm:$0xff]
    %v442 = vld [vmem:[%s435 + $0x30] sm:$0xff]
    %v443 = vld [vmem:[%s435 + $0x38] sm:$0xff]
    %v444 = vld [vmem:[%s435 + $0x40] sm:$0xff]
    %v446 = vsel %vm138, %v436, 0
    %v449 = vsel %vm138, %v437, 0
    %v452 = vsel %vm138, %v438, 0
    %v455 = vsel %vm138, %v439, 0
    %v458 = vsel %vm138, %v440, 0
    %v461 = vsel %vm138, %v441, 0
    %v464 = vsel %vm138, %v442, 0
    %v467 = vsel %vm138, %v443, 0
    %v470 = vsel %vm138, %v444, 0
    %v473 = vsel %vm166, %v434, 0
    %475 = vmatprep.subr.mxu0 0.0
    %476 = vmatpush1.msra.mxu0 %v428
    %477 = vmatprep.subr.mxu0 0.0
    %478 = vmatpush1.msra.mxu0 %v429
    %479 = vmatprep.subr.mxu0 0.0
    %480 = vmatpush1.msra.mxu0 %v430
    %481 = vmatprep.subr.mxu0 0.0
    %482 = vmatpush1.msra.mxu0 %v431
    %483 = vmatprep.subr.mxu0 0.0
    %484 = vmatpush1.msra.mxu0 %v432
    %485 = vmatprep.subr.mxu0 0.0
    %486 = vmatpush1.msra.mxu0 %v433
    %487 = vmatprep.subr.mxu0 0.0
    %488 = vmatpush1.msra.mxu0 %v473
    %489 = vmatprep.subr.mxu0 0.0
    %490 = vmatpush1.msra.mxu0 0.0
    %491 = vmatprep.subr.mxu0 0.0
    %492 = vmatpush1.msra.mxu0 0.0
    %493 = vmatprep.subr.mxu0 0.0
    %494 = vmatpush1.msra.mxu0 0.0
    %495 = vmatprep.subr.mxu0 0.0
    %496 = vmatpush1.msra.mxu0 0.0
    %497 = vmatprep.subr.mxu0 0.0
    %498 = vmatpush1.msra.mxu0 0.0
    %499 = vmatprep.subr.mxu0 0.0
    %500 = vmatpush1.msra.mxu0 0.0
    %501 = vmatprep.subr.mxu0 0.0
    %502 = vmatpush1.msra.mxu0 0.0
    %503 = vmatprep.subr.mxu0 0.0
    %504 = vmatpush1.msra.mxu0 0.0
    %505 = vmatprep.subr.mxu0 0.0
    %506 = vmatpush1.msra.mxu0 0.0
    %507 = vmatprep.subr.mxu0 0.0
    %508 = vmatpush1.msra.mxu0 0.0
    %509 = vmatprep.subr.mxu0 0.0
    %510 = vmatpush1.msra.mxu0 0.0
    %511 = vmatprep.subr.mxu0 0.0
    %512 = vmatpush1.msra.mxu0 0.0
    %513 = vmatprep.subr.mxu0 0.0
    %514 = vmatpush1.msra.mxu0 0.0
    %515 = vmatprep.subr.mxu0 0.0
    %516 = vmatpush1.msra.mxu0 0.0
    %517 = vmatprep.subr.mxu0 0.0
    %518 = vmatpush1.msra.mxu0 0.0
    %519 = vmatprep.subr.mxu0 0.0
    %520 = vmatpush1.msra.mxu0 0.0
    %521 = vmatprep.subr.mxu0 0.0
    %522 = vmatpush1.msra.mxu0 0.0
    %523 = vmatprep.subr.mxu0 0.0
    %524 = vmatpush1.msra.mxu0 0.0
    %525 = vmatprep.subr.mxu0 0.0
    %526 = vmatpush1.msra.mxu0 0.0
    %527 = vmatprep.subr.mxu0 0.0
    %528 = vmatpush1.msra.mxu0 0.0
    %529 = vmatprep.subr.mxu0 0.0
    %530 = vmatpush1.msra.mxu0 0.0
    %531 = vmatprep.subr.mxu0 0.0
    %532 = vmatpush1.msra.mxu0 0.0
    %533 = vmatprep.subr.mxu0 0.0
    %534 = vmatpush1.msra.mxu0 0.0
    %535 = vmatprep.subr.mxu0 0.0
    %536 = vmatpush1.msra.mxu0 0.0
    %537 = vmatprep.subr.mxu0 0.0
    %538 = vmatpush1.msra.mxu0 0.0
    %539 = vmatprep.mubr.f32.mxu0 0.0
    %540 = vmatmul.mubr.f32.gmra.mrb[0].mxu0 %v446
    %v541 = vpop.f32.mrb[0].mxu0
    %v542 = vadd.f32 0.0, %v541
    %v543 = vpop.f32.mrb[0].mxu0
    %544 = vmatprep.mubr.f32.mxu0 0.0
    %545 = vmatmul.mubr.f32.gmra.mrb[0].mxu0 %v449
    %v546 = vpop.f32.mrb[0].mxu0
    %v547 = vadd.f32 0.0, %v546
    %v548 = vpop.f32.mrb[0].mxu0
    %549 = vmatprep.mubr.f32.mxu0 0.0
    %550 = vmatmul.mubr.f32.gmra.mrb[0].mxu0 %v452
    %v551 = vpop.f32.mrb[0].mxu0
    %v552 = vadd.f32 0.0, %v551
    %v553 = vpop.f32.mrb[0].mxu0
    %554 = vmatprep.mubr.f32.mxu0 0.0
    %555 = vmatmul.mubr.f32.gmra.mrb[0].mxu0 %v455
    %v556 = vpop.f32.mrb[0].mxu0
    %v557 = vadd.f32 0.0, %v556
    %v558 = vpop.f32.mrb[0].mxu0
    %559 = vmatprep.mubr.f32.mxu0 0.0
    %560 = vmatmul.mubr.f32.gmra.mrb[0].mxu0 %v458
    %v561 = vpop.f32.mrb[0].mxu0
    %v562 = vadd.f32 0.0, %v561
    %v563 = vpop.f32.mrb[0].mxu0
    %564 = vmatprep.mubr.f32.mxu0 0.0
    %565 = vmatmul.mubr.f32.gmra.mrb[0].mxu0 %v461
    %v566 = vpop.f32.mrb[0].mxu0
    %v567 = vadd.f32 0.0, %v566
    %v568 = vpop.f32.mrb[0].mxu0
    %569 = vmatprep.mubr.f32.mxu0 0.0
    %570 = vmatmul.mubr.f32.gmra.mrb[0].mxu0 %v464
    %v571 = vpop.f32.mrb[0].mxu0
    %v572 = vadd.f32 0.0, %v571
    %v573 = vpop.f32.mrb[0].mxu0
    %574 = vmatprep.mubr.f32.mxu0 0.0
    %575 = vmatmul.mubr.f32.gmra.mrb[0].mxu0 %v467
    %v576 = vpop.f32.mrb[0].mxu0
    %v577 = vadd.f32 0.0, %v576
    %v578 = vpop.f32.mrb[0].mxu0
    %579 = vmatprep.mubr.f32.mxu0 0.0
    %580 = vmatmul.mubr.f32.gmra.mrb[0].mxu0 %v470
    %v581 = vpop.f32.mrb[0].mxu0
    %v582 = vadd.f32 0.0, %v581
    %v583 = vpop.f32.mrb[0].mxu0
    %584 = vdwg.mxu0
    %v585 = vadd.f32 %v377, %v542
    %v586 = vadd.f32 %v382, %v547
    %v587 = vadd.f32 %v387, %v552
    %v588 = vadd.f32 %v392, %v557
    %v589 = vadd.f32 %v397, %v562
    %v590 = vadd.f32 %v402, %v567
    %v591 = vadd.f32 %v407, %v572
    %v592 = vadd.f32 %v412, %v577
    %v593 = vadd.f32 %v417, %v582
    %s594 = scalar_lea.vmem %s2, 3
    %v595 = vld [vmem:[%s594] sm:$0x1]
    %v597 = vlaneseq
    %v598 = vshrl.u32 %v597, 7
    %v599 = vsub.s32 0, %v598
    %v600 = vrot.slane %v595, %v599
    %v602 = vmul.f32 %v59, %v600
    %v603 = vmul.f32 %v64, %v600
    %v604 = vmul.f32 %v69, %v600
    %v605 = vmul.f32 %v74, %v600
    %v606 = vmul.f32 %v79, %v600
    %v607 = vmul.f32 %v84, %v600
    %v608 = vmul.f32 %v89, %v600
    %s609 = scalar_lea.vmem %s1, 216
    %v610 = vld [vmem:[%s609] sm:$0xff]
    %v611 = vld [vmem:[%s609 + $0x8] sm:$0xff]
    %v612 = vld [vmem:[%s609 + $0x10] sm:$0xff]
    %v613 = vld [vmem:[%s609 + $0x18] sm:$0xff]
    %v614 = vld [vmem:[%s609 + $0x20] sm:$0xff]
    %v615 = vld [vmem:[%s609 + $0x28] sm:$0xff]
    %v616 = vld [vmem:[%s609 + $0x30] sm:$0xff]
    %v617 = vld [vmem:[%s609 + $0x38] sm:$0xff]
    %v618 = vld [vmem:[%s609 + $0x40] sm:$0xff]
    %v620 = vsel %vm138, %v610, 0
    %v623 = vsel %vm138, %v611, 0
    %v626 = vsel %vm138, %v612, 0
    %v629 = vsel %vm138, %v613, 0
    %v632 = vsel %vm138, %v614, 0
    %v635 = vsel %vm138, %v615, 0
    %v638 = vsel %vm138, %v616, 0
    %v641 = vsel %vm138, %v617, 0
    %v644 = vsel %vm138, %v618, 0
    %v647 = vsel %vm166, %v608, 0
    %649 = vmatprep.subr.mxu0 0.0
    %650 = vmatpush1.msra.mxu0 %v602
    %651 = vmatprep.subr.mxu0 0.0
    %652 = vmatpush1.msra.mxu0 %v603
    %653 = vmatprep.subr.mxu0 0.0
    %654 = vmatpush1.msra.mxu0 %v604
    %655 = vmatprep.subr.mxu0 0.0
    %656 = vmatpush1.msra.mxu0 %v605
    %657 = vmatprep.subr.mxu0 0.0
    %658 = vmatpush1.msra.mxu0 %v606
    %659 = vmatprep.subr.mxu0 0.0
    %660 = vmatpush1.msra.mxu0 %v607
    %661 = vmatprep.subr.mxu0 0.0
    %662 = vmatpush1.msra.mxu0 %v647
    %663 = vmatprep.subr.mxu0 0.0
    %664 = vmatpush1.msra.mxu0 0.0
    %665 = vmatprep.subr.mxu0 0.0
    %666 = vmatpush1.msra.mxu0 0.0
    %667 = vmatprep.subr.mxu0 0.0
    %668 = vmatpush1.msra.mxu0 0.0
    %669 = vmatprep.subr.mxu0 0.0
    %670 = vmatpush1.msra.mxu0 0.0
    %671 = vmatprep.subr.mxu0 0.0
    %672 = vmatpush1.msra.mxu0 0.0
    %673 = vmatprep.subr.mxu0 0.0
    %674 = vmatpush1.msra.mxu0 0.0
    %675 = vmatprep.subr.mxu0 0.0
    %676 = vmatpush1.msra.mxu0 0.0
    %677 = vmatprep.subr.mxu0 0.0
    %678 = vmatpush1.msra.mxu0 0.0
    %679 = vmatprep.subr.mxu0 0.0
    %680 = vmatpush1.msra.mxu0 0.0
    %681 = vmatprep.subr.mxu0 0.0
    %682 = vmatpush1.msra.mxu0 0.0
    %683 = vmatprep.subr.mxu0 0.0
    %684 = vmatpush1.msra.mxu0 0.0
    %685 = vmatprep.subr.mxu0 0.0
    %686 = vmatpush1.msra.mxu0 0.0
    %687 = vmatprep.subr.mxu0 0.0
    %688 = vmatpush1.msra.mxu0 0.0
    %689 = vmatprep.subr.mxu0 0.0
    %690 = vmatpush1.msra.mxu0 0.0
    %691 = vmatprep.subr.mxu0 0.0
    %692 = vmatpush1.msra.mxu0 0.0
    %693 = vmatprep.subr.mxu0 0.0
    %694 = vmatpush1.msra.mxu0 0.0
    %695 = vmatprep.subr.mxu0 0.0
    %696 = vmatpush1.msra.mxu0 0.0
    %697 = vmatprep.subr.mxu0 0.0
    %698 = vmatpush1.msra.mxu0 0.0
    %699 = vmatprep.subr.mxu0 0.0
    %700 = vmatpush1.msra.mxu0 0.0
    %701 = vmatprep.subr.mxu0 0.0
    %702 = vmatpush1.msra.mxu0 0.0
    %703 = vmatprep.subr.mxu0 0.0
    %704 = vmatpush1.msra.mxu0 0.0
    %705 = vmatprep.subr.mxu0 0.0
    %706 = vmatpush1.msra.mxu0 0.0
    %707 = vmatprep.subr.mxu0 0.0
    %708 = vmatpush1.msra.mxu0 0.0
    %709 = vmatprep.subr.mxu0 0.0
    %710 = vmatpush1.msra.mxu0 0.0
    %711 = vmatprep.subr.mxu0 0.0
    %712 = vmatpush1.msra.mxu0 0.0
    %713 = vmatprep.mubr.f32.mxu0 0.0
    %714 = vmatmul.mubr.f32.gmra.mrb[0].mxu0 %v620
    %v715 = vpop.f32.mrb[0].mxu0
    %v716 = vadd.f32 0.0, %v715
    %v717 = vpop.f32.mrb[0].mxu0
    %718 = vmatprep.mubr.f32.mxu0 0.0
    %719 = vmatmul.mubr.f32.gmra.mrb[0].mxu0 %v623
    %v720 = vpop.f32.mrb[0].mxu0
    %v721 = vadd.f32 0.0, %v720
    %v722 = vpop.f32.mrb[0].mxu0
    %723 = vmatprep.mubr.f32.mxu0 0.0
    %724 = vmatmul.mubr.f32.gmra.mrb[0].mxu0 %v626
    %v725 = vpop.f32.mrb[0].mxu0
    %v726 = vadd.f32 0.0, %v725
    %v727 = vpop.f32.mrb[0].mxu0
    %728 = vmatprep.mubr.f32.mxu0 0.0
    %729 = vmatmul.mubr.f32.gmra.mrb[0].mxu0 %v629
    %v730 = vpop.f32.mrb[0].mxu0
    %v731 = vadd.f32 0.0, %v730
    %v732 = vpop.f32.mrb[0].mxu0
    %733 = vmatprep.mubr.f32.mxu0 0.0
    %734 = vmatmul.mubr.f32.gmra.mrb[0].mxu0 %v632
    %v735 = vpop.f32.mrb[0].mxu0
    %v736 = vadd.f32 0.0, %v735
    %v737 = vpop.f32.mrb[0].mxu0
    %738 = vmatprep.mubr.f32.mxu0 0.0
    %739 = vmatmul.mubr.f32.gmra.mrb[0].mxu0 %v635
    %v740 = vpop.f32.mrb[0].mxu0
    %v741 = vadd.f32 0.0, %v740
    %v742 = vpop.f32.mrb[0].mxu0
    %743 = vmatprep.mubr.f32.mxu0 0.0
    %744 = vmatmul.mubr.f32.gmra.mrb[0].mxu0 %v638
    %v745 = vpop.f32.mrb[0].mxu0
    %v746 = vadd.f32 0.0, %v745
    %v747 = vpop.f32.mrb[0].mxu0
    %748 = vmatprep.mubr.f32.mxu0 0.0
    %749 = vmatmul.mubr.f32.gmra.mrb[0].mxu0 %v641
    %v750 = vpop.f32.mrb[0].mxu0
    %v751 = vadd.f32 0.0, %v750
    %v752 = vpop.f32.mrb[0].mxu0
    %753 = vmatprep.mubr.f32.mxu0 0.0
    %754 = vmatmul.mubr.f32.gmra.mrb[0].mxu0 %v644
    %v755 = vpop.f32.mrb[0].mxu0
    %v756 = vadd.f32 0.0, %v755
    %v757 = vpop.f32.mrb[0].mxu0
    %758 = vdwg.mxu0
    %v759 = vadd.f32 %v585, %v716
    %v760 = vadd.f32 %v586, %v721
    %v761 = vadd.f32 %v587, %v726
    %v762 = vadd.f32 %v588, %v731
    %v763 = vadd.f32 %v589, %v736
    %v764 = vadd.f32 %v590, %v741
    %v765 = vadd.f32 %v591, %v746
    %v766 = vadd.f32 %v592, %v751
    %v767 = vadd.f32 %v593, %v756
    %s768 = scalar_lea.vmem %s2, 4
    %v769 = vld [vmem:[%s768] sm:$0x1]
    %v771 = vlaneseq
    %v772 = vshrl.u32 %v771, 7
    %v773 = vsub.s32 0, %v772
    %v774 = vrot.slane %v769, %v773
    %v776 = vmul.f32 %v59, %v774
    %v777 = vmul.f32 %v64, %v774
    %v778 = vmul.f32 %v69, %v774
    %v779 = vmul.f32 %v74, %v774
    %v780 = vmul.f32 %v79, %v774
    %v781 = vmul.f32 %v84, %v774
    %v782 = vmul.f32 %v89, %v774
    %s783 = scalar_lea.vmem %s1, 288
    %v784 = vld [vmem:[%s783] sm:$0xff]
    %v785 = vld [vmem:[%s783 + $0x8] sm:$0xff]
    %v786 = vld [vmem:[%s783 + $0x10] sm:$0xff]
    %v787 = vld [vmem:[%s783 + $0x18] sm:$0xff]
    %v788 = vld [vmem:[%s783 + $0x20] sm:$0xff]
    %v789 = vld [vmem:[%s783 + $0x28] sm:$0xff]
    %v790 = vld [vmem:[%s783 + $0x30] sm:$0xff]
    %v791 = vld [vmem:[%s783 + $0x38] sm:$0xff]
    %v792 = vld [vmem:[%s783 + $0x40] sm:$0xff]
    %v794 = vsel %vm138, %v784, 0
    %v797 = vsel %vm138, %v785, 0
    %v800 = vsel %vm138, %v786, 0
    %v803 = vsel %vm138, %v787, 0
    %v806 = vsel %vm138, %v788, 0
    %v809 = vsel %vm138, %v789, 0
    %v812 = vsel %vm138, %v790, 0
    %v815 = vsel %vm138, %v791, 0
    %v818 = vsel %vm138, %v792, 0
    %v821 = vsel %vm166, %v782, 0
    %823 = vmatprep.subr.mxu0 0.0
    %824 = vmatpush1.msra.mxu0 %v776
    %825 = vmatprep.subr.mxu0 0.0
    %826 = vmatpush1.msra.mxu0 %v777
    %827 = vmatprep.subr.mxu0 0.0
    %828 = vmatpush1.msra.mxu0 %v778
    %829 = vmatprep.subr.mxu0 0.0
    %830 = vmatpush1.msra.mxu0 %v779
    %831 = vmatprep.subr.mxu0 0.0
    %832 = vmatpush1.msra.mxu0 %v780
    %833 = vmatprep.subr.mxu0 0.0
    %834 = vmatpush1.msra.mxu0 %v781
    %835 = vmatprep.subr.mxu0 0.0
    %836 = vmatpush1.msra.mxu0 %v821
    %837 = vmatprep.subr.mxu0 0.0
    %838 = vmatpush1.msra.mxu0 0.0
    %839 = vmatprep.subr.mxu0 0.0
    %840 = vmatpush1.msra.mxu0 0.0
    %841 = vmatprep.subr.mxu0 0.0
    %842 = vmatpush1.msra.mxu0 0.0
    %843 = vmatprep.subr.mxu0 0.0
    %844 = vmatpush1.msra.mxu0 0.0
    %845 = vmatprep.subr.mxu0 0.0
    %846 = vmatpush1.msra.mxu0 0.0
    %847 = vmatprep.subr.mxu0 0.0
    %848 = vmatpush1.msra.mxu0 0.0
    %849 = vmatprep.subr.mxu0 0.0
    %850 = vmatpush1.msra.mxu0 0.0
    %851 = vmatprep.subr.mxu0 0.0
    %852 = vmatpush1.msra.mxu0 0.0
    %853 = vmatprep.subr.mxu0 0.0
    %854 = vmatpush1.msra.mxu0 0.0
    %855 = vmatprep.subr.mxu0 0.0
    %856 = vmatpush1.msra.mxu0 0.0
    %857 = vmatprep.subr.mxu0 0.0
    %858 = vmatpush1.msra.mxu0 0.0
    %859 = vmatprep.subr.mxu0 0.0
    %860 = vmatpush1.msra.mxu0 0.0
    %861 = vmatprep.subr.mxu0 0.0
    %862 = vmatpush1.msra.mxu0 0.0
    %863 = vmatprep.subr.mxu0 0.0
    %864 = vmatpush1.msra.mxu0 0.0
    %865 = vmatprep.subr.mxu0 0.0
    %866 = vmatpush1.msra.mxu0 0.0
    %867 = vmatprep.subr.mxu0 0.0
    %868 = vmatpush1.msra.mxu0 0.0
    %869 = vmatprep.subr.mxu0 0.0
    %870 = vmatpush1.msra.mxu0 0.0
    %871 = vmatprep.subr.mxu0 0.0
    %872 = vmatpush1.msra.mxu0 0.0
    %873 = vmatprep.subr.mxu0 0.0
    %874 = vmatpush1.msra.mxu0 0.0
    %875 = vmatprep.subr.mxu0 0.0
    %876 = vmatpush1.msra.mxu0 0.0
    %877 = vmatprep.subr.mxu0 0.0
    %878 = vmatpush1.msra.mxu0 0.0
    %879 = vmatprep.subr.mxu0 0.0
    %880 = vmatpush1.msra.mxu0 0.0
    %881 = vmatprep.subr.mxu0 0.0
    %882 = vmatpush1.msra.mxu0 0.0
    %883 = vmatprep.subr.mxu0 0.0
    %884 = vmatpush1.msra.mxu0 0.0
    %885 = vmatprep.subr.mxu0 0.0
    %886 = vmatpush1.msra.mxu0 0.0
    %887 = vmatprep.mubr.f32.mxu0 0.0
    %888 = vmatmul.mubr.f32.gmra.mrb[0].mxu0 %v794
    %v889 = vpop.f32.mrb[0].mxu0
    %v890 = vadd.f32 0.0, %v889
    %v891 = vpop.f32.mrb[0].mxu0
    %892 = vmatprep.mubr.f32.mxu0 0.0
    %893 = vmatmul.mubr.f32.gmra.mrb[0].mxu0 %v797
    %v894 = vpop.f32.mrb[0].mxu0
    %v895 = vadd.f32 0.0, %v894
    %v896 = vpop.f32.mrb[0].mxu0
    %897 = vmatprep.mubr.f32.mxu0 0.0
    %898 = vmatmul.mubr.f32.gmra.mrb[0].mxu0 %v800
    %v899 = vpop.f32.mrb[0].mxu0
    %v900 = vadd.f32 0.0, %v899
    %v901 = vpop.f32.mrb[0].mxu0
    %902 = vmatprep.mubr.f32.mxu0 0.0
    %903 = vmatmul.mubr.f32.gmra.mrb[0].mxu0 %v803
    %v904 = vpop.f32.mrb[0].mxu0
    %v905 = vadd.f32 0.0, %v904
    %v906 = vpop.f32.mrb[0].mxu0
    %907 = vmatprep.mubr.f32.mxu0 0.0
    %908 = vmatmul.mubr.f32.gmra.mrb[0].mxu0 %v806
    %v909 = vpop.f32.mrb[0].mxu0
    %v910 = vadd.f32 0.0, %v909
    %v911 = vpop.f32.mrb[0].mxu0
    %912 = vmatprep.mubr.f32.mxu0 0.0
    %913 = vmatmul.mubr.f32.gmra.mrb[0].mxu0 %v809
    %v914 = vpop.f32.mrb[0].mxu0
    %v915 = vadd.f32 0.0, %v914
    %v916 = vpop.f32.mrb[0].mxu0
    %917 = vmatprep.mubr.f32.mxu0 0.0
    %918 = vmatmul.mubr.f32.gmra.mrb[0].mxu0 %v812
    %v919 = vpop.f32.mrb[0].mxu0
    %v920 = vadd.f32 0.0, %v919
    %v921 = vpop.f32.mrb[0].mxu0
    %922 = vmatprep.mubr.f32.mxu0 0.0
    %923 = vmatmul.mubr.f32.gmra.mrb[0].mxu0 %v815
    %v924 = vpop.f32.mrb[0].mxu0
    %v925 = vadd.f32 0.0, %v924
    %v926 = vpop.f32.mrb[0].mxu0
    %927 = vmatprep.mubr.f32.mxu0 0.0
    %928 = vmatmul.mubr.f32.gmra.mrb[0].mxu0 %v818
    %v929 = vpop.f32.mrb[0].mxu0
    %v930 = vadd.f32 0.0, %v929
    %v931 = vpop.f32.mrb[0].mxu0
    %932 = vdwg.mxu0
    %v933 = vadd.f32 %v759, %v890
    %v934 = vadd.f32 %v760, %v895
    %v935 = vadd.f32 %v761, %v900
    %v936 = vadd.f32 %v762, %v905
    %v937 = vadd.f32 %v763, %v910
    %v938 = vadd.f32 %v764, %v915
    %v939 = vadd.f32 %v765, %v920
    %v940 = vadd.f32 %v766, %v925
    %v941 = vadd.f32 %v767, %v930
    %s942 = scalar_lea.vmem %s2, 5
    %v943 = vld [vmem:[%s942] sm:$0x1]
    %v945 = vlaneseq
    %v946 = vshrl.u32 %v945, 7
    %v947 = vsub.s32 0, %v946
    %v948 = vrot.slane %v943, %v947
    %v950 = vmul.f32 %v59, %v948
    %v951 = vmul.f32 %v64, %v948
    %v952 = vmul.f32 %v69, %v948
    %v953 = vmul.f32 %v74, %v948
    %v954 = vmul.f32 %v79, %v948
    %v955 = vmul.f32 %v84, %v948
    %v956 = vmul.f32 %v89, %v948
    %s957 = scalar_lea.vmem %s1, 360
    %v958 = vld [vmem:[%s957] sm:$0xff]
    %v959 = vld [vmem:[%s957 + $0x8] sm:$0xff]
    %v960 = vld [vmem:[%s957 + $0x10] sm:$0xff]
    %v961 = vld [vmem:[%s957 + $0x18] sm:$0xff]
    %v962 = vld [vmem:[%s957 + $0x20] sm:$0xff]
    %v963 = vld [vmem:[%s957 + $0x28] sm:$0xff]
    %v964 = vld [vmem:[%s957 + $0x30] sm:$0xff]
    %v965 = vld [vmem:[%s957 + $0x38] sm:$0xff]
    %v966 = vld [vmem:[%s957 + $0x40] sm:$0xff]
    %v968 = vsel %vm138, %v958, 0
    %v971 = vsel %vm138, %v959, 0
    %v974 = vsel %vm138, %v960, 0
    %v977 = vsel %vm138, %v961, 0
    %v980 = vsel %vm138, %v962, 0
    %v983 = vsel %vm138, %v963, 0
    %v986 = vsel %vm138, %v964, 0
    %v989 = vsel %vm138, %v965, 0
    %v992 = vsel %vm138, %v966, 0
    %v995 = vsel %vm166, %v956, 0
    %997 = vmatprep.subr.mxu0 0.0
    %998 = vmatpush1.msra.mxu0 %v950
    %999 = vmatprep.subr.mxu0 0.0
    %1000 = vmatpush1.msra.mxu0 %v951
    %1001 = vmatprep.subr.mxu0 0.0
    %1002 = vmatpush1.msra.mxu0 %v952
    %1003 = vmatprep.subr.mxu0 0.0
    %1004 = vmatpush1.msra.mxu0 %v953
    %1005 = vmatprep.subr.mxu0 0.0
    %1006 = vmatpush1.msra.mxu0 %v954
    %1007 = vmatprep.subr.mxu0 0.0
    %1008 = vmatpush1.msra.mxu0 %v955
    %1009 = vmatprep.subr.mxu0 0.0
    %1010 = vmatpush1.msra.mxu0 %v995
    %1011 = vmatprep.subr.mxu0 0.0
    %1012 = vmatpush1.msra.mxu0 0.0
    %1013 = vmatprep.subr.mxu0 0.0
    %1014 = vmatpush1.msra.mxu0 0.0
    %1015 = vmatprep.subr.mxu0 0.0
    %1016 = vmatpush1.msra.mxu0 0.0
    %1017 = vmatprep.subr.mxu0 0.0
    %1018 = vmatpush1.msra.mxu0 0.0
    %1019 = vmatprep.subr.mxu0 0.0
    %1020 = vmatpush1.msra.mxu0 0.0
    %1021 = vmatprep.subr.mxu0 0.0
    %1022 = vmatpush1.msra.mxu0 0.0
    %1023 = vmatprep.subr.mxu0 0.0
    %1024 = vmatpush1.msra.mxu0 0.0
    %1025 = vmatprep.subr.mxu0 0.0
    %1026 = vmatpush1.msra.mxu0 0.0
    %1027 = vmatprep.subr.mxu0 0.0
    %1028 = vmatpush1.msra.mxu0 0.0
    %1029 = vmatprep.subr.mxu0 0.0
    %1030 = vmatpush1.msra.mxu0 0.0
    %1031 = vmatprep.subr.mxu0 0.0
    %1032 = vmatpush1.msra.mxu0 0.0
    %1033 = vmatprep.subr.mxu0 0.0
    %1034 = vmatpush1.msra.mxu0 0.0
    %1035 = vmatprep.subr.mxu0 0.0
    %1036 = vmatpush1.msra.mxu0 0.0
    %1037 = vmatprep.subr.mxu0 0.0
    %1038 = vmatpush1.msra.mxu0 0.0
    %1039 = vmatprep.subr.mxu0 0.0
    %1040 = vmatpush1.msra.mxu0 0.0
    %1041 = vmatprep.subr.mxu0 0.0
    %1042 = vmatpush1.msra.mxu0 0.0
    %1043 = vmatprep.subr.mxu0 0.0
    %1044 = vmatpush1.msra.mxu0 0.0
    %1045 = vmatprep.subr.mxu0 0.0
    %1046 = vmatpush1.msra.mxu0 0.0
    %1047 = vmatprep.subr.mxu0 0.0
    %1048 = vmatpush1.msra.mxu0 0.0
    %1049 = vmatprep.subr.mxu0 0.0
    %1050 = vmatpush1.msra.mxu0 0.0
    %1051 = vmatprep.subr.mxu0 0.0
    %1052 = vmatpush1.msra.mxu0 0.0
    %1053 = vmatprep.subr.mxu0 0.0
    %1054 = vmatpush1.msra.mxu0 0.0
    %1055 = vmatprep.subr.mxu0 0.0
    %1056 = vmatpush1.msra.mxu0 0.0
    %1057 = vmatprep.subr.mxu0 0.0
    %1058 = vmatpush1.msra.mxu0 0.0
    %1059 = vmatprep.subr.mxu0 0.0
    %1060 = vmatpush1.msra.mxu0 0.0
    %1061 = vmatprep.mubr.f32.mxu0 0.0
    %1062 = vmatmul.mubr.f32.gmra.mrb[0].mxu0 %v968
    %v1063 = vpop.f32.mrb[0].mxu0
    %v1064 = vadd.f32 0.0, %v1063
    %v1065 = vpop.f32.mrb[0].mxu0
    %1066 = vmatprep.mubr.f32.mxu0 0.0
    %1067 = vmatmul.mubr.f32.gmra.mrb[0].mxu0 %v971
    %v1068 = vpop.f32.mrb[0].mxu0
    %v1069 = vadd.f32 0.0, %v1068
    %v1070 = vpop.f32.mrb[0].mxu0
    %1071 = vmatprep.mubr.f32.mxu0 0.0
    %1072 = vmatmul.mubr.f32.gmra.mrb[0].mxu0 %v974
    %v1073 = vpop.f32.mrb[0].mxu0
    %v1074 = vadd.f32 0.0, %v1073
    %v1075 = vpop.f32.mrb[0].mxu0
    %1076 = vmatprep.mubr.f32.mxu0 0.0
    %1077 = vmatmul.mubr.f32.gmra.mrb[0].mxu0 %v977
    %v1078 = vpop.f32.mrb[0].mxu0
    %v1079 = vadd.f32 0.0, %v1078
    %v1080 = vpop.f32.mrb[0].mxu0
    %1081 = vmatprep.mubr.f32.mxu0 0.0
    %1082 = vmatmul.mubr.f32.gmra.mrb[0].mxu0 %v980
    %v1083 = vpop.f32.mrb[0].mxu0
    %v1084 = vadd.f32 0.0, %v1083
    %v1085 = vpop.f32.mrb[0].mxu0
    %1086 = vmatprep.mubr.f32.mxu0 0.0
    %1087 = vmatmul.mubr.f32.gmra.mrb[0].mxu0 %v983
    %v1088 = vpop.f32.mrb[0].mxu0
    %v1089 = vadd.f32 0.0, %v1088
    %v1090 = vpop.f32.mrb[0].mxu0
    %1091 = vmatprep.mubr.f32.mxu0 0.0
    %1092 = vmatmul.mubr.f32.gmra.mrb[0].mxu0 %v986
    %v1093 = vpop.f32.mrb[0].mxu0
    %v1094 = vadd.f32 0.0, %v1093
    %v1095 = vpop.f32.mrb[0].mxu0
    %1096 = vmatprep.mubr.f32.mxu0 0.0
    %1097 = vmatmul.mubr.f32.gmra.mrb[0].mxu0 %v989
    %v1098 = vpop.f32.mrb[0].mxu0
    %v1099 = vadd.f32 0.0, %v1098
    %v1100 = vpop.f32.mrb[0].mxu0
    %1101 = vmatprep.mubr.f32.mxu0 0.0
    %1102 = vmatmul.mubr.f32.gmra.mrb[0].mxu0 %v992
    %v1103 = vpop.f32.mrb[0].mxu0
    %v1104 = vadd.f32 0.0, %v1103
    %v1105 = vpop.f32.mrb[0].mxu0
    %1106 = vdwg.mxu0
    %v1107 = vadd.f32 %v933, %v1064
    %v1108 = vadd.f32 %v934, %v1069
    %v1109 = vadd.f32 %v935, %v1074
    %v1110 = vadd.f32 %v936, %v1079
    %v1111 = vadd.f32 %v937, %v1084
    %v1112 = vadd.f32 %v938, %v1089
    %v1113 = vadd.f32 %v939, %v1094
    %v1114 = vadd.f32 %v940, %v1099
    %v1115 = vadd.f32 %v941, %v1104
    %s1116 = scalar_lea.vmem %s2, 6
    %v1117 = vld [vmem:[%s1116] sm:$0x1]
    %v1119 = vlaneseq
    %v1120 = vshrl.u32 %v1119, 7
    %v1121 = vsub.s32 0, %v1120
    %v1122 = vrot.slane %v1117, %v1121
    %v1124 = vmul.f32 %v59, %v1122
    %v1125 = vmul.f32 %v64, %v1122
    %v1126 = vmul.f32 %v69, %v1122
    %v1127 = vmul.f32 %v74, %v1122
    %v1128 = vmul.f32 %v79, %v1122
    %v1129 = vmul.f32 %v84, %v1122
    %v1130 = vmul.f32 %v89, %v1122
    %s1131 = scalar_lea.vmem %s1, 432
    %v1132 = vld [vmem:[%s1131] sm:$0xff]
    %v1133 = vld [vmem:[%s1131 + $0x8] sm:$0xff]
    %v1134 = vld [vmem:[%s1131 + $0x10] sm:$0xff]
    %v1135 = vld [vmem:[%s1131 + $0x18] sm:$0xff]
    %v1136 = vld [vmem:[%s1131 + $0x20] sm:$0xff]
    %v1137 = vld [vmem:[%s1131 + $0x28] sm:$0xff]
    %v1138 = vld [vmem:[%s1131 + $0x30] sm:$0xff]
    %v1139 = vld [vmem:[%s1131 + $0x38] sm:$0xff]
    %v1140 = vld [vmem:[%s1131 + $0x40] sm:$0xff]
    %v1142 = vsel %vm138, %v1132, 0
    %v1145 = vsel %vm138, %v1133, 0
    %v1148 = vsel %vm138, %v1134, 0
    %v1151 = vsel %vm138, %v1135, 0
    %v1154 = vsel %vm138, %v1136, 0
    %v1157 = vsel %vm138, %v1137, 0
    %v1160 = vsel %vm138, %v1138, 0
    %v1163 = vsel %vm138, %v1139, 0
    %v1166 = vsel %vm138, %v1140, 0
    %v1169 = vsel %vm166, %v1130, 0
    %1171 = vmatprep.subr.mxu0 0.0
    %1172 = vmatpush1.msra.mxu0 %v1124
    %1173 = vmatprep.subr.mxu0 0.0
    %1174 = vmatpush1.msra.mxu0 %v1125
    %1175 = vmatprep.subr.mxu0 0.0
    %1176 = vmatpush1.msra.mxu0 %v1126
    %1177 = vmatprep.subr.mxu0 0.0
    %1178 = vmatpush1.msra.mxu0 %v1127
    %1179 = vmatprep.subr.mxu0 0.0
    %1180 = vmatpush1.msra.mxu0 %v1128
    %1181 = vmatprep.subr.mxu0 0.0
    %1182 = vmatpush1.msra.mxu0 %v1129
    %1183 = vmatprep.subr.mxu0 0.0
    %1184 = vmatpush1.msra.mxu0 %v1169
    %1185 = vmatprep.subr.mxu0 0.0
    %1186 = vmatpush1.msra.mxu0 0.0
    %1187 = vmatprep.subr.mxu0 0.0
    %1188 = vmatpush1.msra.mxu0 0.0
    %1189 = vmatprep.subr.mxu0 0.0
    %1190 = vmatpush1.msra.mxu0 0.0
    %1191 = vmatprep.subr.mxu0 0.0
    %1192 = vmatpush1.msra.mxu0 0.0
    %1193 = vmatprep.subr.mxu0 0.0
    %1194 = vmatpush1.msra.mxu0 0.0
    %1195 = vmatprep.subr.mxu0 0.0
    %1196 = vmatpush1.msra.mxu0 0.0
    %1197 = vmatprep.subr.mxu0 0.0
    %1198 = vmatpush1.msra.mxu0 0.0
    %1199 = vmatprep.subr.mxu0 0.0
    %1200 = vmatpush1.msra.mxu0 0.0
    %1201 = vmatprep.subr.mxu0 0.0
    %1202 = vmatpush1.msra.mxu0 0.0
    %1203 = vmatprep.subr.mxu0 0.0
    %1204 = vmatpush1.msra.mxu0 0.0
    %1205 = vmatprep.subr.mxu0 0.0
    %1206 = vmatpush1.msra.mxu0 0.0
    %1207 = vmatprep.subr.mxu0 0.0
    %1208 = vmatpush1.msra.mxu0 0.0
    %1209 = vmatprep.subr.mxu0 0.0
    %1210 = vmatpush1.msra.mxu0 0.0
    %1211 = vmatprep.subr.mxu0 0.0
    %1212 = vmatpush1.msra.mxu0 0.0
    %1213 = vmatprep.subr.mxu0 0.0
    %1214 = vmatpush1.msra.mxu0 0.0
    %1215 = vmatprep.subr.mxu0 0.0
    %1216 = vmatpush1.msra.mxu0 0.0
    %1217 = vmatprep.subr.mxu0 0.0
    %1218 = vmatpush1.msra.mxu0 0.0
    %1219 = vmatprep.subr.mxu0 0.0
    %1220 = vmatpush1.msra.mxu0 0.0
    %1221 = vmatprep.subr.mxu0 0.0
    %1222 = vmatpush1.msra.mxu0 0.0
    %1223 = vmatprep.subr.mxu0 0.0
    %1224 = vmatpush1.msra.mxu0 0.0
    %1225 = vmatprep.subr.mxu0 0.0
    %1226 = vmatpush1.msra.mxu0 0.0
    %1227 = vmatprep.subr.mxu0 0.0
    %1228 = vmatpush1.msra.mxu0 0.0
    %1229 = vmatprep.subr.mxu0 0.0
    %1230 = vmatpush1.msra.mxu0 0.0
    %1231 = vmatprep.subr.mxu0 0.0
    %1232 = vmatpush1.msra.mxu0 0.0
    %1233 = vmatprep.subr.mxu0 0.0
    %1234 = vmatpush1.msra.mxu0 0.0
    %1235 = vmatprep.mubr.f32.mxu0 0.0
    %1236 = vmatmul.mubr.f32.gmra.mrb[0].mxu0 %v1142
    %v1237 = vpop.f32.mrb[0].mxu0
    %v1238 = vadd.f32 0.0, %v1237
    %v1239 = vpop.f32.mrb[0].mxu0
    %1240 = vmatprep.mubr.f32.mxu0 0.0
    %1241 = vmatmul.mubr.f32.gmra.mrb[0].mxu0 %v1145
    %v1242 = vpop.f32.mrb[0].mxu0
    %v1243 = vadd.f32 0.0, %v1242
    %v1244 = vpop.f32.mrb[0].mxu0
    %1245 = vmatprep.mubr.f32.mxu0 0.0
    %1246 = vmatmul.mubr.f32.gmra.mrb[0].mxu0 %v1148
    %v1247 = vpop.f32.mrb[0].mxu0
    %v1248 = vadd.f32 0.0, %v1247
    %v1249 = vpop.f32.mrb[0].mxu0
    %1250 = vmatprep.mubr.f32.mxu0 0.0
    %1251 = vmatmul.mubr.f32.gmra.mrb[0].mxu0 %v1151
    %v1252 = vpop.f32.mrb[0].mxu0
    %v1253 = vadd.f32 0.0, %v1252
    %v1254 = vpop.f32.mrb[0].mxu0
    %1255 = vmatprep.mubr.f32.mxu0 0.0
    %1256 = vmatmul.mubr.f32.gmra.mrb[0].mxu0 %v1154
    %v1257 = vpop.f32.mrb[0].mxu0
    %v1258 = vadd.f32 0.0, %v1257
    %v1259 = vpop.f32.mrb[0].mxu0
    %1260 = vmatprep.mubr.f32.mxu0 0.0
    %1261 = vmatmul.mubr.f32.gmra.mrb[0].mxu0 %v1157
    %v1262 = vpop.f32.mrb[0].mxu0
    %v1263 = vadd.f32 0.0, %v1262
    %v1264 = vpop.f32.mrb[0].mxu0
    %1265 = vmatprep.mubr.f32.mxu0 0.0
    %1266 = vmatmul.mubr.f32.gmra.mrb[0].mxu0 %v1160
    %v1267 = vpop.f32.mrb[0].mxu0
    %v1268 = vadd.f32 0.0, %v1267
    %v1269 = vpop.f32.mrb[0].mxu0
    %1270 = vmatprep.mubr.f32.mxu0 0.0
    %1271 = vmatmul.mubr.f32.gmra.mrb[0].mxu0 %v1163
    %v1272 = vpop.f32.mrb[0].mxu0
    %v1273 = vadd.f32 0.0, %v1272
    %v1274 = vpop.f32.mrb[0].mxu0
    %1275 = vmatprep.mubr.f32.mxu0 0.0
    %1276 = vmatmul.mubr.f32.gmra.mrb[0].mxu0 %v1166
    %v1277 = vpop.f32.mrb[0].mxu0
    %v1278 = vadd.f32 0.0, %v1277
    %v1279 = vpop.f32.mrb[0].mxu0
    %1280 = vdwg.mxu0
    %v1281 = vadd.f32 %v1107, %v1238
    %v1282 = vadd.f32 %v1108, %v1243
    %v1283 = vadd.f32 %v1109, %v1248
    %v1284 = vadd.f32 %v1110, %v1253
    %v1285 = vadd.f32 %v1111, %v1258
    %v1286 = vadd.f32 %v1112, %v1263
    %v1287 = vadd.f32 %v1113, %v1268
    %v1288 = vadd.f32 %v1114, %v1273
    %v1289 = vadd.f32 %v1115, %v1278
    %s1290 = scalar_lea.vmem %s2, 7
    %v1291 = vld [vmem:[%s1290] sm:$0x1]
    %v1293 = vlaneseq
    %v1294 = vshrl.u32 %v1293, 7
    %v1295 = vsub.s32 0, %v1294
    %v1296 = vrot.slane %v1291, %v1295
    %v1298 = vmul.f32 %v59, %v1296
    %v1299 = vmul.f32 %v64, %v1296
    %v1300 = vmul.f32 %v69, %v1296
    %v1301 = vmul.f32 %v74, %v1296
    %v1302 = vmul.f32 %v79, %v1296
    %v1303 = vmul.f32 %v84, %v1296
    %v1304 = vmul.f32 %v89, %v1296
    %s1305 = scalar_lea.vmem %s1, 504
    %v1306 = vld [vmem:[%s1305] sm:$0xff]
    %v1307 = vld [vmem:[%s1305 + $0x8] sm:$0xff]
    %v1308 = vld [vmem:[%s1305 + $0x10] sm:$0xff]
    %v1309 = vld [vmem:[%s1305 + $0x18] sm:$0xff]
    %v1310 = vld [vmem:[%s1305 + $0x20] sm:$0xff]
    %v1311 = vld [vmem:[%s1305 + $0x28] sm:$0xff]
    %v1312 = vld [vmem:[%s1305 + $0x30] sm:$0xff]
    %v1313 = vld [vmem:[%s1305 + $0x38] sm:$0xff]
    %v1314 = vld [vmem:[%s1305 + $0x40] sm:$0xff]
    %v1316 = vsel %vm138, %v1306, 0
    %v1319 = vsel %vm138, %v1307, 0
    %v1322 = vsel %vm138, %v1308, 0
    %v1325 = vsel %vm138, %v1309, 0
    %v1328 = vsel %vm138, %v1310, 0
    %v1331 = vsel %vm138, %v1311, 0
    %v1334 = vsel %vm138, %v1312, 0
    %v1337 = vsel %vm138, %v1313, 0
    %v1340 = vsel %vm138, %v1314, 0
    %v1343 = vsel %vm166, %v1304, 0
    %1345 = vmatprep.subr.mxu0 0.0
    %1346 = vmatpush1.msra.mxu0 %v1298
    %1347 = vmatprep.subr.mxu0 0.0
    %1348 = vmatpush1.msra.mxu0 %v1299
    %1349 = vmatprep.subr.mxu0 0.0
    %1350 = vmatpush1.msra.mxu0 %v1300
    %1351 = vmatprep.subr.mxu0 0.0
    %1352 = vmatpush1.msra.mxu0 %v1301
    %1353 = vmatprep.subr.mxu0 0.0
    %1354 = vmatpush1.msra.mxu0 %v1302
    %1355 = vmatprep.subr.mxu0 0.0
    %1356 = vmatpush1.msra.mxu0 %v1303
    %1357 = vmatprep.subr.mxu0 0.0
    %1358 = vmatpush1.msra.mxu0 %v1343
    %1359 = vmatprep.subr.mxu0 0.0
    %1360 = vmatpush1.msra.mxu0 0.0
    %1361 = vmatprep.subr.mxu0 0.0
    %1362 = vmatpush1.msra.mxu0 0.0
    %1363 = vmatprep.subr.mxu0 0.0
    %1364 = vmatpush1.msra.mxu0 0.0
    %1365 = vmatprep.subr.mxu0 0.0
    %1366 = vmatpush1.msra.mxu0 0.0
    %1367 = vmatprep.subr.mxu0 0.0
    %1368 = vmatpush1.msra.mxu0 0.0
    %1369 = vmatprep.subr.mxu0 0.0
    %1370 = vmatpush1.msra.mxu0 0.0
    %1371 = vmatprep.subr.mxu0 0.0
    %1372 = vmatpush1.msra.mxu0 0.0
    %1373 = vmatprep.subr.mxu0 0.0
    %1374 = vmatpush1.msra.mxu0 0.0
    %1375 = vmatprep.subr.mxu0 0.0
    %1376 = vmatpush1.msra.mxu0 0.0
    %1377 = vmatprep.subr.mxu0 0.0
    %1378 = vmatpush1.msra.mxu0 0.0
    %1379 = vmatprep.subr.mxu0 0.0
    %1380 = vmatpush1.msra.mxu0 0.0
    %1381 = vmatprep.subr.mxu0 0.0
    %1382 = vmatpush1.msra.mxu0 0.0
    %1383 = vmatprep.subr.mxu0 0.0
    %1384 = vmatpush1.msra.mxu0 0.0
    %1385 = vmatprep.subr.mxu0 0.0
    %1386 = vmatpush1.msra.mxu0 0.0
    %1387 = vmatprep.subr.mxu0 0.0
    %1388 = vmatpush1.msra.mxu0 0.0
    %1389 = vmatprep.subr.mxu0 0.0
    %1390 = vmatpush1.msra.mxu0 0.0
    %1391 = vmatprep.subr.mxu0 0.0
    %1392 = vmatpush1.msra.mxu0 0.0
    %1393 = vmatprep.subr.mxu0 0.0
    %1394 = vmatpush1.msra.mxu0 0.0
    %1395 = vmatprep.subr.mxu0 0.0
    %1396 = vmatpush1.msra.mxu0 0.0
    %1397 = vmatprep.subr.mxu0 0.0
    %1398 = vmatpush1.msra.mxu0 0.0
    %1399 = vmatprep.subr.mxu0 0.0
    %1400 = vmatpush1.msra.mxu0 0.0
    %1401 = vmatprep.subr.mxu0 0.0
    %1402 = vmatpush1.msra.mxu0 0.0
    %1403 = vmatprep.subr.mxu0 0.0
    %1404 = vmatpush1.msra.mxu0 0.0
    %1405 = vmatprep.subr.mxu0 0.0
    %1406 = vmatpush1.msra.mxu0 0.0
    %1407 = vmatprep.subr.mxu0 0.0
    %1408 = vmatpush1.msra.mxu0 0.0
    %1409 = vmatprep.mubr.f32.mxu0 0.0
    %1410 = vmatmul.mubr.f32.gmra.mrb[0].mxu0 %v1316
    %v1411 = vpop.f32.mrb[0].mxu0
    %v1412 = vadd.f32 0.0, %v1411
    %v1413 = vpop.f32.mrb[0].mxu0
    %1414 = vmatprep.mubr.f32.mxu0 0.0
    %1415 = vmatmul.mubr.f32.gmra.mrb[0].mxu0 %v1319
    %v1416 = vpop.f32.mrb[0].mxu0
    %v1417 = vadd.f32 0.0, %v1416
    %v1418 = vpop.f32.mrb[0].mxu0
    %1419 = vmatprep.mubr.f32.mxu0 0.0
    %1420 = vmatmul.mubr.f32.gmra.mrb[0].mxu0 %v1322
    %v1421 = vpop.f32.mrb[0].mxu0
    %v1422 = vadd.f32 0.0, %v1421
    %v1423 = vpop.f32.mrb[0].mxu0
    %1424 = vmatprep.mubr.f32.mxu0 0.0
    %1425 = vmatmul.mubr.f32.gmra.mrb[0].mxu0 %v1325
    %v1426 = vpop.f32.mrb[0].mxu0
    %v1427 = vadd.f32 0.0, %v1426
    %v1428 = vpop.f32.mrb[0].mxu0
    %1429 = vmatprep.mubr.f32.mxu0 0.0
    %1430 = vmatmul.mubr.f32.gmra.mrb[0].mxu0 %v1328
    %v1431 = vpop.f32.mrb[0].mxu0
    %v1432 = vadd.f32 0.0, %v1431
    %v1433 = vpop.f32.mrb[0].mxu0
    %1434 = vmatprep.mubr.f32.mxu0 0.0
    %1435 = vmatmul.mubr.f32.gmra.mrb[0].mxu0 %v1331
    %v1436 = vpop.f32.mrb[0].mxu0
    %v1437 = vadd.f32 0.0, %v1436
    %v1438 = vpop.f32.mrb[0].mxu0
    %1439 = vmatprep.mubr.f32.mxu0 0.0
    %1440 = vmatmul.mubr.f32.gmra.mrb[0].mxu0 %v1334
    %v1441 = vpop.f32.mrb[0].mxu0
    %v1442 = vadd.f32 0.0, %v1441
    %v1443 = vpop.f32.mrb[0].mxu0
    %1444 = vmatprep.mubr.f32.mxu0 0.0
    %1445 = vmatmul.mubr.f32.gmra.mrb[0].mxu0 %v1337
    %v1446 = vpop.f32.mrb[0].mxu0
    %v1447 = vadd.f32 0.0, %v1446
    %v1448 = vpop.f32.mrb[0].mxu0
    %1449 = vmatprep.mubr.f32.mxu0 0.0
    %1450 = vmatmul.mubr.f32.gmra.mrb[0].mxu0 %v1340
    %v1451 = vpop.f32.mrb[0].mxu0
    %v1452 = vadd.f32 0.0, %v1451
    %v1453 = vpop.f32.mrb[0].mxu0
    %1454 = vdwg.mxu0
    %v1455 = vadd.f32 %v1281, %v1412
    %v1456 = vadd.f32 %v1282, %v1417
    %v1457 = vadd.f32 %v1283, %v1422
    %v1458 = vadd.f32 %v1284, %v1427
    %v1459 = vadd.f32 %v1285, %v1432
    %v1460 = vadd.f32 %v1286, %v1437
    %v1461 = vadd.f32 %v1287, %v1442
    %v1462 = vadd.f32 %v1288, %v1447
    %v1463 = vadd.f32 %v1289, %v1452
    %s1464 = scalar_lea.vmem %s2, 8
    %v1465 = vld [vmem:[%s1464] sm:$0x1]
    %v1467 = vlaneseq
    %v1468 = vshrl.u32 %v1467, 7
    %v1469 = vsub.s32 0, %v1468
    %v1470 = vrot.slane %v1465, %v1469
    %v1472 = vmul.f32 %v59, %v1470
    %v1473 = vmul.f32 %v64, %v1470
    %v1474 = vmul.f32 %v69, %v1470
    %v1475 = vmul.f32 %v74, %v1470
    %v1476 = vmul.f32 %v79, %v1470
    %v1477 = vmul.f32 %v84, %v1470
    %v1478 = vmul.f32 %v89, %v1470
    %s1479 = scalar_lea.vmem %s1, 576
    %v1480 = vld [vmem:[%s1479] sm:$0xff]
    %v1481 = vld [vmem:[%s1479 + $0x8] sm:$0xff]
    %v1482 = vld [vmem:[%s1479 + $0x10] sm:$0xff]
    %v1483 = vld [vmem:[%s1479 + $0x18] sm:$0xff]
    %v1484 = vld [vmem:[%s1479 + $0x20] sm:$0xff]
    %v1485 = vld [vmem:[%s1479 + $0x28] sm:$0xff]
    %v1486 = vld [vmem:[%s1479 + $0x30] sm:$0xff]
    %v1487 = vld [vmem:[%s1479 + $0x38] sm:$0xff]
    %v1488 = vld [vmem:[%s1479 + $0x40] sm:$0xff]
    %v1490 = vsel %vm138, %v1480, 0
    %v1493 = vsel %vm138, %v1481, 0
    %v1496 = vsel %vm138, %v1482, 0
    %v1499 = vsel %vm138, %v1483, 0
    %v1502 = vsel %vm138, %v1484, 0
    %v1505 = vsel %vm138, %v1485, 0
    %v1508 = vsel %vm138, %v1486, 0
    %v1511 = vsel %vm138, %v1487, 0
    %v1514 = vsel %vm138, %v1488, 0
    %v1517 = vsel %vm166, %v1478, 0
    %1519 = vmatprep.subr.mxu0 0.0
    %1520 = vmatpush1.msra.mxu0 %v1472
    %1521 = vmatprep.subr.mxu0 0.0
    %1522 = vmatpush1.msra.mxu0 %v1473
    %1523 = vmatprep.subr.mxu0 0.0
    %1524 = vmatpush1.msra.mxu0 %v1474
    %1525 = vmatprep.subr.mxu0 0.0
    %1526 = vmatpush1.msra.mxu0 %v1475
    %1527 = vmatprep.subr.mxu0 0.0
    %1528 = vmatpush1.msra.mxu0 %v1476
    %1529 = vmatprep.subr.mxu0 0.0
    %1530 = vmatpush1.msra.mxu0 %v1477
    %1531 = vmatprep.subr.mxu0 0.0
    %1532 = vmatpush1.msra.mxu0 %v1517
    %1533 = vmatprep.subr.mxu0 0.0
    %1534 = vmatpush1.msra.mxu0 0.0
    %1535 = vmatprep.subr.mxu0 0.0
    %1536 = vmatpush1.msra.mxu0 0.0
    %1537 = vmatprep.subr.mxu0 0.0
    %1538 = vmatpush1.msra.mxu0 0.0
    %1539 = vmatprep.subr.mxu0 0.0
    %1540 = vmatpush1.msra.mxu0 0.0
    %1541 = vmatprep.subr.mxu0 0.0
    %1542 = vmatpush1.msra.mxu0 0.0
    %1543 = vmatprep.subr.mxu0 0.0
    %1544 = vmatpush1.msra.mxu0 0.0
    %1545 = vmatprep.subr.mxu0 0.0
    %1546 = vmatpush1.msra.mxu0 0.0
    %1547 = vmatprep.subr.mxu0 0.0
    %1548 = vmatpush1.msra.mxu0 0.0
    %1549 = vmatprep.subr.mxu0 0.0
    %1550 = vmatpush1.msra.mxu0 0.0
    %1551 = vmatprep.subr.mxu0 0.0
    %1552 = vmatpush1.msra.mxu0 0.0
    %1553 = vmatprep.subr.mxu0 0.0
    %1554 = vmatpush1.msra.mxu0 0.0
    %1555 = vmatprep.subr.mxu0 0.0
    %1556 = vmatpush1.msra.mxu0 0.0
    %1557 = vmatprep.subr.mxu0 0.0
    %1558 = vmatpush1.msra.mxu0 0.0
    %1559 = vmatprep.subr.mxu0 0.0
    %1560 = vmatpush1.msra.mxu0 0.0
    %1561 = vmatprep.subr.mxu0 0.0
    %1562 = vmatpush1.msra.mxu0 0.0
    %1563 = vmatprep.subr.mxu0 0.0
    %1564 = vmatpush1.msra.mxu0 0.0
    %1565 = vmatprep.subr.mxu0 0.0
    %1566 = vmatpush1.msra.mxu0 0.0
    %1567 = vmatprep.subr.mxu0 0.0
    %1568 = vmatpush1.msra.mxu0 0.0
    %1569 = vmatprep.subr.mxu0 0.0
    %1570 = vmatpush1.msra.mxu0 0.0
    %1571 = vmatprep.subr.mxu0 0.0
    %1572 = vmatpush1.msra.mxu0 0.0
    %1573 = vmatprep.subr.mxu0 0.0
    %1574 = vmatpush1.msra.mxu0 0.0
    %1575 = vmatprep.subr.mxu0 0.0
    %1576 = vmatpush1.msra.mxu0 0.0
    %1577 = vmatprep.subr.mxu0 0.0
    %1578 = vmatpush1.msra.mxu0 0.0
    %1579 = vmatprep.subr.mxu0 0.0
    %1580 = vmatpush1.msra.mxu0 0.0
    %1581 = vmatprep.subr.mxu0 0.0
    %1582 = vmatpush1.msra.mxu0 0.0
    %1583 = vmatprep.mubr.f32.mxu0 0.0
    %1584 = vmatmul.mubr.f32.gmra.mrb[0].mxu0 %v1490
    %v1585 = vpop.f32.mrb[0].mxu0
    %v1586 = vadd.f32 0.0, %v1585
    %v1587 = vpop.f32.mrb[0].mxu0
    %1588 = vmatprep.mubr.f32.mxu0 0.0
    %1589 = vmatmul.mubr.f32.gmra.mrb[0].mxu0 %v1493
    %v1590 = vpop.f32.mrb[0].mxu0
    %v1591 = vadd.f32 0.0, %v1590
    %v1592 = vpop.f32.mrb[0].mxu0
    %1593 = vmatprep.mubr.f32.mxu0 0.0
    %1594 = vmatmul.mubr.f32.gmra.mrb[0].mxu0 %v1496
    %v1595 = vpop.f32.mrb[0].mxu0
    %v1596 = vadd.f32 0.0, %v1595
    %v1597 = vpop.f32.mrb[0].mxu0
    %1598 = vmatprep.mubr.f32.mxu0 0.0
    %1599 = vmatmul.mubr.f32.gmra.mrb[0].mxu0 %v1499
    %v1600 = vpop.f32.mrb[0].mxu0
    %v1601 = vadd.f32 0.0, %v1600
    %v1602 = vpop.f32.mrb[0].mxu0
    %1603 = vmatprep.mubr.f32.mxu0 0.0
    %1604 = vmatmul.mubr.f32.gmra.mrb[0].mxu0 %v1502
    %v1605 = vpop.f32.mrb[0].mxu0
    %v1606 = vadd.f32 0.0, %v1605
    %v1607 = vpop.f32.mrb[0].mxu0
    %1608 = vmatprep.mubr.f32.mxu0 0.0
    %1609 = vmatmul.mubr.f32.gmra.mrb[0].mxu0 %v1505
    %v1610 = vpop.f32.mrb[0].mxu0
    %v1611 = vadd.f32 0.0, %v1610
    %v1612 = vpop.f32.mrb[0].mxu0
    %1613 = vmatprep.mubr.f32.mxu0 0.0
    %1614 = vmatmul.mubr.f32.gmra.mrb[0].mxu0 %v1508
    %v1615 = vpop.f32.mrb[0].mxu0
    %v1616 = vadd.f32 0.0, %v1615
    %v1617 = vpop.f32.mrb[0].mxu0
    %1618 = vmatprep.mubr.f32.mxu0 0.0
    %1619 = vmatmul.mubr.f32.gmra.mrb[0].mxu0 %v1511
    %v1620 = vpop.f32.mrb[0].mxu0
    %v1621 = vadd.f32 0.0, %v1620
    %v1622 = vpop.f32.mrb[0].mxu0
    %1623 = vmatprep.mubr.f32.mxu0 0.0
    %1624 = vmatmul.mubr.f32.gmra.mrb[0].mxu0 %v1514
    %v1625 = vpop.f32.mrb[0].mxu0
    %v1626 = vadd.f32 0.0, %v1625
    %v1627 = vpop.f32.mrb[0].mxu0
    %1628 = vdwg.mxu0
    %v1629 = vadd.f32 %v1455, %v1586
    %v1630 = vadd.f32 %v1456, %v1591
    %v1631 = vadd.f32 %v1457, %v1596
    %v1632 = vadd.f32 %v1458, %v1601
    %v1633 = vadd.f32 %v1459, %v1606
    %v1634 = vadd.f32 %v1460, %v1611
    %v1635 = vadd.f32 %v1461, %v1616
    %v1636 = vadd.f32 %v1462, %v1621
    %v1637 = vadd.f32 %v1463, %v1626
    %v1638 = vld [vmem:[%s3] sm:$0x1]
    %v1640 = vlaneseq
    %v1641 = vshrl.u32 %v1640, 7
    %v1642 = vsub.s32 0, %v1641
    %v1643 = vrot.slane %v1638, %v1642
    %v1645 = vadd.f32 %v1629, %v1643
    %v1646 = vadd.f32 %v1630, %v1643
    %v1647 = vadd.f32 %v1631, %v1643
    %v1648 = vadd.f32 %v1632, %v1643
    %v1649 = vadd.f32 %v1633, %v1643
    %v1650 = vadd.f32 %v1634, %v1643
    %v1651 = vadd.f32 %v1635, %v1643
    %v1652 = vadd.f32 %v1636, %v1643
    %v1653 = vadd.f32 %v1637, %v1643
    %v1654 = vmax.f32 %v1645, 0.0
    %v1655 = vmax.f32 %v1646, 0.0
    %v1656 = vmax.f32 %v1647, 0.0
    %v1657 = vmax.f32 %v1648, 0.0
    %v1658 = vmax.f32 %v1649, 0.0
    %v1659 = vmax.f32 %v1650, 0.0
    %v1660 = vmax.f32 %v1651, 0.0
    %v1661 = vmax.f32 %v1652, 0.0
    %v1662 = vmax.f32 %v1653, 0.0
    %v1663 = vld [vmem:[%s4] sm:$0xff]
    %v1664 = vld [vmem:[%s4 + $0x8] sm:$0xff]
    %v1665 = vld [vmem:[%s4 + $0x10] sm:$0x3]
    %vm1666 = vcmask 588800
    %v1668 = vsel %vm1666, %v1663, 0
    %v1671 = vsel %vm1666, %v1664, 0
    %v1674 = vsel %vm1666, %v1665, 0
    %1676 = vmatprep.subr.mxu0 0.0
    %1677 = vmatpush1.msra.mxu0 %v1654
    %1678 = vmatprep.subr.mxu0 0.0
    %1679 = vmatpush1.msra.mxu0 %v1655
    %1680 = vmatprep.subr.mxu0 0.0
    %1681 = vmatpush1.msra.mxu0 %v1656
    %1682 = vmatprep.subr.mxu0 0.0
    %1683 = vmatpush1.msra.mxu0 %v1657
    %1684 = vmatprep.subr.mxu0 0.0
    %1685 = vmatpush1.msra.mxu0 %v1658
    %1686 = vmatprep.subr.mxu0 0.0
    %1687 = vmatpush1.msra.mxu0 %v1659
    %1688 = vmatprep.subr.mxu0 0.0
    %1689 = vmatpush1.msra.mxu0 %v1660
    %1690 = vmatprep.subr.mxu0 0.0
    %1691 = vmatpush1.msra.mxu0 %v1661
    %1692 = vmatprep.subr.mxu0 0.0
    %1693 = vmatpush1.msra.mxu0 %v1662
    %1694 = vmatprep.subr.mxu0 0.0
    %1695 = vmatpush1.msra.mxu0 0.0
    %1696 = vmatprep.subr.mxu0 0.0
    %1697 = vmatpush1.msra.mxu0 0.0
    %1698 = vmatprep.subr.mxu0 0.0
    %1699 = vmatpush1.msra.mxu0 0.0
    %1700 = vmatprep.subr.mxu0 0.0
    %1701 = vmatpush1.msra.mxu0 0.0
    %1702 = vmatprep.subr.mxu0 0.0
    %1703 = vmatpush1.msra.mxu0 0.0
    %1704 = vmatprep.subr.mxu0 0.0
    %1705 = vmatpush1.msra.mxu0 0.0
    %1706 = vmatprep.subr.mxu0 0.0
    %1707 = vmatpush1.msra.mxu0 0.0
    %1708 = vmatprep.subr.mxu0 0.0
    %1709 = vmatpush1.msra.mxu0 0.0
    %1710 = vmatprep.subr.mxu0 0.0
    %1711 = vmatpush1.msra.mxu0 0.0
    %1712 = vmatprep.subr.mxu0 0.0
    %1713 = vmatpush1.msra.mxu0 0.0
    %1714 = vmatprep.subr.mxu0 0.0
    %1715 = vmatpush1.msra.mxu0 0.0
    %1716 = vmatprep.subr.mxu0 0.0
    %1717 = vmatpush1.msra.mxu0 0.0
    %1718 = vmatprep.subr.mxu0 0.0
    %1719 = vmatpush1.msra.mxu0 0.0
    %1720 = vmatprep.subr.mxu0 0.0
    %1721 = vmatpush1.msra.mxu0 0.0
    %1722 = vmatprep.subr.mxu0 0.0
    %1723 = vmatpush1.msra.mxu0 0.0
    %1724 = vmatprep.subr.mxu0 0.0
    %1725 = vmatpush1.msra.mxu0 0.0
    %1726 = vmatprep.subr.mxu0 0.0
    %1727 = vmatpush1.msra.mxu0 0.0
    %1728 = vmatprep.subr.mxu0 0.0
    %1729 = vmatpush1.msra.mxu0 0.0
    %1730 = vmatprep.subr.mxu0 0.0
    %1731 = vmatpush1.msra.mxu0 0.0
    %1732 = vmatprep.subr.mxu0 0.0
    %1733 = vmatpush1.msra.mxu0 0.0
    %1734 = vmatprep.subr.mxu0 0.0
    %1735 = vmatpush1.msra.mxu0 0.0
    %1736 = vmatprep.subr.mxu0 0.0
    %1737 = vmatpush1.msra.mxu0 0.0
    %1738 = vmatprep.subr.mxu0 0.0
    %1739 = vmatpush1.msra.mxu0 0.0
    %1740 = vmatprep.mubr.f32.mxu0 0.0
    %1741 = vmatmul.mubr.f32.gmra.mrb[0].mxu0 %v1668
    %v1742 = vpop.f32.mrb[0].mxu0
    %v1743 = vadd.f32 0.0, %v1742
    %v1744 = vpop.f32.mrb[0].mxu0
    %1745 = vmatprep.mubr.f32.mxu0 0.0
    %1746 = vmatmul.mubr.f32.gmra.mrb[0].mxu0 %v1671
    %v1747 = vpop.f32.mrb[0].mxu0
    %v1748 = vadd.f32 0.0, %v1747
    %v1749 = vpop.f32.mrb[0].mxu0
    %1750 = vmatprep.mubr.f32.mxu0 0.0
    %1751 = vmatmul.mubr.f32.gmra.mrb[0].mxu0 %v1674
    %v1752 = vpop.f32.mrb[0].mxu0
    %v1753 = vadd.f32 0.0, %v1752
    %v1754 = vpop.f32.mrb[0].mxu0
    %1755 = vdwg.mxu0
    %s1756 = scalar_lea.vmem %s4, 24
    %v1757 = vld [vmem:[%s1756] sm:$0xff]
    %v1758 = vld [vmem:[%s1756 + $0x8] sm:$0xff]
    %v1759 = vld [vmem:[%s1756 + $0x10] sm:$0x3]
    %v1761 = vsel %vm1666, %v1757, 0
    %v1764 = vsel %vm1666, %v1758, 0
    %v1767 = vsel %vm1666, %v1759, 0
    %1769 = vmatprep.subr.mxu0 0.0
    %1770 = vmatpush1.msra.mxu0 %v1654
    %1771 = vmatprep.subr.mxu0 0.0
    %1772 = vmatpush1.msra.mxu0 %v1655
    %1773 = vmatprep.subr.mxu0 0.0
    %1774 = vmatpush1.msra.mxu0 %v1656
    %1775 = vmatprep.subr.mxu0 0.0
    %1776 = vmatpush1.msra.mxu0 %v1657
    %1777 = vmatprep.subr.mxu0 0.0
    %1778 = vmatpush1.msra.mxu0 %v1658
    %1779 = vmatprep.subr.mxu0 0.0
    %1780 = vmatpush1.msra.mxu0 %v1659
    %1781 = vmatprep.subr.mxu0 0.0
    %1782 = vmatpush1.msra.mxu0 %v1660
    %1783 = vmatprep.subr.mxu0 0.0
    %1784 = vmatpush1.msra.mxu0 %v1661
    %1785 = vmatprep.subr.mxu0 0.0
    %1786 = vmatpush1.msra.mxu0 %v1662
    %1787 = vmatprep.subr.mxu0 0.0
    %1788 = vmatpush1.msra.mxu0 0.0
    %1789 = vmatprep.subr.mxu0 0.0
    %1790 = vmatpush1.msra.mxu0 0.0
    %1791 = vmatprep.subr.mxu0 0.0
    %1792 = vmatpush1.msra.mxu0 0.0
    %1793 = vmatprep.subr.mxu0 0.0
    %1794 = vmatpush1.msra.mxu0 0.0
    %1795 = vmatprep.subr.mxu0 0.0
    %1796 = vmatpush1.msra.mxu0 0.0
    %1797 = vmatprep.subr.mxu0 0.0
    %1798 = vmatpush1.msra.mxu0 0.0
    %1799 = vmatprep.subr.mxu0 0.0
    %1800 = vmatpush1.msra.mxu0 0.0
    %1801 = vmatprep.subr.mxu0 0.0
    %1802 = vmatpush1.msra.mxu0 0.0
    %1803 = vmatprep.subr.mxu0 0.0
    %1804 = vmatpush1.msra.mxu0 0.0
    %1805 = vmatprep.subr.mxu0 0.0
    %1806 = vmatpush1.msra.mxu0 0.0
    %1807 = vmatprep.subr.mxu0 0.0
    %1808 = vmatpush1.msra.mxu0 0.0
    %1809 = vmatprep.subr.mxu0 0.0
    %1810 = vmatpush1.msra.mxu0 0.0
    %1811 = vmatprep.subr.mxu0 0.0
    %1812 = vmatpush1.msra.mxu0 0.0
    %1813 = vmatprep.subr.mxu0 0.0
    %1814 = vmatpush1.msra.mxu0 0.0
    %1815 = vmatprep.subr.mxu0 0.0
    %1816 = vmatpush1.msra.mxu0 0.0
    %1817 = vmatprep.subr.mxu0 0.0
    %1818 = vmatpush1.msra.mxu0 0.0
    %1819 = vmatprep.subr.mxu0 0.0
    %1820 = vmatpush1.msra.mxu0 0.0
    %1821 = vmatprep.subr.mxu0 0.0
    %1822 = vmatpush1.msra.mxu0 0.0
    %1823 = vmatprep.subr.mxu0 0.0
    %1824 = vmatpush1.msra.mxu0 0.0
    %1825 = vmatprep.subr.mxu0 0.0
    %1826 = vmatpush1.msra.mxu0 0.0
    %1827 = vmatprep.subr.mxu0 0.0
    %1828 = vmatpush1.msra.mxu0 0.0
    %1829 = vmatprep.subr.mxu0 0.0
    %1830 = vmatpush1.msra.mxu0 0.0
    %1831 = vmatprep.subr.mxu0 0.0
    %1832 = vmatpush1.msra.mxu0 0.0
    %1833 = vmatprep.mubr.f32.mxu0 0.0
    %1834 = vmatmul.mubr.f32.gmra.mrb[0].mxu0 %v1761
    %v1835 = vpop.f32.mrb[0].mxu0
    %v1836 = vadd.f32 0.0, %v1835
    %v1837 = vpop.f32.mrb[0].mxu0
    %1838 = vmatprep.mubr.f32.mxu0 0.0
    %1839 = vmatmul.mubr.f32.gmra.mrb[0].mxu0 %v1764
    %v1840 = vpop.f32.mrb[0].mxu0
    %v1841 = vadd.f32 0.0, %v1840
    %v1842 = vpop.f32.mrb[0].mxu0
    %1843 = vmatprep.mubr.f32.mxu0 0.0
    %1844 = vmatmul.mubr.f32.gmra.mrb[0].mxu0 %v1767
    %v1845 = vpop.f32.mrb[0].mxu0
    %v1846 = vadd.f32 0.0, %v1845
    %v1847 = vpop.f32.mrb[0].mxu0
    %1848 = vdwg.mxu0
    %v1849 = vmax.f32 %v1743, %v1836
    %v1850 = vmax.f32 %v1748, %v1841
    %v1851 = vmax.f32 %v1753, %v1846
    %s1852 = scalar_lea.vmem %s4, 48
    %v1853 = vld [vmem:[%s1852] sm:$0xff]
    %v1854 = vld [vmem:[%s1852 + $0x8] sm:$0xff]
    %v1855 = vld [vmem:[%s1852 + $0x10] sm:$0x3]
    %v1857 = vsel %vm1666, %v1853, 0
    %v1860 = vsel %vm1666, %v1854, 0
    %v1863 = vsel %vm1666, %v1855, 0
    %1865 = vmatprep.subr.mxu0 0.0
    %1866 = vmatpush1.msra.mxu0 %v1654
    %1867 = vmatprep.subr.mxu0 0.0
    %1868 = vmatpush1.msra.mxu0 %v1655
    %1869 = vmatprep.subr.mxu0 0.0
    %1870 = vmatpush1.msra.mxu0 %v1656
    %1871 = vmatprep.subr.mxu0 0.0
    %1872 = vmatpush1.msra.mxu0 %v1657
    %1873 = vmatprep.subr.mxu0 0.0
    %1874 = vmatpush1.msra.mxu0 %v1658
    %1875 = vmatprep.subr.mxu0 0.0
    %1876 = vmatpush1.msra.mxu0 %v1659
    %1877 = vmatprep.subr.mxu0 0.0
    %1878 = vmatpush1.msra.mxu0 %v1660
    %1879 = vmatprep.subr.mxu0 0.0
    %1880 = vmatpush1.msra.mxu0 %v1661
    %1881 = vmatprep.subr.mxu0 0.0
    %1882 = vmatpush1.msra.mxu0 %v1662
    %1883 = vmatprep.subr.mxu0 0.0
    %1884 = vmatpush1.msra.mxu0 0.0
    %1885 = vmatprep.subr.mxu0 0.0
    %1886 = vmatpush1.msra.mxu0 0.0
    %1887 = vmatprep.subr.mxu0 0.0
    %1888 = vmatpush1.msra.mxu0 0.0
    %1889 = vmatprep.subr.mxu0 0.0
    %1890 = vmatpush1.msra.mxu0 0.0
    %1891 = vmatprep.subr.mxu0 0.0
    %1892 = vmatpush1.msra.mxu0 0.0
    %1893 = vmatprep.subr.mxu0 0.0
    %1894 = vmatpush1.msra.mxu0 0.0
    %1895 = vmatprep.subr.mxu0 0.0
    %1896 = vmatpush1.msra.mxu0 0.0
    %1897 = vmatprep.subr.mxu0 0.0
    %1898 = vmatpush1.msra.mxu0 0.0
    %1899 = vmatprep.subr.mxu0 0.0
    %1900 = vmatpush1.msra.mxu0 0.0
    %1901 = vmatprep.subr.mxu0 0.0
    %1902 = vmatpush1.msra.mxu0 0.0
    %1903 = vmatprep.subr.mxu0 0.0
    %1904 = vmatpush1.msra.mxu0 0.0
    %1905 = vmatprep.subr.mxu0 0.0
    %1906 = vmatpush1.msra.mxu0 0.0
    %1907 = vmatprep.subr.mxu0 0.0
    %1908 = vmatpush1.msra.mxu0 0.0
    %1909 = vmatprep.subr.mxu0 0.0
    %1910 = vmatpush1.msra.mxu0 0.0
    %1911 = vmatprep.subr.mxu0 0.0
    %1912 = vmatpush1.msra.mxu0 0.0
    %1913 = vmatprep.subr.mxu0 0.0
    %1914 = vmatpush1.msra.mxu0 0.0
    %1915 = vmatprep.subr.mxu0 0.0
    %1916 = vmatpush1.msra.mxu0 0.0
    %1917 = vmatprep.subr.mxu0 0.0
    %1918 = vmatpush1.msra.mxu0 0.0
    %1919 = vmatprep.subr.mxu0 0.0
    %1920 = vmatpush1.msra.mxu0 0.0
    %1921 = vmatprep.subr.mxu0 0.0
    %1922 = vmatpush1.msra.mxu0 0.0
    %1923 = vmatprep.subr.mxu0 0.0
    %1924 = vmatpush1.msra.mxu0 0.0
    %1925 = vmatprep.subr.mxu0 0.0
    %1926 = vmatpush1.msra.mxu0 0.0
    %1927 = vmatprep.subr.mxu0 0.0
    %1928 = vmatpush1.msra.mxu0 0.0
    %1929 = vmatprep.mubr.f32.mxu0 0.0
    %1930 = vmatmul.mubr.f32.gmra.mrb[0].mxu0 %v1857
    %v1931 = vpop.f32.mrb[0].mxu0
    %v1932 = vadd.f32 0.0, %v1931
    %v1933 = vpop.f32.mrb[0].mxu0
    %1934 = vmatprep.mubr.f32.mxu0 0.0
    %1935 = vmatmul.mubr.f32.gmra.mrb[0].mxu0 %v1860
    %v1936 = vpop.f32.mrb[0].mxu0
    %v1937 = vadd.f32 0.0, %v1936
    %v1938 = vpop.f32.mrb[0].mxu0
    %1939 = vmatprep.mubr.f32.mxu0 0.0
    %1940 = vmatmul.mubr.f32.gmra.mrb[0].mxu0 %v1863
    %v1941 = vpop.f32.mrb[0].mxu0
    %v1942 = vadd.f32 0.0, %v1941
    %v1943 = vpop.f32.mrb[0].mxu0
    %1944 = vdwg.mxu0
    %v1945 = vmax.f32 %v1849, %v1932
    %v1946 = vmax.f32 %v1850, %v1937
    %v1947 = vmax.f32 %v1851, %v1942
    %s1948 = scalar_lea.vmem %s4, 72
    %v1949 = vld [vmem:[%s1948] sm:$0xff]
    %v1950 = vld [vmem:[%s1948 + $0x8] sm:$0xff]
    %v1951 = vld [vmem:[%s1948 + $0x10] sm:$0x3]
    %v1953 = vsel %vm1666, %v1949, 0
    %v1956 = vsel %vm1666, %v1950, 0
    %v1959 = vsel %vm1666, %v1951, 0
    %1961 = vmatprep.subr.mxu0 0.0
    %1962 = vmatpush1.msra.mxu0 %v1654
    %1963 = vmatprep.subr.mxu0 0.0
    %1964 = vmatpush1.msra.mxu0 %v1655
    %1965 = vmatprep.subr.mxu0 0.0
    %1966 = vmatpush1.msra.mxu0 %v1656
    %1967 = vmatprep.subr.mxu0 0.0
    %1968 = vmatpush1.msra.mxu0 %v1657
    %1969 = vmatprep.subr.mxu0 0.0
    %1970 = vmatpush1.msra.mxu0 %v1658
    %1971 = vmatprep.subr.mxu0 0.0
    %1972 = vmatpush1.msra.mxu0 %v1659
    %1973 = vmatprep.subr.mxu0 0.0
    %1974 = vmatpush1.msra.mxu0 %v1660
    %1975 = vmatprep.subr.mxu0 0.0
    %1976 = vmatpush1.msra.mxu0 %v1661
    %1977 = vmatprep.subr.mxu0 0.0
    %1978 = vmatpush1.msra.mxu0 %v1662
    %1979 = vmatprep.subr.mxu0 0.0
    %1980 = vmatpush1.msra.mxu0 0.0
    %1981 = vmatprep.subr.mxu0 0.0
    %1982 = vmatpush1.msra.mxu0 0.0
    %1983 = vmatprep.subr.mxu0 0.0
    %1984 = vmatpush1.msra.mxu0 0.0
    %1985 = vmatprep.subr.mxu0 0.0
    %1986 = vmatpush1.msra.mxu0 0.0
    %1987 = vmatprep.subr.mxu0 0.0
    %1988 = vmatpush1.msra.mxu0 0.0
    %1989 = vmatprep.subr.mxu0 0.0
    %1990 = vmatpush1.msra.mxu0 0.0
    %1991 = vmatprep.subr.mxu0 0.0
    %1992 = vmatpush1.msra.mxu0 0.0
    %1993 = vmatprep.subr.mxu0 0.0
    %1994 = vmatpush1.msra.mxu0 0.0
    %1995 = vmatprep.subr.mxu0 0.0
    %1996 = vmatpush1.msra.mxu0 0.0
    %1997 = vmatprep.subr.mxu0 0.0
    %1998 = vmatpush1.msra.mxu0 0.0
    %1999 = vmatprep.subr.mxu0 0.0
    %2000 = vmatpush1.msra.mxu0 0.0
    %2001 = vmatprep.subr.mxu0 0.0
    %2002 = vmatpush1.msra.mxu0 0.0
    %2003 = vmatprep.subr.mxu0 0.0
    %2004 = vmatpush1.msra.mxu0 0.0
    %2005 = vmatprep.subr.mxu0 0.0
    %2006 = vmatpush1.msra.mxu0 0.0
    %2007 = vmatprep.subr.mxu0 0.0
    %2008 = vmatpush1.msra.mxu0 0.0
    %2009 = vmatprep.subr.mxu0 0.0
    %2010 = vmatpush1.msra.mxu0 0.0
    %2011 = vmatprep.subr.mxu0 0.0
    %2012 = vmatpush1.msra.mxu0 0.0
    %2013 = vmatprep.subr.mxu0 0.0
    %2014 = vmatpush1.msra.mxu0 0.0
    %2015 = vmatprep.subr.mxu0 0.0
    %2016 = vmatpush1.msra.mxu0 0.0
    %2017 = vmatprep.subr.mxu0 0.0
    %2018 = vmatpush1.msra.mxu0 0.0
    %2019 = vmatprep.subr.mxu0 0.0
    %2020 = vmatpush1.msra.mxu0 0.0
    %2021 = vmatprep.subr.mxu0 0.0
    %2022 = vmatpush1.msra.mxu0 0.0
    %2023 = vmatprep.subr.mxu0 0.0
    %2024 = vmatpush1.msra.mxu0 0.0
    %2025 = vmatprep.mubr.f32.mxu0 0.0
    %2026 = vmatmul.mubr.f32.gmra.mrb[0].mxu0 %v1953
    %v2027 = vpop.f32.mrb[0].mxu0
    %v2028 = vadd.f32 0.0, %v2027
    %v2029 = vpop.f32.mrb[0].mxu0
    %2030 = vmatprep.mubr.f32.mxu0 0.0
    %2031 = vmatmul.mubr.f32.gmra.mrb[0].mxu0 %v1956
    %v2032 = vpop.f32.mrb[0].mxu0
    %v2033 = vadd.f32 0.0, %v2032
    %v2034 = vpop.f32.mrb[0].mxu0
    %2035 = vmatprep.mubr.f32.mxu0 0.0
    %2036 = vmatmul.mubr.f32.gmra.mrb[0].mxu0 %v1959
    %v2037 = vpop.f32.mrb[0].mxu0
    %v2038 = vadd.f32 0.0, %v2037
    %v2039 = vpop.f32.mrb[0].mxu0
    %2040 = vdwg.mxu0
    %v2041 = vmax.f32 %v1945, %v2028
    %v2042 = vmax.f32 %v1946, %v2033
    %v2043 = vmax.f32 %v1947, %v2038
    %v2044 = vld [vmem:[%s6] sm:$0xff]
    %v2045 = vld [vmem:[%s6 + $0x8] sm:$0xff]
    %v2046 = vld [vmem:[%s6 + $0x10] sm:$0xff]
    %v2047 = vld [vmem:[%s6 + $0x18] sm:$0xff]
    %vm2048 = vcmask 261120
    %v2050 = vsel %vm2048, %v2041, 0
    %v2053 = vsel %vm2048, %v2042, 0
    %v2056 = vsel %vm2048, %v2043, 0
    %2058 = vmatprep.subr.mxu0 0.0
    %2059 = vmatpush1.msra.mxu0 %v2044
    %2060 = vmatprep.subr.mxu0 0.0
    %2061 = vmatpush1.msra.mxu0 %v2045
    %2062 = vmatprep.subr.mxu0 0.0
    %2063 = vmatpush1.msra.mxu0 %v2046
    %2064 = vmatprep.subr.mxu0 0.0
    %2065 = vmatpush1.msra.mxu0 %v2047
    %2066 = vmatprep.subr.mxu0 0.0
    %2067 = vmatpush1.msra.mxu0 0.0
    %2068 = vmatprep.subr.mxu0 0.0
    %2069 = vmatpush1.msra.mxu0 0.0
    %2070 = vmatprep.subr.mxu0 0.0
    %2071 = vmatpush1.msra.mxu0 0.0
    %2072 = vmatprep.subr.mxu0 0.0
    %2073 = vmatpush1.msra.mxu0 0.0
    %2074 = vmatprep.subr.mxu0 0.0
    %2075 = vmatpush1.msra.mxu0 0.0
    %2076 = vmatprep.subr.mxu0 0.0
    %2077 = vmatpush1.msra.mxu0 0.0
    %2078 = vmatprep.subr.mxu0 0.0
    %2079 = vmatpush1.msra.mxu0 0.0
    %2080 = vmatprep.subr.mxu0 0.0
    %2081 = vmatpush1.msra.mxu0 0.0
    %2082 = vmatprep.subr.mxu0 0.0
    %2083 = vmatpush1.msra.mxu0 0.0
    %2084 = vmatprep.subr.mxu0 0.0
    %2085 = vmatpush1.msra.mxu0 0.0
    %2086 = vmatprep.subr.mxu0 0.0
    %2087 = vmatpush1.msra.mxu0 0.0
    %2088 = vmatprep.subr.mxu0 0.0
    %2089 = vmatpush1.msra.mxu0 0.0
    %2090 = vmatprep.subr.mxu0 0.0
    %2091 = vmatpush1.msra.mxu0 0.0
    %2092 = vmatprep.subr.mxu0 0.0
    %2093 = vmatpush1.msra.mxu0 0.0
    %2094 = vmatprep.subr.mxu0 0.0
    %2095 = vmatpush1.msra.mxu0 0.0
    %2096 = vmatprep.subr.mxu0 0.0
    %2097 = vmatpush1.msra.mxu0 0.0
    %2098 = vmatprep.subr.mxu0 0.0
    %2099 = vmatpush1.msra.mxu0 0.0
    %2100 = vmatprep.subr.mxu0 0.0
    %2101 = vmatpush1.msra.mxu0 0.0
    %2102 = vmatprep.subr.mxu0 0.0
    %2103 = vmatpush1.msra.mxu0 0.0
    %2104 = vmatprep.subr.mxu0 0.0
    %2105 = vmatpush1.msra.mxu0 0.0
    %2106 = vmatprep.subr.mxu0 0.0
    %2107 = vmatpush1.msra.mxu0 0.0
    %2108 = vmatprep.subr.mxu0 0.0
    %2109 = vmatpush1.msra.mxu0 0.0
    %2110 = vmatprep.subr.mxu0 0.0
    %2111 = vmatpush1.msra.mxu0 0.0
    %2112 = vmatprep.subr.mxu0 0.0
    %2113 = vmatpush1.msra.mxu0 0.0
    %2114 = vmatprep.subr.mxu0 0.0
    %2115 = vmatpush1.msra.mxu0 0.0
    %2116 = vmatprep.subr.mxu0 0.0
    %2117 = vmatpush1.msra.mxu0 0.0
    %2118 = vmatprep.subr.mxu0 0.0
    %2119 = vmatpush1.msra.mxu0 0.0
    %2120 = vmatprep.subr.mxu0 0.0
    %2121 = vmatpush1.msra.mxu0 0.0
    %2122 = vmatprep.mubr.f32.mxu0 0.0
    %2123 = vmatmul.mubr.f32.gmra.mrb[0].mxu0 %v2050
    %v2124 = vpop.f32.mrb[0].mxu0
    %v2125 = vadd.f32 0.0, %v2124
    %v2126 = vpop.f32.mrb[0].mxu0
    %2127 = vmatprep.mubr.f32.mxu0 0.0
    %2128 = vmatmul.mubr.f32.gmra.mrb[0].mxu0 %v2053
    %v2129 = vpop.f32.mrb[0].mxu0
    %v2130 = vadd.f32 0.0, %v2129
    %v2131 = vpop.f32.mrb[0].mxu0
    %2132 = vmatprep.mubr.f32.mxu0 0.0
    %2133 = vmatmul.mubr.f32.gmra.mrb[0].mxu0 %v2056
    %v2134 = vpop.f32.mrb[0].mxu0
    %v2135 = vadd.f32 0.0, %v2134
    %v2136 = vpop.f32.mrb[0].mxu0
    %2137 = vdwg.mxu0
    %v2138 = vld [vmem:[%s5] sm:$0xff]
    %v2139 = vld [vmem:[%s5 + $0x8] sm:$0xff]
    %v2140 = vld [vmem:[%s5 + $0x10] sm:$0xff]
    %v2141 = vld [vmem:[%s5 + $0x18] sm:$0xff]
    %s2142 = scalar_lea.vmem %s6, 32
    %v2143 = vld [vmem:[%s2142] sm:$0xff]
    %v2144 = vld [vmem:[%s2142 + $0x8] sm:$0xff]
    %v2145 = vld [vmem:[%s2142 + $0x10] sm:$0xff]
    %v2146 = vld [vmem:[%s2142 + $0x18] sm:$0xff]
    %2147 = vmatprep.subr.mxu0 0.0
    %2148 = vmatpush1.msra.mxu0 %v2143
    %2149 = vmatprep.subr.mxu0 0.0
    %2150 = vmatpush1.msra.mxu0 %v2144
    %2151 = vmatprep.subr.mxu0 0.0
    %2152 = vmatpush1.msra.mxu0 %v2145
    %2153 = vmatprep.subr.mxu0 0.0
    %2154 = vmatpush1.msra.mxu0 %v2146
    %2155 = vmatprep.subr.mxu0 0.0
    %2156 = vmatpush1.msra.mxu0 0.0
    %2157 = vmatprep.subr.mxu0 0.0
    %2158 = vmatpush1.msra.mxu0 0.0
    %2159 = vmatprep.subr.mxu0 0.0
    %2160 = vmatpush1.msra.mxu0 0.0
    %2161 = vmatprep.subr.mxu0 0.0
    %2162 = vmatpush1.msra.mxu0 0.0
    %2163 = vmatprep.subr.mxu0 0.0
    %2164 = vmatpush1.msra.mxu0 0.0
    %2165 = vmatprep.subr.mxu0 0.0
    %2166 = vmatpush1.msra.mxu0 0.0
    %2167 = vmatprep.subr.mxu0 0.0
    %2168 = vmatpush1.msra.mxu0 0.0
    %2169 = vmatprep.subr.mxu0 0.0
    %2170 = vmatpush1.msra.mxu0 0.0
    %2171 = vmatprep.subr.mxu0 0.0
    %2172 = vmatpush1.msra.mxu0 0.0
    %2173 = vmatprep.subr.mxu0 0.0
    %2174 = vmatpush1.msra.mxu0 0.0
    %2175 = vmatprep.subr.mxu0 0.0
    %2176 = vmatpush1.msra.mxu0 0.0
    %2177 = vmatprep.subr.mxu0 0.0
    %2178 = vmatpush1.msra.mxu0 0.0
    %2179 = vmatprep.subr.mxu0 0.0
    %2180 = vmatpush1.msra.mxu0 0.0
    %2181 = vmatprep.subr.mxu0 0.0
    %2182 = vmatpush1.msra.mxu0 0.0
    %2183 = vmatprep.subr.mxu0 0.0
    %2184 = vmatpush1.msra.mxu0 0.0
    %2185 = vmatprep.subr.mxu0 0.0
    %2186 = vmatpush1.msra.mxu0 0.0
    %2187 = vmatprep.subr.mxu0 0.0
    %2188 = vmatpush1.msra.mxu0 0.0
    %2189 = vmatprep.subr.mxu0 0.0
    %2190 = vmatpush1.msra.mxu0 0.0
    %2191 = vmatprep.subr.mxu0 0.0
    %2192 = vmatpush1.msra.mxu0 0.0
    %2193 = vmatprep.subr.mxu0 0.0
    %2194 = vmatpush1.msra.mxu0 0.0
    %2195 = vmatprep.subr.mxu0 0.0
    %2196 = vmatpush1.msra.mxu0 0.0
    %2197 = vmatprep.subr.mxu0 0.0
    %2198 = vmatpush1.msra.mxu0 0.0
    %2199 = vmatprep.subr.mxu0 0.0
    %2200 = vmatpush1.msra.mxu0 0.0
    %2201 = vmatprep.subr.mxu0 0.0
    %2202 = vmatpush1.msra.mxu0 0.0
    %2203 = vmatprep.subr.mxu0 0.0
    %2204 = vmatpush1.msra.mxu0 0.0
    %2205 = vmatprep.subr.mxu0 0.0
    %2206 = vmatpush1.msra.mxu0 0.0
    %2207 = vmatprep.subr.mxu0 0.0
    %2208 = vmatpush1.msra.mxu0 0.0
    %2209 = vmatprep.subr.mxu0 0.0
    %2210 = vmatpush1.msra.mxu0 0.0
    %2211 = vmatprep.mubr.f32.mxu0 0.0
    %2212 = vmatmul.mubr.f32.gmra.mrb[0].mxu0 %v2050
    %v2213 = vpop.f32.mrb[0].mxu0
    %v2214 = vadd.f32 0.0, %v2213
    %v2215 = vpop.f32.mrb[0].mxu0
    %2216 = vmatprep.mubr.f32.mxu0 0.0
    %2217 = vmatmul.mubr.f32.gmra.mrb[0].mxu0 %v2053
    %v2218 = vpop.f32.mrb[0].mxu0
    %v2219 = vadd.f32 0.0, %v2218
    %v2220 = vpop.f32.mrb[0].mxu0
    %2221 = vmatprep.mubr.f32.mxu0 0.0
    %2222 = vmatmul.mubr.f32.gmra.mrb[0].mxu0 %v2056
    %v2223 = vpop.f32.mrb[0].mxu0
    %v2224 = vadd.f32 0.0, %v2223
    %v2225 = vpop.f32.mrb[0].mxu0
    %2226 = vdwg.mxu0
    %s2227 = scalar_lea.vmem %s5, 32
    %v2228 = vld [vmem:[%s2227] sm:$0xff]
    %v2229 = vld [vmem:[%s2227 + $0x8] sm:$0xff]
    %v2230 = vld [vmem:[%s2227 + $0x10] sm:$0xff]
    %v2231 = vld [vmem:[%s2227 + $0x18] sm:$0xff]
    %vm2232 = vcmask 146432
    %v2234 = vsel %vm2232, %v2228, 0
    %v2237 = vsel %vm2232, %v2229, 0
    %v2240 = vsel %vm2232, %v2230, 0
    %v2243 = vsel %vm2232, %v2231, 0
    %v2246 = vsel %vm166, %v2224, 0
    %2248 = vmatprep.subr.mxu0 0.0
    %2249 = vmatpush1.msra.mxu0 %v2214
    %2250 = vmatprep.subr.mxu0 0.0
    %2251 = vmatpush1.msra.mxu0 %v2219
    %2252 = vmatprep.subr.mxu0 0.0
    %2253 = vmatpush1.msra.mxu0 %v2246
    %2254 = vmatprep.subr.mxu0 0.0
    %2255 = vmatpush1.msra.mxu0 0.0
    %2256 = vmatprep.subr.mxu0 0.0
    %2257 = vmatpush1.msra.mxu0 0.0
    %2258 = vmatprep.subr.mxu0 0.0
    %2259 = vmatpush1.msra.mxu0 0.0
    %2260 = vmatprep.subr.mxu0 0.0
    %2261 = vmatpush1.msra.mxu0 0.0
    %2262 = vmatprep.subr.mxu0 0.0
    %2263 = vmatpush1.msra.mxu0 0.0
    %2264 = vmatprep.subr.mxu0 0.0
    %2265 = vmatpush1.msra.mxu0 0.0
    %2266 = vmatprep.subr.mxu0 0.0
    %2267 = vmatpush1.msra.mxu0 0.0
    %2268 = vmatprep.subr.mxu0 0.0
    %2269 = vmatpush1.msra.mxu0 0.0
    %2270 = vmatprep.subr.mxu0 0.0
    %2271 = vmatpush1.msra.mxu0 0.0
    %2272 = vmatprep.subr.mxu0 0.0
    %2273 = vmatpush1.msra.mxu0 0.0
    %2274 = vmatprep.subr.mxu0 0.0
    %2275 = vmatpush1.msra.mxu0 0.0
    %2276 = vmatprep.subr.mxu0 0.0
    %2277 = vmatpush1.msra.mxu0 0.0
    %2278 = vmatprep.subr.mxu0 0.0
    %2279 = vmatpush1.msra.mxu0 0.0
    %2280 = vmatprep.subr.mxu0 0.0
    %2281 = vmatpush1.msra.mxu0 0.0
    %2282 = vmatprep.subr.mxu0 0.0
    %2283 = vmatpush1.msra.mxu0 0.0
    %2284 = vmatprep.subr.mxu0 0.0
    %2285 = vmatpush1.msra.mxu0 0.0
    %2286 = vmatprep.subr.mxu0 0.0
    %2287 = vmatpush1.msra.mxu0 0.0
    %2288 = vmatprep.subr.mxu0 0.0
    %2289 = vmatpush1.msra.mxu0 0.0
    %2290 = vmatprep.subr.mxu0 0.0
    %2291 = vmatpush1.msra.mxu0 0.0
    %2292 = vmatprep.subr.mxu0 0.0
    %2293 = vmatpush1.msra.mxu0 0.0
    %2294 = vmatprep.subr.mxu0 0.0
    %2295 = vmatpush1.msra.mxu0 0.0
    %2296 = vmatprep.subr.mxu0 0.0
    %2297 = vmatpush1.msra.mxu0 0.0
    %2298 = vmatprep.subr.mxu0 0.0
    %2299 = vmatpush1.msra.mxu0 0.0
    %2300 = vmatprep.subr.mxu0 0.0
    %2301 = vmatpush1.msra.mxu0 0.0
    %2302 = vmatprep.subr.mxu0 0.0
    %2303 = vmatpush1.msra.mxu0 0.0
    %2304 = vmatprep.subr.mxu0 0.0
    %2305 = vmatpush1.msra.mxu0 0.0
    %2306 = vmatprep.subr.mxu0 0.0
    %2307 = vmatpush1.msra.mxu0 0.0
    %2308 = vmatprep.subr.mxu0 0.0
    %2309 = vmatpush1.msra.mxu0 0.0
    %2310 = vmatprep.subr.mxu0 0.0
    %2311 = vmatpush1.msra.mxu0 0.0
    %2312 = vmatprep.mubr.f32.mxu0 0.0
    %2313 = vmatmul.mubr.f32.gmra.mrb[0].mxu0 %v2234
    %v2314 = vpop.f32.mrb[0].mxu0
    %v2315 = vadd.f32 0.0, %v2314
    %v2316 = vpop.f32.mrb[0].mxu0
    %2317 = vmatprep.mubr.f32.mxu0 0.0
    %2318 = vmatmul.mubr.f32.gmra.mrb[0].mxu0 %v2237
    %v2319 = vpop.f32.mrb[0].mxu0
    %v2320 = vadd.f32 0.0, %v2319
    %v2321 = vpop.f32.mrb[0].mxu0
    %2322 = vmatprep.mubr.f32.mxu0 0.0
    %2323 = vmatmul.mubr.f32.gmra.mrb[0].mxu0 %v2240
    %v2324 = vpop.f32.mrb[0].mxu0
    %v2325 = vadd.f32 0.0, %v2324
    %v2326 = vpop.f32.mrb[0].mxu0
    %2327 = vmatprep.mubr.f32.mxu0 0.0
    %2328 = vmatmul.mubr.f32.gmra.mrb[0].mxu0 %v2243
    %v2329 = vpop.f32.mrb[0].mxu0
    %v2330 = vadd.f32 0.0, %v2329
    %v2331 = vpop.f32.mrb[0].mxu0
    %2332 = vdwg.mxu0
    %v2334 = vsel %vm2232, %v2138, 0
    %v2337 = vsel %vm2232, %v2139, 0
    %v2340 = vsel %vm2232, %v2140, 0
    %v2343 = vsel %vm2232, %v2141, 0
    %v2346 = vsel %vm166, %v2135, 0
    %2348 = vmatprep.subr.mxu0 0.0
    %2349 = vmatpush1.msra.mxu0 %v2125
    %2350 = vmatprep.subr.mxu0 0.0
    %2351 = vmatpush1.msra.mxu0 %v2130
    %2352 = vmatprep.subr.mxu0 0.0
    %2353 = vmatpush1.msra.mxu0 %v2346
    %2354 = vmatprep.subr.mxu0 0.0
    %2355 = vmatpush1.msra.mxu0 0.0
    %2356 = vmatprep.subr.mxu0 0.0
    %2357 = vmatpush1.msra.mxu0 0.0
    %2358 = vmatprep.subr.mxu0 0.0
    %2359 = vmatpush1.msra.mxu0 0.0
    %2360 = vmatprep.subr.mxu0 0.0
    %2361 = vmatpush1.msra.mxu0 0.0
    %2362 = vmatprep.subr.mxu0 0.0
    %2363 = vmatpush1.msra.mxu0 0.0
    %2364 = vmatprep.subr.mxu0 0.0
    %2365 = vmatpush1.msra.mxu0 0.0
    %2366 = vmatprep.subr.mxu0 0.0
    %2367 = vmatpush1.msra.mxu0 0.0
    %2368 = vmatprep.subr.mxu0 0.0
    %2369 = vmatpush1.msra.mxu0 0.0
    %2370 = vmatprep.subr.mxu0 0.0
    %2371 = vmatpush1.msra.mxu0 0.0
    %2372 = vmatprep.subr.mxu0 0.0
    %2373 = vmatpush1.msra.mxu0 0.0
    %2374 = vmatprep.subr.mxu0 0.0
    %2375 = vmatpush1.msra.mxu0 0.0
    %2376 = vmatprep.subr.mxu0 0.0
    %2377 = vmatpush1.msra.mxu0 0.0
    %2378 = vmatprep.subr.mxu0 0.0
    %2379 = vmatpush1.msra.mxu0 0.0
    %2380 = vmatprep.subr.mxu0 0.0
    %2381 = vmatpush1.msra.mxu0 0.0
    %2382 = vmatprep.subr.mxu0 0.0
    %2383 = vmatpush1.msra.mxu0 0.0
    %2384 = vmatprep.subr.mxu0 0.0
    %2385 = vmatpush1.msra.mxu0 0.0
    %2386 = vmatprep.subr.mxu0 0.0
    %2387 = vmatpush1.msra.mxu0 0.0
    %2388 = vmatprep.subr.mxu0 0.0
    %2389 = vmatpush1.msra.mxu0 0.0
    %2390 = vmatprep.subr.mxu0 0.0
    %2391 = vmatpush1.msra.mxu0 0.0
    %2392 = vmatprep.subr.mxu0 0.0
    %2393 = vmatpush1.msra.mxu0 0.0
    %2394 = vmatprep.subr.mxu0 0.0
    %2395 = vmatpush1.msra.mxu0 0.0
    %2396 = vmatprep.subr.mxu0 0.0
    %2397 = vmatpush1.msra.mxu0 0.0
    %2398 = vmatprep.subr.mxu0 0.0
    %2399 = vmatpush1.msra.mxu0 0.0
    %2400 = vmatprep.subr.mxu0 0.0
    %2401 = vmatpush1.msra.mxu0 0.0
    %2402 = vmatprep.subr.mxu0 0.0
    %2403 = vmatpush1.msra.mxu0 0.0
    %2404 = vmatprep.subr.mxu0 0.0
    %2405 = vmatpush1.msra.mxu0 0.0
    %2406 = vmatprep.subr.mxu0 0.0
    %2407 = vmatpush1.msra.mxu0 0.0
    %2408 = vmatprep.subr.mxu0 0.0
    %2409 = vmatpush1.msra.mxu0 0.0
    %2410 = vmatprep.subr.mxu0 0.0
    %2411 = vmatpush1.msra.mxu0 0.0
    %2412 = vmatprep.mubr.f32.mxu0 0.0
    %2413 = vmatmul.mubr.f32.gmra.mrb[0].mxu0 %v2334
    %v2414 = vpop.f32.mrb[0].mxu0
    %v2415 = vadd.f32 %v2315, %v2414
    %v2416 = vpop.f32.mrb[0].mxu0
    %2417 = vmatprep.mubr.f32.mxu0 0.0
    %2418 = vmatmul.mubr.f32.gmra.mrb[0].mxu0 %v2337
    %v2419 = vpop.f32.mrb[0].mxu0
    %v2420 = vadd.f32 %v2320, %v2419
    %v2421 = vpop.f32.mrb[0].mxu0
    %2422 = vmatprep.mubr.f32.mxu0 0.0
    %2423 = vmatmul.mubr.f32.gmra.mrb[0].mxu0 %v2340
    %v2424 = vpop.f32.mrb[0].mxu0
    %v2425 = vadd.f32 %v2325, %v2424
    %v2426 = vpop.f32.mrb[0].mxu0
    %2427 = vmatprep.mubr.f32.mxu0 0.0
    %2428 = vmatmul.mubr.f32.gmra.mrb[0].mxu0 %v2343
    %v2429 = vpop.f32.mrb[0].mxu0
    %v2430 = vadd.f32 %v2330, %v2429
    %v2431 = vpop.f32.mrb[0].mxu0
    %2432 = vdwg.mxu0
    %s2433 = scalar_lea.vmem %s6, 64
    %v2434 = vld [vmem:[%s2433] sm:$0xff]
    %v2435 = vld [vmem:[%s2433 + $0x8] sm:$0xff]
    %v2436 = vld [vmem:[%s2433 + $0x10] sm:$0xff]
    %v2437 = vld [vmem:[%s2433 + $0x18] sm:$0xff]
    %2438 = vmatprep.subr.mxu0 0.0
    %2439 = vmatpush1.msra.mxu0 %v2434
    %2440 = vmatprep.subr.mxu0 0.0
    %2441 = vmatpush1.msra.mxu0 %v2435
    %2442 = vmatprep.subr.mxu0 0.0
    %2443 = vmatpush1.msra.mxu0 %v2436
    %2444 = vmatprep.subr.mxu0 0.0
    %2445 = vmatpush1.msra.mxu0 %v2437
    %2446 = vmatprep.subr.mxu0 0.0
    %2447 = vmatpush1.msra.mxu0 0.0
    %2448 = vmatprep.subr.mxu0 0.0
    %2449 = vmatpush1.msra.mxu0 0.0
    %2450 = vmatprep.subr.mxu0 0.0
    %2451 = vmatpush1.msra.mxu0 0.0
    %2452 = vmatprep.subr.mxu0 0.0
    %2453 = vmatpush1.msra.mxu0 0.0
    %2454 = vmatprep.subr.mxu0 0.0
    %2455 = vmatpush1.msra.mxu0 0.0
    %2456 = vmatprep.subr.mxu0 0.0
    %2457 = vmatpush1.msra.mxu0 0.0
    %2458 = vmatprep.subr.mxu0 0.0
    %2459 = vmatpush1.msra.mxu0 0.0
    %2460 = vmatprep.subr.mxu0 0.0
    %2461 = vmatpush1.msra.mxu0 0.0
    %2462 = vmatprep.subr.mxu0 0.0
    %2463 = vmatpush1.msra.mxu0 0.0
    %2464 = vmatprep.subr.mxu0 0.0
    %2465 = vmatpush1.msra.mxu0 0.0
    %2466 = vmatprep.subr.mxu0 0.0
    %2467 = vmatpush1.msra.mxu0 0.0
    %2468 = vmatprep.subr.mxu0 0.0
    %2469 = vmatpush1.msra.mxu0 0.0
    %2470 = vmatprep.subr.mxu0 0.0
    %2471 = vmatpush1.msra.mxu0 0.0
    %2472 = vmatprep.subr.mxu0 0.0
    %2473 = vmatpush1.msra.mxu0 0.0
    %2474 = vmatprep.subr.mxu0 0.0
    %2475 = vmatpush1.msra.mxu0 0.0
    %2476 = vmatprep.subr.mxu0 0.0
    %2477 = vmatpush1.msra.mxu0 0.0
    %2478 = vmatprep.subr.mxu0 0.0
    %2479 = vmatpush1.msra.mxu0 0.0
    %2480 = vmatprep.subr.mxu0 0.0
    %2481 = vmatpush1.msra.mxu0 0.0
    %2482 = vmatprep.subr.mxu0 0.0
    %2483 = vmatpush1.msra.mxu0 0.0
    %2484 = vmatprep.subr.mxu0 0.0
    %2485 = vmatpush1.msra.mxu0 0.0
    %2486 = vmatprep.subr.mxu0 0.0
    %2487 = vmatpush1.msra.mxu0 0.0
    %2488 = vmatprep.subr.mxu0 0.0
    %2489 = vmatpush1.msra.mxu0 0.0
    %2490 = vmatprep.subr.mxu0 0.0
    %2491 = vmatpush1.msra.mxu0 0.0
    %2492 = vmatprep.subr.mxu0 0.0
    %2493 = vmatpush1.msra.mxu0 0.0
    %2494 = vmatprep.subr.mxu0 0.0
    %2495 = vmatpush1.msra.mxu0 0.0
    %2496 = vmatprep.subr.mxu0 0.0
    %2497 = vmatpush1.msra.mxu0 0.0
    %2498 = vmatprep.subr.mxu0 0.0
    %2499 = vmatpush1.msra.mxu0 0.0
    %2500 = vmatprep.subr.mxu0 0.0
    %2501 = vmatpush1.msra.mxu0 0.0
    %2502 = vmatprep.mubr.f32.mxu0 0.0
    %2503 = vmatmul.mubr.f32.gmra.mrb[0].mxu0 %v2050
    %v2504 = vpop.f32.mrb[0].mxu0
    %v2505 = vadd.f32 0.0, %v2504
    %v2506 = vpop.f32.mrb[0].mxu0
    %2507 = vmatprep.mubr.f32.mxu0 0.0
    %2508 = vmatmul.mubr.f32.gmra.mrb[0].mxu0 %v2053
    %v2509 = vpop.f32.mrb[0].mxu0
    %v2510 = vadd.f32 0.0, %v2509
    %v2511 = vpop.f32.mrb[0].mxu0
    %2512 = vmatprep.mubr.f32.mxu0 0.0
    %2513 = vmatmul.mubr.f32.gmra.mrb[0].mxu0 %v2056
    %v2514 = vpop.f32.mrb[0].mxu0
    %v2515 = vadd.f32 0.0, %v2514
    %v2516 = vpop.f32.mrb[0].mxu0
    %2517 = vdwg.mxu0
    %s2518 = scalar_lea.vmem %s5, 64
    %v2519 = vld [vmem:[%s2518] sm:$0xff]
    %v2520 = vld [vmem:[%s2518 + $0x8] sm:$0xff]
    %v2521 = vld [vmem:[%s2518 + $0x10] sm:$0xff]
    %v2522 = vld [vmem:[%s2518 + $0x18] sm:$0xff]
    %v2524 = vsel %vm2232, %v2519, 0
    %v2527 = vsel %vm2232, %v2520, 0
    %v2530 = vsel %vm2232, %v2521, 0
    %v2533 = vsel %vm2232, %v2522, 0
    %v2536 = vsel %vm166, %v2515, 0
    %2538 = vmatprep.subr.mxu0 0.0
    %2539 = vmatpush1.msra.mxu0 %v2505
    %2540 = vmatprep.subr.mxu0 0.0
    %2541 = vmatpush1.msra.mxu0 %v2510
    %2542 = vmatprep.subr.mxu0 0.0
    %2543 = vmatpush1.msra.mxu0 %v2536
    %2544 = vmatprep.subr.mxu0 0.0
    %2545 = vmatpush1.msra.mxu0 0.0
    %2546 = vmatprep.subr.mxu0 0.0
    %2547 = vmatpush1.msra.mxu0 0.0
    %2548 = vmatprep.subr.mxu0 0.0
    %2549 = vmatpush1.msra.mxu0 0.0
    %2550 = vmatprep.subr.mxu0 0.0
    %2551 = vmatpush1.msra.mxu0 0.0
    %2552 = vmatprep.subr.mxu0 0.0
    %2553 = vmatpush1.msra.mxu0 0.0
    %2554 = vmatprep.subr.mxu0 0.0
    %2555 = vmatpush1.msra.mxu0 0.0
    %2556 = vmatprep.subr.mxu0 0.0
    %2557 = vmatpush1.msra.mxu0 0.0
    %2558 = vmatprep.subr.mxu0 0.0
    %2559 = vmatpush1.msra.mxu0 0.0
    %2560 = vmatprep.subr.mxu0 0.0
    %2561 = vmatpush1.msra.mxu0 0.0
    %2562 = vmatprep.subr.mxu0 0.0
    %2563 = vmatpush1.msra.mxu0 0.0
    %2564 = vmatprep.subr.mxu0 0.0
    %2565 = vmatpush1.msra.mxu0 0.0
    %2566 = vmatprep.subr.mxu0 0.0
    %2567 = vmatpush1.msra.mxu0 0.0
    %2568 = vmatprep.subr.mxu0 0.0
    %2569 = vmatpush1.msra.mxu0 0.0
    %2570 = vmatprep.subr.mxu0 0.0
    %2571 = vmatpush1.msra.mxu0 0.0
    %2572 = vmatprep.subr.mxu0 0.0
    %2573 = vmatpush1.msra.mxu0 0.0
    %2574 = vmatprep.subr.mxu0 0.0
    %2575 = vmatpush1.msra.mxu0 0.0
    %2576 = vmatprep.subr.mxu0 0.0
    %2577 = vmatpush1.msra.mxu0 0.0
    %2578 = vmatprep.subr.mxu0 0.0
    %2579 = vmatpush1.msra.mxu0 0.0
    %2580 = vmatprep.subr.mxu0 0.0
    %2581 = vmatpush1.msra.mxu0 0.0
    %2582 = vmatprep.subr.mxu0 0.0
    %2583 = vmatpush1.msra.mxu0 0.0
    %2584 = vmatprep.subr.mxu0 0.0
    %2585 = vmatpush1.msra.mxu0 0.0
    %2586 = vmatprep.subr.mxu0 0.0
    %2587 = vmatpush1.msra.mxu0 0.0
    %2588 = vmatprep.subr.mxu0 0.0
    %2589 = vmatpush1.msra.mxu0 0.0
    %2590 = vmatprep.subr.mxu0 0.0
    %2591 = vmatpush1.msra.mxu0 0.0
    %2592 = vmatprep.subr.mxu0 0.0
    %2593 = vmatpush1.msra.mxu0 0.0
    %2594 = vmatprep.subr.mxu0 0.0
    %2595 = vmatpush1.msra.mxu0 0.0
    %2596 = vmatprep.subr.mxu0 0.0
    %2597 = vmatpush1.msra.mxu0 0.0
    %2598 = vmatprep.subr.mxu0 0.0
    %2599 = vmatpush1.msra.mxu0 0.0
    %2600 = vmatprep.subr.mxu0 0.0
    %2601 = vmatpush1.msra.mxu0 0.0
    %2602 = vmatprep.mubr.f32.mxu0 0.0
    %2603 = vmatmul.mubr.f32.gmra.mrb[0].mxu0 %v2524
    %v2604 = vpop.f32.mrb[0].mxu0
    %v2605 = vadd.f32 0.0, %v2604
    %v2606 = vpop.f32.mrb[0].mxu0
    %2607 = vmatprep.mubr.f32.mxu0 0.0
    %2608 = vmatmul.mubr.f32.gmra.mrb[0].mxu0 %v2527
    %v2609 = vpop.f32.mrb[0].mxu0
    %v2610 = vadd.f32 0.0, %v2609
    %v2611 = vpop.f32.mrb[0].mxu0
    %2612 = vmatprep.mubr.f32.mxu0 0.0
    %2613 = vmatmul.mubr.f32.gmra.mrb[0].mxu0 %v2530
    %v2614 = vpop.f32.mrb[0].mxu0
    %v2615 = vadd.f32 0.0, %v2614
    %v2616 = vpop.f32.mrb[0].mxu0
    %2617 = vmatprep.mubr.f32.mxu0 0.0
    %2618 = vmatmul.mubr.f32.gmra.mrb[0].mxu0 %v2533
    %v2619 = vpop.f32.mrb[0].mxu0
    %v2620 = vadd.f32 0.0, %v2619
    %v2621 = vpop.f32.mrb[0].mxu0
    %2622 = vdwg.mxu0
    %v2623 = vadd.f32 %v2415, %v2605
    %v2624 = vadd.f32 %v2420, %v2610
    %v2625 = vadd.f32 %v2425, %v2615
    %v2626 = vadd.f32 %v2430, %v2620
    %s2627 = scalar_lea.vmem %s6, 96
    %v2628 = vld [vmem:[%s2627] sm:$0xff]
    %v2629 = vld [vmem:[%s2627 + $0x8] sm:$0xff]
    %v2630 = vld [vmem:[%s2627 + $0x10] sm:$0xff]
    %v2631 = vld [vmem:[%s2627 + $0x18] sm:$0xff]
    %2632 = vmatprep.subr.mxu0 0.0
    %2633 = vmatpush1.msra.mxu0 %v2628
    %2634 = vmatprep.subr.mxu0 0.0
    %2635 = vmatpush1.msra.mxu0 %v2629
    %2636 = vmatprep.subr.mxu0 0.0
    %2637 = vmatpush1.msra.mxu0 %v2630
    %2638 = vmatprep.subr.mxu0 0.0
    %2639 = vmatpush1.msra.mxu0 %v2631
    %2640 = vmatprep.subr.mxu0 0.0
    %2641 = vmatpush1.msra.mxu0 0.0
    %2642 = vmatprep.subr.mxu0 0.0
    %2643 = vmatpush1.msra.mxu0 0.0
    %2644 = vmatprep.subr.mxu0 0.0
    %2645 = vmatpush1.msra.mxu0 0.0
    %2646 = vmatprep.subr.mxu0 0.0
    %2647 = vmatpush1.msra.mxu0 0.0
    %2648 = vmatprep.subr.mxu0 0.0
    %2649 = vmatpush1.msra.mxu0 0.0
    %2650 = vmatprep.subr.mxu0 0.0
    %2651 = vmatpush1.msra.mxu0 0.0
    %2652 = vmatprep.subr.mxu0 0.0
    %2653 = vmatpush1.msra.mxu0 0.0
    %2654 = vmatprep.subr.mxu0 0.0
    %2655 = vmatpush1.msra.mxu0 0.0
    %2656 = vmatprep.subr.mxu0 0.0
    %2657 = vmatpush1.msra.mxu0 0.0
    %2658 = vmatprep.subr.mxu0 0.0
    %2659 = vmatpush1.msra.mxu0 0.0
    %2660 = vmatprep.subr.mxu0 0.0
    %2661 = vmatpush1.msra.mxu0 0.0
    %2662 = vmatprep.subr.mxu0 0.0
    %2663 = vmatpush1.msra.mxu0 0.0
    %2664 = vmatprep.subr.mxu0 0.0
    %2665 = vmatpush1.msra.mxu0 0.0
    %2666 = vmatprep.subr.mxu0 0.0
    %2667 = vmatpush1.msra.mxu0 0.0
    %2668 = vmatprep.subr.mxu0 0.0
    %2669 = vmatpush1.msra.mxu0 0.0
    %2670 = vmatprep.subr.mxu0 0.0
    %2671 = vmatpush1.msra.mxu0 0.0
    %2672 = vmatprep.subr.mxu0 0.0
    %2673 = vmatpush1.msra.mxu0 0.0
    %2674 = vmatprep.subr.mxu0 0.0
    %2675 = vmatpush1.msra.mxu0 0.0
    %2676 = vmatprep.subr.mxu0 0.0
    %2677 = vmatpush1.msra.mxu0 0.0
    %2678 = vmatprep.subr.mxu0 0.0
    %2679 = vmatpush1.msra.mxu0 0.0
    %2680 = vmatprep.subr.mxu0 0.0
    %2681 = vmatpush1.msra.mxu0 0.0
    %2682 = vmatprep.subr.mxu0 0.0
    %2683 = vmatpush1.msra.mxu0 0.0
    %2684 = vmatprep.subr.mxu0 0.0
    %2685 = vmatpush1.msra.mxu0 0.0
    %2686 = vmatprep.subr.mxu0 0.0
    %2687 = vmatpush1.msra.mxu0 0.0
    %2688 = vmatprep.subr.mxu0 0.0
    %2689 = vmatpush1.msra.mxu0 0.0
    %2690 = vmatprep.subr.mxu0 0.0
    %2691 = vmatpush1.msra.mxu0 0.0
    %2692 = vmatprep.subr.mxu0 0.0
    %2693 = vmatpush1.msra.mxu0 0.0
    %2694 = vmatprep.subr.mxu0 0.0
    %2695 = vmatpush1.msra.mxu0 0.0
    %2696 = vmatprep.mubr.f32.mxu0 0.0
    %2697 = vmatmul.mubr.f32.gmra.mrb[0].mxu0 %v2050
    %v2698 = vpop.f32.mrb[0].mxu0
    %v2699 = vadd.f32 0.0, %v2698
    %v2700 = vpop.f32.mrb[0].mxu0
    %2701 = vmatprep.mubr.f32.mxu0 0.0
    %2702 = vmatmul.mubr.f32.gmra.mrb[0].mxu0 %v2053
    %v2703 = vpop.f32.mrb[0].mxu0
    %v2704 = vadd.f32 0.0, %v2703
    %v2705 = vpop.f32.mrb[0].mxu0
    %2706 = vmatprep.mubr.f32.mxu0 0.0
    %2707 = vmatmul.mubr.f32.gmra.mrb[0].mxu0 %v2056
    %v2708 = vpop.f32.mrb[0].mxu0
    %v2709 = vadd.f32 0.0, %v2708
    %v2710 = vpop.f32.mrb[0].mxu0
    %2711 = vdwg.mxu0
    %s2712 = scalar_lea.vmem %s5, 96
    %v2713 = vld [vmem:[%s2712] sm:$0xff]
    %v2714 = vld [vmem:[%s2712 + $0x8] sm:$0xff]
    %v2715 = vld [vmem:[%s2712 + $0x10] sm:$0xff]
    %v2716 = vld [vmem:[%s2712 + $0x18] sm:$0xff]
    %v2718 = vsel %vm2232, %v2713, 0
    %v2721 = vsel %vm2232, %v2714, 0
    %v2724 = vsel %vm2232, %v2715, 0
    %v2727 = vsel %vm2232, %v2716, 0
    %v2730 = vsel %vm166, %v2709, 0
    %2732 = vmatprep.subr.mxu0 0.0
    %2733 = vmatpush1.msra.mxu0 %v2699
    %2734 = vmatprep.subr.mxu0 0.0
    %2735 = vmatpush1.msra.mxu0 %v2704
    %2736 = vmatprep.subr.mxu0 0.0
    %2737 = vmatpush1.msra.mxu0 %v2730
    %2738 = vmatprep.subr.mxu0 0.0
    %2739 = vmatpush1.msra.mxu0 0.0
    %2740 = vmatprep.subr.mxu0 0.0
    %2741 = vmatpush1.msra.mxu0 0.0
    %2742 = vmatprep.subr.mxu0 0.0
    %2743 = vmatpush1.msra.mxu0 0.0
    %2744 = vmatprep.subr.mxu0 0.0
    %2745 = vmatpush1.msra.mxu0 0.0
    %2746 = vmatprep.subr.mxu0 0.0
    %2747 = vmatpush1.msra.mxu0 0.0
    %2748 = vmatprep.subr.mxu0 0.0
    %2749 = vmatpush1.msra.mxu0 0.0
    %2750 = vmatprep.subr.mxu0 0.0
    %2751 = vmatpush1.msra.mxu0 0.0
    %2752 = vmatprep.subr.mxu0 0.0
    %2753 = vmatpush1.msra.mxu0 0.0
    %2754 = vmatprep.subr.mxu0 0.0
    %2755 = vmatpush1.msra.mxu0 0.0
    %2756 = vmatprep.subr.mxu0 0.0
    %2757 = vmatpush1.msra.mxu0 0.0
    %2758 = vmatprep.subr.mxu0 0.0
    %2759 = vmatpush1.msra.mxu0 0.0
    %2760 = vmatprep.subr.mxu0 0.0
    %2761 = vmatpush1.msra.mxu0 0.0
    %2762 = vmatprep.subr.mxu0 0.0
    %2763 = vmatpush1.msra.mxu0 0.0
    %2764 = vmatprep.subr.mxu0 0.0
    %2765 = vmatpush1.msra.mxu0 0.0
    %2766 = vmatprep.subr.mxu0 0.0
    %2767 = vmatpush1.msra.mxu0 0.0
    %2768 = vmatprep.subr.mxu0 0.0
    %2769 = vmatpush1.msra.mxu0 0.0
    %2770 = vmatprep.subr.mxu0 0.0
    %2771 = vmatpush1.msra.mxu0 0.0
    %2772 = vmatprep.subr.mxu0 0.0
    %2773 = vmatpush1.msra.mxu0 0.0
    %2774 = vmatprep.subr.mxu0 0.0
    %2775 = vmatpush1.msra.mxu0 0.0
    %2776 = vmatprep.subr.mxu0 0.0
    %2777 = vmatpush1.msra.mxu0 0.0
    %2778 = vmatprep.subr.mxu0 0.0
    %2779 = vmatpush1.msra.mxu0 0.0
    %2780 = vmatprep.subr.mxu0 0.0
    %2781 = vmatpush1.msra.mxu0 0.0
    %2782 = vmatprep.subr.mxu0 0.0
    %2783 = vmatpush1.msra.mxu0 0.0
    %2784 = vmatprep.subr.mxu0 0.0
    %2785 = vmatpush1.msra.mxu0 0.0
    %2786 = vmatprep.subr.mxu0 0.0
    %2787 = vmatpush1.msra.mxu0 0.0
    %2788 = vmatprep.subr.mxu0 0.0
    %2789 = vmatpush1.msra.mxu0 0.0
    %2790 = vmatprep.subr.mxu0 0.0
    %2791 = vmatpush1.msra.mxu0 0.0
    %2792 = vmatprep.subr.mxu0 0.0
    %2793 = vmatpush1.msra.mxu0 0.0
    %2794 = vmatprep.subr.mxu0 0.0
    %2795 = vmatpush1.msra.mxu0 0.0
    %2796 = vmatprep.mubr.f32.mxu0 0.0
    %2797 = vmatmul.mubr.f32.gmra.mrb[0].mxu0 %v2718
    %v2798 = vpop.f32.mrb[0].mxu0
    %v2799 = vadd.f32 0.0, %v2798
    %v2800 = vpop.f32.mrb[0].mxu0
    %2801 = vmatprep.mubr.f32.mxu0 0.0
    %2802 = vmatmul.mubr.f32.gmra.mrb[0].mxu0 %v2721
    %v2803 = vpop.f32.mrb[0].mxu0
    %v2804 = vadd.f32 0.0, %v2803
    %v2805 = vpop.f32.mrb[0].mxu0
    %2806 = vmatprep.mubr.f32.mxu0 0.0
    %2807 = vmatmul.mubr.f32.gmra.mrb[0].mxu0 %v2724
    %v2808 = vpop.f32.mrb[0].mxu0
    %v2809 = vadd.f32 0.0, %v2808
    %v2810 = vpop.f32.mrb[0].mxu0
    %2811 = vmatprep.mubr.f32.mxu0 0.0
    %2812 = vmatmul.mubr.f32.gmra.mrb[0].mxu0 %v2727
    %v2813 = vpop.f32.mrb[0].mxu0
    %v2814 = vadd.f32 0.0, %v2813
    %v2815 = vpop.f32.mrb[0].mxu0
    %2816 = vdwg.mxu0
    %v2817 = vadd.f32 %v2623, %v2799
    %v2818 = vadd.f32 %v2624, %v2804
    %v2819 = vadd.f32 %v2625, %v2809
    %v2820 = vadd.f32 %v2626, %v2814
    %s2821 = scalar_lea.vmem %s6, 128
    %v2822 = vld [vmem:[%s2821] sm:$0xff]
    %v2823 = vld [vmem:[%s2821 + $0x8] sm:$0xff]
    %v2824 = vld [vmem:[%s2821 + $0x10] sm:$0xff]
    %v2825 = vld [vmem:[%s2821 + $0x18] sm:$0xff]
    %2826 = vmatprep.subr.mxu0 0.0
    %2827 = vmatpush1.msra.mxu0 %v2822
    %2828 = vmatprep.subr.mxu0 0.0
    %2829 = vmatpush1.msra.mxu0 %v2823
    %2830 = vmatprep.subr.mxu0 0.0
    %2831 = vmatpush1.msra.mxu0 %v2824
    %2832 = vmatprep.subr.mxu0 0.0
    %2833 = vmatpush1.msra.mxu0 %v2825
    %2834 = vmatprep.subr.mxu0 0.0
    %2835 = vmatpush1.msra.mxu0 0.0
    %2836 = vmatprep.subr.mxu0 0.0
    %2837 = vmatpush1.msra.mxu0 0.0
    %2838 = vmatprep.subr.mxu0 0.0
    %2839 = vmatpush1.msra.mxu0 0.0
    %2840 = vmatprep.subr.mxu0 0.0
    %2841 = vmatpush1.msra.mxu0 0.0
    %2842 = vmatprep.subr.mxu0 0.0
    %2843 = vmatpush1.msra.mxu0 0.0
    %2844 = vmatprep.subr.mxu0 0.0
    %2845 = vmatpush1.msra.mxu0 0.0
    %2846 = vmatprep.subr.mxu0 0.0
    %2847 = vmatpush1.msra.mxu0 0.0
    %2848 = vmatprep.subr.mxu0 0.0
    %2849 = vmatpush1.msra.mxu0 0.0
    %2850 = vmatprep.subr.mxu0 0.0
    %2851 = vmatpush1.msra.mxu0 0.0
    %2852 = vmatprep.subr.mxu0 0.0
    %2853 = vmatpush1.msra.mxu0 0.0
    %2854 = vmatprep.subr.mxu0 0.0
    %2855 = vmatpush1.msra.mxu0 0.0
    %2856 = vmatprep.subr.mxu0 0.0
    %2857 = vmatpush1.msra.mxu0 0.0
    %2858 = vmatprep.subr.mxu0 0.0
    %2859 = vmatpush1.msra.mxu0 0.0
    %2860 = vmatprep.subr.mxu0 0.0
    %2861 = vmatpush1.msra.mxu0 0.0
    %2862 = vmatprep.subr.mxu0 0.0
    %2863 = vmatpush1.msra.mxu0 0.0
    %2864 = vmatprep.subr.mxu0 0.0
    %2865 = vmatpush1.msra.mxu0 0.0
    %2866 = vmatprep.subr.mxu0 0.0
    %2867 = vmatpush1.msra.mxu0 0.0
    %2868 = vmatprep.subr.mxu0 0.0
    %2869 = vmatpush1.msra.mxu0 0.0
    %2870 = vmatprep.subr.mxu0 0.0
    %2871 = vmatpush1.msra.mxu0 0.0
    %2872 = vmatprep.subr.mxu0 0.0
    %2873 = vmatpush1.msra.mxu0 0.0
    %2874 = vmatprep.subr.mxu0 0.0
    %2875 = vmatpush1.msra.mxu0 0.0
    %2876 = vmatprep.subr.mxu0 0.0
    %2877 = vmatpush1.msra.mxu0 0.0
    %2878 = vmatprep.subr.mxu0 0.0
    %2879 = vmatpush1.msra.mxu0 0.0
    %2880 = vmatprep.subr.mxu0 0.0
    %2881 = vmatpush1.msra.mxu0 0.0
    %2882 = vmatprep.subr.mxu0 0.0
    %2883 = vmatpush1.msra.mxu0 0.0
    %2884 = vmatprep.subr.mxu0 0.0
    %2885 = vmatpush1.msra.mxu0 0.0
    %2886 = vmatprep.subr.mxu0 0.0
    %2887 = vmatpush1.msra.mxu0 0.0
    %2888 = vmatprep.subr.mxu0 0.0
    %2889 = vmatpush1.msra.mxu0 0.0
    %2890 = vmatprep.mubr.f32.mxu0 0.0
    %2891 = vmatmul.mubr.f32.gmra.mrb[0].mxu0 %v2050
    %v2892 = vpop.f32.mrb[0].mxu0
    %v2893 = vadd.f32 0.0, %v2892
    %v2894 = vpop.f32.mrb[0].mxu0
    %2895 = vmatprep.mubr.f32.mxu0 0.0
    %2896 = vmatmul.mubr.f32.gmra.mrb[0].mxu0 %v2053
    %v2897 = vpop.f32.mrb[0].mxu0
    %v2898 = vadd.f32 0.0, %v2897
    %v2899 = vpop.f32.mrb[0].mxu0
    %2900 = vmatprep.mubr.f32.mxu0 0.0
    %2901 = vmatmul.mubr.f32.gmra.mrb[0].mxu0 %v2056
    %v2902 = vpop.f32.mrb[0].mxu0
    %v2903 = vadd.f32 0.0, %v2902
    %v2904 = vpop.f32.mrb[0].mxu0
    %2905 = vdwg.mxu0
    %s2906 = scalar_lea.vmem %s5, 128
    %v2907 = vld [vmem:[%s2906] sm:$0xff]
    %v2908 = vld [vmem:[%s2906 + $0x8] sm:$0xff]
    %v2909 = vld [vmem:[%s2906 + $0x10] sm:$0xff]
    %v2910 = vld [vmem:[%s2906 + $0x18] sm:$0xff]
    %v2912 = vsel %vm2232, %v2907, 0
    %v2915 = vsel %vm2232, %v2908, 0
    %v2918 = vsel %vm2232, %v2909, 0
    %v2921 = vsel %vm2232, %v2910, 0
    %v2924 = vsel %vm166, %v2903, 0
    %2926 = vmatprep.subr.mxu0 0.0
    %2927 = vmatpush1.msra.mxu0 %v2893
    %2928 = vmatprep.subr.mxu0 0.0
    %2929 = vmatpush1.msra.mxu0 %v2898
    %2930 = vmatprep.subr.mxu0 0.0
    %2931 = vmatpush1.msra.mxu0 %v2924
    %2932 = vmatprep.subr.mxu0 0.0
    %2933 = vmatpush1.msra.mxu0 0.0
    %2934 = vmatprep.subr.mxu0 0.0
    %2935 = vmatpush1.msra.mxu0 0.0
    %2936 = vmatprep.subr.mxu0 0.0
    %2937 = vmatpush1.msra.mxu0 0.0
    %2938 = vmatprep.subr.mxu0 0.0
    %2939 = vmatpush1.msra.mxu0 0.0
    %2940 = vmatprep.subr.mxu0 0.0
    %2941 = vmatpush1.msra.mxu0 0.0
    %2942 = vmatprep.subr.mxu0 0.0
    %2943 = vmatpush1.msra.mxu0 0.0
    %2944 = vmatprep.subr.mxu0 0.0
    %2945 = vmatpush1.msra.mxu0 0.0
    %2946 = vmatprep.subr.mxu0 0.0
    %2947 = vmatpush1.msra.mxu0 0.0
    %2948 = vmatprep.subr.mxu0 0.0
    %2949 = vmatpush1.msra.mxu0 0.0
    %2950 = vmatprep.subr.mxu0 0.0
    %2951 = vmatpush1.msra.mxu0 0.0
    %2952 = vmatprep.subr.mxu0 0.0
    %2953 = vmatpush1.msra.mxu0 0.0
    %2954 = vmatprep.subr.mxu0 0.0
    %2955 = vmatpush1.msra.mxu0 0.0
    %2956 = vmatprep.subr.mxu0 0.0
    %2957 = vmatpush1.msra.mxu0 0.0
    %2958 = vmatprep.subr.mxu0 0.0
    %2959 = vmatpush1.msra.mxu0 0.0
    %2960 = vmatprep.subr.mxu0 0.0
    %2961 = vmatpush1.msra.mxu0 0.0
    %2962 = vmatprep.subr.mxu0 0.0
    %2963 = vmatpush1.msra.mxu0 0.0
    %2964 = vmatprep.subr.mxu0 0.0
    %2965 = vmatpush1.msra.mxu0 0.0
    %2966 = vmatprep.subr.mxu0 0.0
    %2967 = vmatpush1.msra.mxu0 0.0
    %2968 = vmatprep.subr.mxu0 0.0
    %2969 = vmatpush1.msra.mxu0 0.0
    %2970 = vmatprep.subr.mxu0 0.0
    %2971 = vmatpush1.msra.mxu0 0.0
    %2972 = vmatprep.subr.mxu0 0.0
    %2973 = vmatpush1.msra.mxu0 0.0
    %2974 = vmatprep.subr.mxu0 0.0
    %2975 = vmatpush1.msra.mxu0 0.0
    %2976 = vmatprep.subr.mxu0 0.0
    %2977 = vmatpush1.msra.mxu0 0.0
    %2978 = vmatprep.subr.mxu0 0.0
    %2979 = vmatpush1.msra.mxu0 0.0
    %2980 = vmatprep.subr.mxu0 0.0
    %2981 = vmatpush1.msra.mxu0 0.0
    %2982 = vmatprep.subr.mxu0 0.0
    %2983 = vmatpush1.msra.mxu0 0.0
    %2984 = vmatprep.subr.mxu0 0.0
    %2985 = vmatpush1.msra.mxu0 0.0
    %2986 = vmatprep.subr.mxu0 0.0
    %2987 = vmatpush1.msra.mxu0 0.0
    %2988 = vmatprep.subr.mxu0 0.0
    %2989 = vmatpush1.msra.mxu0 0.0
    %2990 = vmatprep.mubr.f32.mxu0 0.0
    %2991 = vmatmul.mubr.f32.gmra.mrb[0].mxu0 %v2912
    %v2992 = vpop.f32.mrb[0].mxu0
    %v2993 = vadd.f32 0.0, %v2992
    %v2994 = vpop.f32.mrb[0].mxu0
    %2995 = vmatprep.mubr.f32.mxu0 0.0
    %2996 = vmatmul.mubr.f32.gmra.mrb[0].mxu0 %v2915
    %v2997 = vpop.f32.mrb[0].mxu0
    %v2998 = vadd.f32 0.0, %v2997
    %v2999 = vpop.f32.mrb[0].mxu0
    %3000 = vmatprep.mubr.f32.mxu0 0.0
    %3001 = vmatmul.mubr.f32.gmra.mrb[0].mxu0 %v2918
    %v3002 = vpop.f32.mrb[0].mxu0
    %v3003 = vadd.f32 0.0, %v3002
    %v3004 = vpop.f32.mrb[0].mxu0
    %3005 = vmatprep.mubr.f32.mxu0 0.0
    %3006 = vmatmul.mubr.f32.gmra.mrb[0].mxu0 %v2921
    %v3007 = vpop.f32.mrb[0].mxu0
    %v3008 = vadd.f32 0.0, %v3007
    %v3009 = vpop.f32.mrb[0].mxu0
    %3010 = vdwg.mxu0
    %v3011 = vadd.f32 %v2817, %v2993
    %v3012 = vadd.f32 %v2818, %v2998
    %v3013 = vadd.f32 %v2819, %v3003
    %v3014 = vadd.f32 %v2820, %v3008
    %s3015 = scalar_lea.vmem %s6, 160
    %v3016 = vld [vmem:[%s3015] sm:$0xff]
    %v3017 = vld [vmem:[%s3015 + $0x8] sm:$0xff]
    %v3018 = vld [vmem:[%s3015 + $0x10] sm:$0xff]
    %v3019 = vld [vmem:[%s3015 + $0x18] sm:$0xff]
    %3020 = vmatprep.subr.mxu0 0.0
    %3021 = vmatpush1.msra.mxu0 %v3016
    %3022 = vmatprep.subr.mxu0 0.0
    %3023 = vmatpush1.msra.mxu0 %v3017
    %3024 = vmatprep.subr.mxu0 0.0
    %3025 = vmatpush1.msra.mxu0 %v3018
    %3026 = vmatprep.subr.mxu0 0.0
    %3027 = vmatpush1.msra.mxu0 %v3019
    %3028 = vmatprep.subr.mxu0 0.0
    %3029 = vmatpush1.msra.mxu0 0.0
    %3030 = vmatprep.subr.mxu0 0.0
    %3031 = vmatpush1.msra.mxu0 0.0
    %3032 = vmatprep.subr.mxu0 0.0
    %3033 = vmatpush1.msra.mxu0 0.0
    %3034 = vmatprep.subr.mxu0 0.0
    %3035 = vmatpush1.msra.mxu0 0.0
    %3036 = vmatprep.subr.mxu0 0.0
    %3037 = vmatpush1.msra.mxu0 0.0
    %3038 = vmatprep.subr.mxu0 0.0
    %3039 = vmatpush1.msra.mxu0 0.0
    %3040 = vmatprep.subr.mxu0 0.0
    %3041 = vmatpush1.msra.mxu0 0.0
    %3042 = vmatprep.subr.mxu0 0.0
    %3043 = vmatpush1.msra.mxu0 0.0
    %3044 = vmatprep.subr.mxu0 0.0
    %3045 = vmatpush1.msra.mxu0 0.0
    %3046 = vmatprep.subr.mxu0 0.0
    %3047 = vmatpush1.msra.mxu0 0.0
    %3048 = vmatprep.subr.mxu0 0.0
    %3049 = vmatpush1.msra.mxu0 0.0
    %3050 = vmatprep.subr.mxu0 0.0
    %3051 = vmatpush1.msra.mxu0 0.0
    %3052 = vmatprep.subr.mxu0 0.0
    %3053 = vmatpush1.msra.mxu0 0.0
    %3054 = vmatprep.subr.mxu0 0.0
    %3055 = vmatpush1.msra.mxu0 0.0
    %3056 = vmatprep.subr.mxu0 0.0
    %3057 = vmatpush1.msra.mxu0 0.0
    %3058 = vmatprep.subr.mxu0 0.0
    %3059 = vmatpush1.msra.mxu0 0.0
    %3060 = vmatprep.subr.mxu0 0.0
    %3061 = vmatpush1.msra.mxu0 0.0
    %3062 = vmatprep.subr.mxu0 0.0
    %3063 = vmatpush1.msra.mxu0 0.0
    %3064 = vmatprep.subr.mxu0 0.0
    %3065 = vmatpush1.msra.mxu0 0.0
    %3066 = vmatprep.subr.mxu0 0.0
    %3067 = vmatpush1.msra.mxu0 0.0
    %3068 = vmatprep.subr.mxu0 0.0
    %3069 = vmatpush1.msra.mxu0 0.0
    %3070 = vmatprep.subr.mxu0 0.0
    %3071 = vmatpush1.msra.mxu0 0.0
    %3072 = vmatprep.subr.mxu0 0.0
    %3073 = vmatpush1.msra.mxu0 0.0
    %3074 = vmatprep.subr.mxu0 0.0
    %3075 = vmatpush1.msra.mxu0 0.0
    %3076 = vmatprep.subr.mxu0 0.0
    %3077 = vmatpush1.msra.mxu0 0.0
    %3078 = vmatprep.subr.mxu0 0.0
    %3079 = vmatpush1.msra.mxu0 0.0
    %3080 = vmatprep.subr.mxu0 0.0
    %3081 = vmatpush1.msra.mxu0 0.0
    %3082 = vmatprep.subr.mxu0 0.0
    %3083 = vmatpush1.msra.mxu0 0.0
    %3084 = vmatprep.mubr.f32.mxu0 0.0
    %3085 = vmatmul.mubr.f32.gmra.mrb[0].mxu0 %v2050
    %v3086 = vpop.f32.mrb[0].mxu0
    %v3087 = vadd.f32 0.0, %v3086
    %v3088 = vpop.f32.mrb[0].mxu0
    %3089 = vmatprep.mubr.f32.mxu0 0.0
    %3090 = vmatmul.mubr.f32.gmra.mrb[0].mxu0 %v2053
    %v3091 = vpop.f32.mrb[0].mxu0
    %v3092 = vadd.f32 0.0, %v3091
    %v3093 = vpop.f32.mrb[0].mxu0
    %3094 = vmatprep.mubr.f32.mxu0 0.0
    %3095 = vmatmul.mubr.f32.gmra.mrb[0].mxu0 %v2056
    %v3096 = vpop.f32.mrb[0].mxu0
    %v3097 = vadd.f32 0.0, %v3096
    %v3098 = vpop.f32.mrb[0].mxu0
    %3099 = vdwg.mxu0
    %s3100 = scalar_lea.vmem %s5, 160
    %v3101 = vld [vmem:[%s3100] sm:$0xff]
    %v3102 = vld [vmem:[%s3100 + $0x8] sm:$0xff]
    %v3103 = vld [vmem:[%s3100 + $0x10] sm:$0xff]
    %v3104 = vld [vmem:[%s3100 + $0x18] sm:$0xff]
    %v3106 = vsel %vm2232, %v3101, 0
    %v3109 = vsel %vm2232, %v3102, 0
    %v3112 = vsel %vm2232, %v3103, 0
    %v3115 = vsel %vm2232, %v3104, 0
    %v3118 = vsel %vm166, %v3097, 0
    %3120 = vmatprep.subr.mxu0 0.0
    %3121 = vmatpush1.msra.mxu0 %v3087
    %3122 = vmatprep.subr.mxu0 0.0
    %3123 = vmatpush1.msra.mxu0 %v3092
    %3124 = vmatprep.subr.mxu0 0.0
    %3125 = vmatpush1.msra.mxu0 %v3118
    %3126 = vmatprep.subr.mxu0 0.0
    %3127 = vmatpush1.msra.mxu0 0.0
    %3128 = vmatprep.subr.mxu0 0.0
    %3129 = vmatpush1.msra.mxu0 0.0
    %3130 = vmatprep.subr.mxu0 0.0
    %3131 = vmatpush1.msra.mxu0 0.0
    %3132 = vmatprep.subr.mxu0 0.0
    %3133 = vmatpush1.msra.mxu0 0.0
    %3134 = vmatprep.subr.mxu0 0.0
    %3135 = vmatpush1.msra.mxu0 0.0
    %3136 = vmatprep.subr.mxu0 0.0
    %3137 = vmatpush1.msra.mxu0 0.0
    %3138 = vmatprep.subr.mxu0 0.0
    %3139 = vmatpush1.msra.mxu0 0.0
    %3140 = vmatprep.subr.mxu0 0.0
    %3141 = vmatpush1.msra.mxu0 0.0
    %3142 = vmatprep.subr.mxu0 0.0
    %3143 = vmatpush1.msra.mxu0 0.0
    %3144 = vmatprep.subr.mxu0 0.0
    %3145 = vmatpush1.msra.mxu0 0.0
    %3146 = vmatprep.subr.mxu0 0.0
    %3147 = vmatpush1.msra.mxu0 0.0
    %3148 = vmatprep.subr.mxu0 0.0
    %3149 = vmatpush1.msra.mxu0 0.0
    %3150 = vmatprep.subr.mxu0 0.0
    %3151 = vmatpush1.msra.mxu0 0.0
    %3152 = vmatprep.subr.mxu0 0.0
    %3153 = vmatpush1.msra.mxu0 0.0
    %3154 = vmatprep.subr.mxu0 0.0
    %3155 = vmatpush1.msra.mxu0 0.0
    %3156 = vmatprep.subr.mxu0 0.0
    %3157 = vmatpush1.msra.mxu0 0.0
    %3158 = vmatprep.subr.mxu0 0.0
    %3159 = vmatpush1.msra.mxu0 0.0
    %3160 = vmatprep.subr.mxu0 0.0
    %3161 = vmatpush1.msra.mxu0 0.0
    %3162 = vmatprep.subr.mxu0 0.0
    %3163 = vmatpush1.msra.mxu0 0.0
    %3164 = vmatprep.subr.mxu0 0.0
    %3165 = vmatpush1.msra.mxu0 0.0
    %3166 = vmatprep.subr.mxu0 0.0
    %3167 = vmatpush1.msra.mxu0 0.0
    %3168 = vmatprep.subr.mxu0 0.0
    %3169 = vmatpush1.msra.mxu0 0.0
    %3170 = vmatprep.subr.mxu0 0.0
    %3171 = vmatpush1.msra.mxu0 0.0
    %3172 = vmatprep.subr.mxu0 0.0
    %3173 = vmatpush1.msra.mxu0 0.0
    %3174 = vmatprep.subr.mxu0 0.0
    %3175 = vmatpush1.msra.mxu0 0.0
    %3176 = vmatprep.subr.mxu0 0.0
    %3177 = vmatpush1.msra.mxu0 0.0
    %3178 = vmatprep.subr.mxu0 0.0
    %3179 = vmatpush1.msra.mxu0 0.0
    %3180 = vmatprep.subr.mxu0 0.0
    %3181 = vmatpush1.msra.mxu0 0.0
    %3182 = vmatprep.subr.mxu0 0.0
    %3183 = vmatpush1.msra.mxu0 0.0
    %3184 = vmatprep.mubr.f32.mxu0 0.0
    %3185 = vmatmul.mubr.f32.gmra.mrb[0].mxu0 %v3106
    %v3186 = vpop.f32.mrb[0].mxu0
    %v3187 = vadd.f32 0.0, %v3186
    %v3188 = vpop.f32.mrb[0].mxu0
    %3189 = vmatprep.mubr.f32.mxu0 0.0
    %3190 = vmatmul.mubr.f32.gmra.mrb[0].mxu0 %v3109
    %v3191 = vpop.f32.mrb[0].mxu0
    %v3192 = vadd.f32 0.0, %v3191
    %v3193 = vpop.f32.mrb[0].mxu0
    %3194 = vmatprep.mubr.f32.mxu0 0.0
    %3195 = vmatmul.mubr.f32.gmra.mrb[0].mxu0 %v3112
    %v3196 = vpop.f32.mrb[0].mxu0
    %v3197 = vadd.f32 0.0, %v3196
    %v3198 = vpop.f32.mrb[0].mxu0
    %3199 = vmatprep.mubr.f32.mxu0 0.0
    %3200 = vmatmul.mubr.f32.gmra.mrb[0].mxu0 %v3115
    %v3201 = vpop.f32.mrb[0].mxu0
    %v3202 = vadd.f32 0.0, %v3201
    %v3203 = vpop.f32.mrb[0].mxu0
    %3204 = vdwg.mxu0
    %v3205 = vadd.f32 %v3011, %v3187
    %v3206 = vadd.f32 %v3012, %v3192
    %v3207 = vadd.f32 %v3013, %v3197
    %v3208 = vadd.f32 %v3014, %v3202
    %s3209 = scalar_lea.vmem %s6, 192
    %v3210 = vld [vmem:[%s3209] sm:$0xff]
    %v3211 = vld [vmem:[%s3209 + $0x8] sm:$0xff]
    %v3212 = vld [vmem:[%s3209 + $0x10] sm:$0xff]
    %v3213 = vld [vmem:[%s3209 + $0x18] sm:$0xff]
    %3214 = vmatprep.subr.mxu0 0.0
    %3215 = vmatpush1.msra.mxu0 %v3210
    %3216 = vmatprep.subr.mxu0 0.0
    %3217 = vmatpush1.msra.mxu0 %v3211
    %3218 = vmatprep.subr.mxu0 0.0
    %3219 = vmatpush1.msra.mxu0 %v3212
    %3220 = vmatprep.subr.mxu0 0.0
    %3221 = vmatpush1.msra.mxu0 %v3213
    %3222 = vmatprep.subr.mxu0 0.0
    %3223 = vmatpush1.msra.mxu0 0.0
    %3224 = vmatprep.subr.mxu0 0.0
    %3225 = vmatpush1.msra.mxu0 0.0
    %3226 = vmatprep.subr.mxu0 0.0
    %3227 = vmatpush1.msra.mxu0 0.0
    %3228 = vmatprep.subr.mxu0 0.0
    %3229 = vmatpush1.msra.mxu0 0.0
    %3230 = vmatprep.subr.mxu0 0.0
    %3231 = vmatpush1.msra.mxu0 0.0
    %3232 = vmatprep.subr.mxu0 0.0
    %3233 = vmatpush1.msra.mxu0 0.0
    %3234 = vmatprep.subr.mxu0 0.0
    %3235 = vmatpush1.msra.mxu0 0.0
    %3236 = vmatprep.subr.mxu0 0.0
    %3237 = vmatpush1.msra.mxu0 0.0
    %3238 = vmatprep.subr.mxu0 0.0
    %3239 = vmatpush1.msra.mxu0 0.0
    %3240 = vmatprep.subr.mxu0 0.0
    %3241 = vmatpush1.msra.mxu0 0.0
    %3242 = vmatprep.subr.mxu0 0.0
    %3243 = vmatpush1.msra.mxu0 0.0
    %3244 = vmatprep.subr.mxu0 0.0
    %3245 = vmatpush1.msra.mxu0 0.0
    %3246 = vmatprep.subr.mxu0 0.0
    %3247 = vmatpush1.msra.mxu0 0.0
    %3248 = vmatprep.subr.mxu0 0.0
    %3249 = vmatpush1.msra.mxu0 0.0
    %3250 = vmatprep.subr.mxu0 0.0
    %3251 = vmatpush1.msra.mxu0 0.0
    %3252 = vmatprep.subr.mxu0 0.0
    %3253 = vmatpush1.msra.mxu0 0.0
    %3254 = vmatprep.subr.mxu0 0.0
    %3255 = vmatpush1.msra.mxu0 0.0
    %3256 = vmatprep.subr.mxu0 0.0
    %3257 = vmatpush1.msra.mxu0 0.0
    %3258 = vmatprep.subr.mxu0 0.0
    %3259 = vmatpush1.msra.mxu0 0.0
    %3260 = vmatprep.subr.mxu0 0.0
    %3261 = vmatpush1.msra.mxu0 0.0
    %3262 = vmatprep.subr.mxu0 0.0
    %3263 = vmatpush1.msra.mxu0 0.0
    %3264 = vmatprep.subr.mxu0 0.0
    %3265 = vmatpush1.msra.mxu0 0.0
    %3266 = vmatprep.subr.mxu0 0.0
    %3267 = vmatpush1.msra.mxu0 0.0
    %3268 = vmatprep.subr.mxu0 0.0
    %3269 = vmatpush1.msra.mxu0 0.0
    %3270 = vmatprep.subr.mxu0 0.0
    %3271 = vmatpush1.msra.mxu0 0.0
    %3272 = vmatprep.subr.mxu0 0.0
    %3273 = vmatpush1.msra.mxu0 0.0
    %3274 = vmatprep.subr.mxu0 0.0
    %3275 = vmatpush1.msra.mxu0 0.0
    %3276 = vmatprep.subr.mxu0 0.0
    %3277 = vmatpush1.msra.mxu0 0.0
    %3278 = vmatprep.mubr.f32.mxu0 0.0
    %3279 = vmatmul.mubr.f32.gmra.mrb[0].mxu0 %v2050
    %v3280 = vpop.f32.mrb[0].mxu0
    %v3281 = vadd.f32 0.0, %v3280
    %v3282 = vpop.f32.mrb[0].mxu0
    %3283 = vmatprep.mubr.f32.mxu0 0.0
    %3284 = vmatmul.mubr.f32.gmra.mrb[0].mxu0 %v2053
    %v3285 = vpop.f32.mrb[0].mxu0
    %v3286 = vadd.f32 0.0, %v3285
    %v3287 = vpop.f32.mrb[0].mxu0
    %3288 = vmatprep.mubr.f32.mxu0 0.0
    %3289 = vmatmul.mubr.f32.gmra.mrb[0].mxu0 %v2056
    %v3290 = vpop.f32.mrb[0].mxu0
    %v3291 = vadd.f32 0.0, %v3290
    %v3292 = vpop.f32.mrb[0].mxu0
    %3293 = vdwg.mxu0
    %s3294 = scalar_lea.vmem %s5, 192
    %v3295 = vld [vmem:[%s3294] sm:$0xff]
    %v3296 = vld [vmem:[%s3294 + $0x8] sm:$0xff]
    %v3297 = vld [vmem:[%s3294 + $0x10] sm:$0xff]
    %v3298 = vld [vmem:[%s3294 + $0x18] sm:$0xff]
    %v3300 = vsel %vm2232, %v3295, 0
    %v3303 = vsel %vm2232, %v3296, 0
    %v3306 = vsel %vm2232, %v3297, 0
    %v3309 = vsel %vm2232, %v3298, 0
    %v3312 = vsel %vm166, %v3291, 0
    %3314 = vmatprep.subr.mxu0 0.0
    %3315 = vmatpush1.msra.mxu0 %v3281
    %3316 = vmatprep.subr.mxu0 0.0
    %3317 = vmatpush1.msra.mxu0 %v3286
    %3318 = vmatprep.subr.mxu0 0.0
    %3319 = vmatpush1.msra.mxu0 %v3312
    %3320 = vmatprep.subr.mxu0 0.0
    %3321 = vmatpush1.msra.mxu0 0.0
    %3322 = vmatprep.subr.mxu0 0.0
    %3323 = vmatpush1.msra.mxu0 0.0
    %3324 = vmatprep.subr.mxu0 0.0
    %3325 = vmatpush1.msra.mxu0 0.0
    %3326 = vmatprep.subr.mxu0 0.0
    %3327 = vmatpush1.msra.mxu0 0.0
    %3328 = vmatprep.subr.mxu0 0.0
    %3329 = vmatpush1.msra.mxu0 0.0
    %3330 = vmatprep.subr.mxu0 0.0
    %3331 = vmatpush1.msra.mxu0 0.0
    %3332 = vmatprep.subr.mxu0 0.0
    %3333 = vmatpush1.msra.mxu0 0.0
    %3334 = vmatprep.subr.mxu0 0.0
    %3335 = vmatpush1.msra.mxu0 0.0
    %3336 = vmatprep.subr.mxu0 0.0
    %3337 = vmatpush1.msra.mxu0 0.0
    %3338 = vmatprep.subr.mxu0 0.0
    %3339 = vmatpush1.msra.mxu0 0.0
    %3340 = vmatprep.subr.mxu0 0.0
    %3341 = vmatpush1.msra.mxu0 0.0
    %3342 = vmatprep.subr.mxu0 0.0
    %3343 = vmatpush1.msra.mxu0 0.0
    %3344 = vmatprep.subr.mxu0 0.0
    %3345 = vmatpush1.msra.mxu0 0.0
    %3346 = vmatprep.subr.mxu0 0.0
    %3347 = vmatpush1.msra.mxu0 0.0
    %3348 = vmatprep.subr.mxu0 0.0
    %3349 = vmatpush1.msra.mxu0 0.0
    %3350 = vmatprep.subr.mxu0 0.0
    %3351 = vmatpush1.msra.mxu0 0.0
    %3352 = vmatprep.subr.mxu0 0.0
    %3353 = vmatpush1.msra.mxu0 0.0
    %3354 = vmatprep.subr.mxu0 0.0
    %3355 = vmatpush1.msra.mxu0 0.0
    %3356 = vmatprep.subr.mxu0 0.0
    %3357 = vmatpush1.msra.mxu0 0.0
    %3358 = vmatprep.subr.mxu0 0.0
    %3359 = vmatpush1.msra.mxu0 0.0
    %3360 = vmatprep.subr.mxu0 0.0
    %3361 = vmatpush1.msra.mxu0 0.0
    %3362 = vmatprep.subr.mxu0 0.0
    %3363 = vmatpush1.msra.mxu0 0.0
    %3364 = vmatprep.subr.mxu0 0.0
    %3365 = vmatpush1.msra.mxu0 0.0
    %3366 = vmatprep.subr.mxu0 0.0
    %3367 = vmatpush1.msra.mxu0 0.0
    %3368 = vmatprep.subr.mxu0 0.0
    %3369 = vmatpush1.msra.mxu0 0.0
    %3370 = vmatprep.subr.mxu0 0.0
    %3371 = vmatpush1.msra.mxu0 0.0
    %3372 = vmatprep.subr.mxu0 0.0
    %3373 = vmatpush1.msra.mxu0 0.0
    %3374 = vmatprep.subr.mxu0 0.0
    %3375 = vmatpush1.msra.mxu0 0.0
    %3376 = vmatprep.subr.mxu0 0.0
    %3377 = vmatpush1.msra.mxu0 0.0
    %3378 = vmatprep.mubr.f32.mxu0 0.0
    %3379 = vmatmul.mubr.f32.gmra.mrb[0].mxu0 %v3300
    %v3380 = vpop.f32.mrb[0].mxu0
    %v3381 = vadd.f32 0.0, %v3380
    %v3382 = vpop.f32.mrb[0].mxu0
    %3383 = vmatprep.mubr.f32.mxu0 0.0
    %3384 = vmatmul.mubr.f32.gmra.mrb[0].mxu0 %v3303
    %v3385 = vpop.f32.mrb[0].mxu0
    %v3386 = vadd.f32 0.0, %v3385
    %v3387 = vpop.f32.mrb[0].mxu0
    %3388 = vmatprep.mubr.f32.mxu0 0.0
    %3389 = vmatmul.mubr.f32.gmra.mrb[0].mxu0 %v3306
    %v3390 = vpop.f32.mrb[0].mxu0
    %v3391 = vadd.f32 0.0, %v3390
    %v3392 = vpop.f32.mrb[0].mxu0
    %3393 = vmatprep.mubr.f32.mxu0 0.0
    %3394 = vmatmul.mubr.f32.gmra.mrb[0].mxu0 %v3309
    %v3395 = vpop.f32.mrb[0].mxu0
    %v3396 = vadd.f32 0.0, %v3395
    %v3397 = vpop.f32.mrb[0].mxu0
    %3398 = vdwg.mxu0
    %v3399 = vadd.f32 %v3205, %v3381
    %v3400 = vadd.f32 %v3206, %v3386
    %v3401 = vadd.f32 %v3207, %v3391
    %v3402 = vadd.f32 %v3208, %v3396
    %s3403 = scalar_lea.vmem %s6, 224
    %v3404 = vld [vmem:[%s3403] sm:$0xff]
    %v3405 = vld [vmem:[%s3403 + $0x8] sm:$0xff]
    %v3406 = vld [vmem:[%s3403 + $0x10] sm:$0xff]
    %v3407 = vld [vmem:[%s3403 + $0x18] sm:$0xff]
    %3408 = vmatprep.subr.mxu0 0.0
    %3409 = vmatpush1.msra.mxu0 %v3404
    %3410 = vmatprep.subr.mxu0 0.0
    %3411 = vmatpush1.msra.mxu0 %v3405
    %3412 = vmatprep.subr.mxu0 0.0
    %3413 = vmatpush1.msra.mxu0 %v3406
    %3414 = vmatprep.subr.mxu0 0.0
    %3415 = vmatpush1.msra.mxu0 %v3407
    %3416 = vmatprep.subr.mxu0 0.0
    %3417 = vmatpush1.msra.mxu0 0.0
    %3418 = vmatprep.subr.mxu0 0.0
    %3419 = vmatpush1.msra.mxu0 0.0
    %3420 = vmatprep.subr.mxu0 0.0
    %3421 = vmatpush1.msra.mxu0 0.0
    %3422 = vmatprep.subr.mxu0 0.0
    %3423 = vmatpush1.msra.mxu0 0.0
    %3424 = vmatprep.subr.mxu0 0.0
    %3425 = vmatpush1.msra.mxu0 0.0
    %3426 = vmatprep.subr.mxu0 0.0
    %3427 = vmatpush1.msra.mxu0 0.0
    %3428 = vmatprep.subr.mxu0 0.0
    %3429 = vmatpush1.msra.mxu0 0.0
    %3430 = vmatprep.subr.mxu0 0.0
    %3431 = vmatpush1.msra.mxu0 0.0
    %3432 = vmatprep.subr.mxu0 0.0
    %3433 = vmatpush1.msra.mxu0 0.0
    %3434 = vmatprep.subr.mxu0 0.0
    %3435 = vmatpush1.msra.mxu0 0.0
    %3436 = vmatprep.subr.mxu0 0.0
    %3437 = vmatpush1.msra.mxu0 0.0
    %3438 = vmatprep.subr.mxu0 0.0
    %3439 = vmatpush1.msra.mxu0 0.0
    %3440 = vmatprep.subr.mxu0 0.0
    %3441 = vmatpush1.msra.mxu0 0.0
    %3442 = vmatprep.subr.mxu0 0.0
    %3443 = vmatpush1.msra.mxu0 0.0
    %3444 = vmatprep.subr.mxu0 0.0
    %3445 = vmatpush1.msra.mxu0 0.0
    %3446 = vmatprep.subr.mxu0 0.0
    %3447 = vmatpush1.msra.mxu0 0.0
    %3448 = vmatprep.subr.mxu0 0.0
    %3449 = vmatpush1.msra.mxu0 0.0
    %3450 = vmatprep.subr.mxu0 0.0
    %3451 = vmatpush1.msra.mxu0 0.0
    %3452 = vmatprep.subr.mxu0 0.0
    %3453 = vmatpush1.msra.mxu0 0.0
    %3454 = vmatprep.subr.mxu0 0.0
    %3455 = vmatpush1.msra.mxu0 0.0
    %3456 = vmatprep.subr.mxu0 0.0
    %3457 = vmatpush1.msra.mxu0 0.0
    %3458 = vmatprep.subr.mxu0 0.0
    %3459 = vmatpush1.msra.mxu0 0.0
    %3460 = vmatprep.subr.mxu0 0.0
    %3461 = vmatpush1.msra.mxu0 0.0
    %3462 = vmatprep.subr.mxu0 0.0
    %3463 = vmatpush1.msra.mxu0 0.0
    %3464 = vmatprep.subr.mxu0 0.0
    %3465 = vmatpush1.msra.mxu0 0.0
    %3466 = vmatprep.subr.mxu0 0.0
    %3467 = vmatpush1.msra.mxu0 0.0
    %3468 = vmatprep.subr.mxu0 0.0
    %3469 = vmatpush1.msra.mxu0 0.0
    %3470 = vmatprep.subr.mxu0 0.0
    %3471 = vmatpush1.msra.mxu0 0.0
    %3472 = vmatprep.mubr.f32.mxu0 0.0
    %3473 = vmatmul.mubr.f32.gmra.mrb[0].mxu0 %v2050
    %v3474 = vpop.f32.mrb[0].mxu0
    %v3475 = vadd.f32 0.0, %v3474
    %v3476 = vpop.f32.mrb[0].mxu0
    %3477 = vmatprep.mubr.f32.mxu0 0.0
    %3478 = vmatmul.mubr.f32.gmra.mrb[0].mxu0 %v2053
    %v3479 = vpop.f32.mrb[0].mxu0
    %v3480 = vadd.f32 0.0, %v3479
    %v3481 = vpop.f32.mrb[0].mxu0
    %3482 = vmatprep.mubr.f32.mxu0 0.0
    %3483 = vmatmul.mubr.f32.gmra.mrb[0].mxu0 %v2056
    %v3484 = vpop.f32.mrb[0].mxu0
    %v3485 = vadd.f32 0.0, %v3484
    %v3486 = vpop.f32.mrb[0].mxu0
    %3487 = vdwg.mxu0
    %s3488 = scalar_lea.vmem %s5, 224
    %v3489 = vld [vmem:[%s3488] sm:$0xff]
    %v3490 = vld [vmem:[%s3488 + $0x8] sm:$0xff]
    %v3491 = vld [vmem:[%s3488 + $0x10] sm:$0xff]
    %v3492 = vld [vmem:[%s3488 + $0x18] sm:$0xff]
    %v3494 = vsel %vm2232, %v3489, 0
    %v3497 = vsel %vm2232, %v3490, 0
    %v3500 = vsel %vm2232, %v3491, 0
    %v3503 = vsel %vm2232, %v3492, 0
    %v3506 = vsel %vm166, %v3485, 0
    %3508 = vmatprep.subr.mxu0 0.0
    %3509 = vmatpush1.msra.mxu0 %v3475
    %3510 = vmatprep.subr.mxu0 0.0
    %3511 = vmatpush1.msra.mxu0 %v3480
    %3512 = vmatprep.subr.mxu0 0.0
    %3513 = vmatpush1.msra.mxu0 %v3506
    %3514 = vmatprep.subr.mxu0 0.0
    %3515 = vmatpush1.msra.mxu0 0.0
    %3516 = vmatprep.subr.mxu0 0.0
    %3517 = vmatpush1.msra.mxu0 0.0
    %3518 = vmatprep.subr.mxu0 0.0
    %3519 = vmatpush1.msra.mxu0 0.0
    %3520 = vmatprep.subr.mxu0 0.0
    %3521 = vmatpush1.msra.mxu0 0.0
    %3522 = vmatprep.subr.mxu0 0.0
    %3523 = vmatpush1.msra.mxu0 0.0
    %3524 = vmatprep.subr.mxu0 0.0
    %3525 = vmatpush1.msra.mxu0 0.0
    %3526 = vmatprep.subr.mxu0 0.0
    %3527 = vmatpush1.msra.mxu0 0.0
    %3528 = vmatprep.subr.mxu0 0.0
    %3529 = vmatpush1.msra.mxu0 0.0
    %3530 = vmatprep.subr.mxu0 0.0
    %3531 = vmatpush1.msra.mxu0 0.0
    %3532 = vmatprep.subr.mxu0 0.0
    %3533 = vmatpush1.msra.mxu0 0.0
    %3534 = vmatprep.subr.mxu0 0.0
    %3535 = vmatpush1.msra.mxu0 0.0
    %3536 = vmatprep.subr.mxu0 0.0
    %3537 = vmatpush1.msra.mxu0 0.0
    %3538 = vmatprep.subr.mxu0 0.0
    %3539 = vmatpush1.msra.mxu0 0.0
    %3540 = vmatprep.subr.mxu0 0.0
    %3541 = vmatpush1.msra.mxu0 0.0
    %3542 = vmatprep.subr.mxu0 0.0
    %3543 = vmatpush1.msra.mxu0 0.0
    %3544 = vmatprep.subr.mxu0 0.0
    %3545 = vmatpush1.msra.mxu0 0.0
    %3546 = vmatprep.subr.mxu0 0.0
    %3547 = vmatpush1.msra.mxu0 0.0
    %3548 = vmatprep.subr.mxu0 0.0
    %3549 = vmatpush1.msra.mxu0 0.0
    %3550 = vmatprep.subr.mxu0 0.0
    %3551 = vmatpush1.msra.mxu0 0.0
    %3552 = vmatprep.subr.mxu0 0.0
    %3553 = vmatpush1.msra.mxu0 0.0
    %3554 = vmatprep.subr.mxu0 0.0
    %3555 = vmatpush1.msra.mxu0 0.0
    %3556 = vmatprep.subr.mxu0 0.0
    %3557 = vmatpush1.msra.mxu0 0.0
    %3558 = vmatprep.subr.mxu0 0.0
    %3559 = vmatpush1.msra.mxu0 0.0
    %3560 = vmatprep.subr.mxu0 0.0
    %3561 = vmatpush1.msra.mxu0 0.0
    %3562 = vmatprep.subr.mxu0 0.0
    %3563 = vmatpush1.msra.mxu0 0.0
    %3564 = vmatprep.subr.mxu0 0.0
    %3565 = vmatpush1.msra.mxu0 0.0
    %3566 = vmatprep.subr.mxu0 0.0
    %3567 = vmatpush1.msra.mxu0 0.0
    %3568 = vmatprep.subr.mxu0 0.0
    %3569 = vmatpush1.msra.mxu0 0.0
    %3570 = vmatprep.subr.mxu0 0.0
    %3571 = vmatpush1.msra.mxu0 0.0
    %3572 = vmatprep.mubr.f32.mxu0 0.0
    %3573 = vmatmul.mubr.f32.gmra.mrb[0].mxu0 %v3494
    %v3574 = vpop.f32.mrb[0].mxu0
    %v3575 = vadd.f32 0.0, %v3574
    %v3576 = vpop.f32.mrb[0].mxu0
    %3577 = vmatprep.mubr.f32.mxu0 0.0
    %3578 = vmatmul.mubr.f32.gmra.mrb[0].mxu0 %v3497
    %v3579 = vpop.f32.mrb[0].mxu0
    %v3580 = vadd.f32 0.0, %v3579
    %v3581 = vpop.f32.mrb[0].mxu0
    %3582 = vmatprep.mubr.f32.mxu0 0.0
    %3583 = vmatmul.mubr.f32.gmra.mrb[0].mxu0 %v3500
    %v3584 = vpop.f32.mrb[0].mxu0
    %v3585 = vadd.f32 0.0, %v3584
    %v3586 = vpop.f32.mrb[0].mxu0
    %3587 = vmatprep.mubr.f32.mxu0 0.0
    %3588 = vmatmul.mubr.f32.gmra.mrb[0].mxu0 %v3503
    %v3589 = vpop.f32.mrb[0].mxu0
    %v3590 = vadd.f32 0.0, %v3589
    %v3591 = vpop.f32.mrb[0].mxu0
    %3592 = vdwg.mxu0
    %v3593 = vadd.f32 %v3399, %v3575
    %v3594 = vadd.f32 %v3400, %v3580
    %v3595 = vadd.f32 %v3401, %v3585
    %v3596 = vadd.f32 %v3402, %v3590
    %s3597 = scalar_lea.vmem %s6, 256
    %v3598 = vld [vmem:[%s3597] sm:$0xff]
    %v3599 = vld [vmem:[%s3597 + $0x8] sm:$0xff]
    %v3600 = vld [vmem:[%s3597 + $0x10] sm:$0xff]
    %v3601 = vld [vmem:[%s3597 + $0x18] sm:$0xff]
    %3602 = vmatprep.subr.mxu0 0.0
    %3603 = vmatpush1.msra.mxu0 %v3598
    %3604 = vmatprep.subr.mxu0 0.0
    %3605 = vmatpush1.msra.mxu0 %v3599
    %3606 = vmatprep.subr.mxu0 0.0
    %3607 = vmatpush1.msra.mxu0 %v3600
    %3608 = vmatprep.subr.mxu0 0.0
    %3609 = vmatpush1.msra.mxu0 %v3601
    %3610 = vmatprep.subr.mxu0 0.0
    %3611 = vmatpush1.msra.mxu0 0.0
    %3612 = vmatprep.subr.mxu0 0.0
    %3613 = vmatpush1.msra.mxu0 0.0
    %3614 = vmatprep.subr.mxu0 0.0
    %3615 = vmatpush1.msra.mxu0 0.0
    %3616 = vmatprep.subr.mxu0 0.0
    %3617 = vmatpush1.msra.mxu0 0.0
    %3618 = vmatprep.subr.mxu0 0.0
    %3619 = vmatpush1.msra.mxu0 0.0
    %3620 = vmatprep.subr.mxu0 0.0
    %3621 = vmatpush1.msra.mxu0 0.0
    %3622 = vmatprep.subr.mxu0 0.0
    %3623 = vmatpush1.msra.mxu0 0.0
    %3624 = vmatprep.subr.mxu0 0.0
    %3625 = vmatpush1.msra.mxu0 0.0
    %3626 = vmatprep.subr.mxu0 0.0
    %3627 = vmatpush1.msra.mxu0 0.0
    %3628 = vmatprep.subr.mxu0 0.0
    %3629 = vmatpush1.msra.mxu0 0.0
    %3630 = vmatprep.subr.mxu0 0.0
    %3631 = vmatpush1.msra.mxu0 0.0
    %3632 = vmatprep.subr.mxu0 0.0
    %3633 = vmatpush1.msra.mxu0 0.0
    %3634 = vmatprep.subr.mxu0 0.0
    %3635 = vmatpush1.msra.mxu0 0.0
    %3636 = vmatprep.subr.mxu0 0.0
    %3637 = vmatpush1.msra.mxu0 0.0
    %3638 = vmatprep.subr.mxu0 0.0
    %3639 = vmatpush1.msra.mxu0 0.0
    %3640 = vmatprep.subr.mxu0 0.0
    %3641 = vmatpush1.msra.mxu0 0.0
    %3642 = vmatprep.subr.mxu0 0.0
    %3643 = vmatpush1.msra.mxu0 0.0
    %3644 = vmatprep.subr.mxu0 0.0
    %3645 = vmatpush1.msra.mxu0 0.0
    %3646 = vmatprep.subr.mxu0 0.0
    %3647 = vmatpush1.msra.mxu0 0.0
    %3648 = vmatprep.subr.mxu0 0.0
    %3649 = vmatpush1.msra.mxu0 0.0
    %3650 = vmatprep.subr.mxu0 0.0
    %3651 = vmatpush1.msra.mxu0 0.0
    %3652 = vmatprep.subr.mxu0 0.0
    %3653 = vmatpush1.msra.mxu0 0.0
    %3654 = vmatprep.subr.mxu0 0.0
    %3655 = vmatpush1.msra.mxu0 0.0
    %3656 = vmatprep.subr.mxu0 0.0
    %3657 = vmatpush1.msra.mxu0 0.0
    %3658 = vmatprep.subr.mxu0 0.0
    %3659 = vmatpush1.msra.mxu0 0.0
    %3660 = vmatprep.subr.mxu0 0.0
    %3661 = vmatpush1.msra.mxu0 0.0
    %3662 = vmatprep.subr.mxu0 0.0
    %3663 = vmatpush1.msra.mxu0 0.0
    %3664 = vmatprep.subr.mxu0 0.0
    %3665 = vmatpush1.msra.mxu0 0.0
    %3666 = vmatprep.mubr.f32.mxu0 0.0
    %3667 = vmatmul.mubr.f32.gmra.mrb[0].mxu0 %v2050
    %v3668 = vpop.f32.mrb[0].mxu0
    %v3669 = vadd.f32 0.0, %v3668
    %v3670 = vpop.f32.mrb[0].mxu0
    %3671 = vmatprep.mubr.f32.mxu0 0.0
    %3672 = vmatmul.mubr.f32.gmra.mrb[0].mxu0 %v2053
    %v3673 = vpop.f32.mrb[0].mxu0
    %v3674 = vadd.f32 0.0, %v3673
    %v3675 = vpop.f32.mrb[0].mxu0
    %3676 = vmatprep.mubr.f32.mxu0 0.0
    %3677 = vmatmul.mubr.f32.gmra.mrb[0].mxu0 %v2056
    %v3678 = vpop.f32.mrb[0].mxu0
    %v3679 = vadd.f32 0.0, %v3678
    %v3680 = vpop.f32.mrb[0].mxu0
    %3681 = vdwg.mxu0
    %s3682 = scalar_lea.vmem %s5, 256
    %v3683 = vld [vmem:[%s3682] sm:$0xff]
    %v3684 = vld [vmem:[%s3682 + $0x8] sm:$0xff]
    %v3685 = vld [vmem:[%s3682 + $0x10] sm:$0xff]
    %v3686 = vld [vmem:[%s3682 + $0x18] sm:$0xff]
    %v3688 = vsel %vm2232, %v3683, 0
    %v3691 = vsel %vm2232, %v3684, 0
    %v3694 = vsel %vm2232, %v3685, 0
    %v3697 = vsel %vm2232, %v3686, 0
    %v3700 = vsel %vm166, %v3679, 0
    %3702 = vmatprep.subr.mxu0 0.0
    %3703 = vmatpush1.msra.mxu0 %v3669
    %3704 = vmatprep.subr.mxu0 0.0
    %3705 = vmatpush1.msra.mxu0 %v3674
    %3706 = vmatprep.subr.mxu0 0.0
    %3707 = vmatpush1.msra.mxu0 %v3700
    %3708 = vmatprep.subr.mxu0 0.0
    %3709 = vmatpush1.msra.mxu0 0.0
    %3710 = vmatprep.subr.mxu0 0.0
    %3711 = vmatpush1.msra.mxu0 0.0
    %3712 = vmatprep.subr.mxu0 0.0
    %3713 = vmatpush1.msra.mxu0 0.0
    %3714 = vmatprep.subr.mxu0 0.0
    %3715 = vmatpush1.msra.mxu0 0.0
    %3716 = vmatprep.subr.mxu0 0.0
    %3717 = vmatpush1.msra.mxu0 0.0
    %3718 = vmatprep.subr.mxu0 0.0
    %3719 = vmatpush1.msra.mxu0 0.0
    %3720 = vmatprep.subr.mxu0 0.0
    %3721 = vmatpush1.msra.mxu0 0.0
    %3722 = vmatprep.subr.mxu0 0.0
    %3723 = vmatpush1.msra.mxu0 0.0
    %3724 = vmatprep.subr.mxu0 0.0
    %3725 = vmatpush1.msra.mxu0 0.0
    %3726 = vmatprep.subr.mxu0 0.0
    %3727 = vmatpush1.msra.mxu0 0.0
    %3728 = vmatprep.subr.mxu0 0.0
    %3729 = vmatpush1.msra.mxu0 0.0
    %3730 = vmatprep.subr.mxu0 0.0
    %3731 = vmatpush1.msra.mxu0 0.0
    %3732 = vmatprep.subr.mxu0 0.0
    %3733 = vmatpush1.msra.mxu0 0.0
    %3734 = vmatprep.subr.mxu0 0.0
    %3735 = vmatpush1.msra.mxu0 0.0
    %3736 = vmatprep.subr.mxu0 0.0
    %3737 = vmatpush1.msra.mxu0 0.0
    %3738 = vmatprep.subr.mxu0 0.0
    %3739 = vmatpush1.msra.mxu0 0.0
    %3740 = vmatprep.subr.mxu0 0.0
    %3741 = vmatpush1.msra.mxu0 0.0
    %3742 = vmatprep.subr.mxu0 0.0
    %3743 = vmatpush1.msra.mxu0 0.0
    %3744 = vmatprep.subr.mxu0 0.0
    %3745 = vmatpush1.msra.mxu0 0.0
    %3746 = vmatprep.subr.mxu0 0.0
    %3747 = vmatpush1.msra.mxu0 0.0
    %3748 = vmatprep.subr.mxu0 0.0
    %3749 = vmatpush1.msra.mxu0 0.0
    %3750 = vmatprep.subr.mxu0 0.0
    %3751 = vmatpush1.msra.mxu0 0.0
    %3752 = vmatprep.subr.mxu0 0.0
    %3753 = vmatpush1.msra.mxu0 0.0
    %3754 = vmatprep.subr.mxu0 0.0
    %3755 = vmatpush1.msra.mxu0 0.0
    %3756 = vmatprep.subr.mxu0 0.0
    %3757 = vmatpush1.msra.mxu0 0.0
    %3758 = vmatprep.subr.mxu0 0.0
    %3759 = vmatpush1.msra.mxu0 0.0
    %3760 = vmatprep.subr.mxu0 0.0
    %3761 = vmatpush1.msra.mxu0 0.0
    %3762 = vmatprep.subr.mxu0 0.0
    %3763 = vmatpush1.msra.mxu0 0.0
    %3764 = vmatprep.subr.mxu0 0.0
    %3765 = vmatpush1.msra.mxu0 0.0
    %3766 = vmatprep.mubr.f32.mxu0 0.0
    %3767 = vmatmul.mubr.f32.gmra.mrb[0].mxu0 %v3688
    %v3768 = vpop.f32.mrb[0].mxu0
    %v3769 = vadd.f32 0.0, %v3768
    %v3770 = vpop.f32.mrb[0].mxu0
    %3771 = vmatprep.mubr.f32.mxu0 0.0
    %3772 = vmatmul.mubr.f32.gmra.mrb[0].mxu0 %v3691
    %v3773 = vpop.f32.mrb[0].mxu0
    %v3774 = vadd.f32 0.0, %v3773
    %v3775 = vpop.f32.mrb[0].mxu0
    %3776 = vmatprep.mubr.f32.mxu0 0.0
    %3777 = vmatmul.mubr.f32.gmra.mrb[0].mxu0 %v3694
    %v3778 = vpop.f32.mrb[0].mxu0
    %v3779 = vadd.f32 0.0, %v3778
    %v3780 = vpop.f32.mrb[0].mxu0
    %3781 = vmatprep.mubr.f32.mxu0 0.0
    %3782 = vmatmul.mubr.f32.gmra.mrb[0].mxu0 %v3697
    %v3783 = vpop.f32.mrb[0].mxu0
    %v3784 = vadd.f32 0.0, %v3783
    %v3785 = vpop.f32.mrb[0].mxu0
    %3786 = vdwg.mxu0
    %v3787 = vadd.f32 %v3593, %v3769
    %v3788 = vadd.f32 %v3594, %v3774
    %v3789 = vadd.f32 %v3595, %v3779
    %v3790 = vadd.f32 %v3596, %v3784
    %v3791 = vld [vmem:[%s7] sm:$0x1]
    %v3793 = vlaneseq
    %v3794 = vshrl.u32 %v3793, 7
    %v3795 = vsub.s32 0, %v3794
    %v3796 = vrot.slane %v3791, %v3795
    %v3798 = vadd.f32 %v3787, %v3796
    %v3799 = vadd.f32 %v3788, %v3796
    %v3800 = vadd.f32 %v3789, %v3796
    %v3801 = vadd.f32 %v3790, %v3796
    %v3802 = vmax.f32 %v3798, 0.0
    %v3803 = vmax.f32 %v3799, 0.0
    %v3804 = vmax.f32 %v3800, 0.0
    %v3805 = vmax.f32 %v3801, 0.0
    %v3806 = vld [vmem:[%s8] sm:$0xff]
    %v3808 = vsel %vm2048, %v3806, 0
    %3810 = vmatprep.subr.mxu0 0.0
    %3811 = vmatpush1.msra.mxu0 %v3802
    %3812 = vmatprep.subr.mxu0 0.0
    %3813 = vmatpush1.msra.mxu0 %v3803
    %3814 = vmatprep.subr.mxu0 0.0
    %3815 = vmatpush1.msra.mxu0 %v3804
    %3816 = vmatprep.subr.mxu0 0.0
    %3817 = vmatpush1.msra.mxu0 %v3805
    %3818 = vmatprep.subr.mxu0 0.0
    %3819 = vmatpush1.msra.mxu0 0.0
    %3820 = vmatprep.subr.mxu0 0.0
    %3821 = vmatpush1.msra.mxu0 0.0
    %3822 = vmatprep.subr.mxu0 0.0
    %3823 = vmatpush1.msra.mxu0 0.0
    %3824 = vmatprep.subr.mxu0 0.0
    %3825 = vmatpush1.msra.mxu0 0.0
    %3826 = vmatprep.subr.mxu0 0.0
    %3827 = vmatpush1.msra.mxu0 0.0
    %3828 = vmatprep.subr.mxu0 0.0
    %3829 = vmatpush1.msra.mxu0 0.0
    %3830 = vmatprep.subr.mxu0 0.0
    %3831 = vmatpush1.msra.mxu0 0.0
    %3832 = vmatprep.subr.mxu0 0.0
    %3833 = vmatpush1.msra.mxu0 0.0
    %3834 = vmatprep.subr.mxu0 0.0
    %3835 = vmatpush1.msra.mxu0 0.0
    %3836 = vmatprep.subr.mxu0 0.0
    %3837 = vmatpush1.msra.mxu0 0.0
    %3838 = vmatprep.subr.mxu0 0.0
    %3839 = vmatpush1.msra.mxu0 0.0
    %3840 = vmatprep.subr.mxu0 0.0
    %3841 = vmatpush1.msra.mxu0 0.0
    %3842 = vmatprep.subr.mxu0 0.0
    %3843 = vmatpush1.msra.mxu0 0.0
    %3844 = vmatprep.subr.mxu0 0.0
    %3845 = vmatpush1.msra.mxu0 0.0
    %3846 = vmatprep.subr.mxu0 0.0
    %3847 = vmatpush1.msra.mxu0 0.0
    %3848 = vmatprep.subr.mxu0 0.0
    %3849 = vmatpush1.msra.mxu0 0.0
    %3850 = vmatprep.subr.mxu0 0.0
    %3851 = vmatpush1.msra.mxu0 0.0
    %3852 = vmatprep.subr.mxu0 0.0
    %3853 = vmatpush1.msra.mxu0 0.0
    %3854 = vmatprep.subr.mxu0 0.0
    %3855 = vmatpush1.msra.mxu0 0.0
    %3856 = vmatprep.subr.mxu0 0.0
    %3857 = vmatpush1.msra.mxu0 0.0
    %3858 = vmatprep.subr.mxu0 0.0
    %3859 = vmatpush1.msra.mxu0 0.0
    %3860 = vmatprep.subr.mxu0 0.0
    %3861 = vmatpush1.msra.mxu0 0.0
    %3862 = vmatprep.subr.mxu0 0.0
    %3863 = vmatpush1.msra.mxu0 0.0
    %3864 = vmatprep.subr.mxu0 0.0
    %3865 = vmatpush1.msra.mxu0 0.0
    %3866 = vmatprep.subr.mxu0 0.0
    %3867 = vmatpush1.msra.mxu0 0.0
    %3868 = vmatprep.subr.mxu0 0.0
    %3869 = vmatpush1.msra.mxu0 0.0
    %3870 = vmatprep.subr.mxu0 0.0
    %3871 = vmatpush1.msra.mxu0 0.0
    %3872 = vmatprep.subr.mxu0 0.0
    %3873 = vmatpush1.msra.mxu0 0.0
    %3874 = vmatprep.mubr.f32.mxu0 0.0
    %3875 = vmatmul.mubr.f32.gmra.mrb[0].mxu0 %v3808
    %v3876 = vpop.f32.mrb[0].mxu0
    %v3877 = vadd.f32 0.0, %v3876
    %v3878 = vpop.f32.mrb[0].mxu0
    %3879 = vdwg.mxu0
    %s3880 = scalar_lea.vmem %s8, 8
    %v3881 = vld [vmem:[%s3880] sm:$0xff]
    %v3883 = vsel %vm2048, %v3881, 0
    %3885 = vmatprep.subr.mxu0 0.0
    %3886 = vmatpush1.msra.mxu0 %v3802
    %3887 = vmatprep.subr.mxu0 0.0
    %3888 = vmatpush1.msra.mxu0 %v3803
    %3889 = vmatprep.subr.mxu0 0.0
    %3890 = vmatpush1.msra.mxu0 %v3804
    %3891 = vmatprep.subr.mxu0 0.0
    %3892 = vmatpush1.msra.mxu0 %v3805
    %3893 = vmatprep.subr.mxu0 0.0
    %3894 = vmatpush1.msra.mxu0 0.0
    %3895 = vmatprep.subr.mxu0 0.0
    %3896 = vmatpush1.msra.mxu0 0.0
    %3897 = vmatprep.subr.mxu0 0.0
    %3898 = vmatpush1.msra.mxu0 0.0
    %3899 = vmatprep.subr.mxu0 0.0
    %3900 = vmatpush1.msra.mxu0 0.0
    %3901 = vmatprep.subr.mxu0 0.0
    %3902 = vmatpush1.msra.mxu0 0.0
    %3903 = vmatprep.subr.mxu0 0.0
    %3904 = vmatpush1.msra.mxu0 0.0
    %3905 = vmatprep.subr.mxu0 0.0
    %3906 = vmatpush1.msra.mxu0 0.0
    %3907 = vmatprep.subr.mxu0 0.0
    %3908 = vmatpush1.msra.mxu0 0.0
    %3909 = vmatprep.subr.mxu0 0.0
    %3910 = vmatpush1.msra.mxu0 0.0
    %3911 = vmatprep.subr.mxu0 0.0
    %3912 = vmatpush1.msra.mxu0 0.0
    %3913 = vmatprep.subr.mxu0 0.0
    %3914 = vmatpush1.msra.mxu0 0.0
    %3915 = vmatprep.subr.mxu0 0.0
    %3916 = vmatpush1.msra.mxu0 0.0
    %3917 = vmatprep.subr.mxu0 0.0
    %3918 = vmatpush1.msra.mxu0 0.0
    %3919 = vmatprep.subr.mxu0 0.0
    %3920 = vmatpush1.msra.mxu0 0.0
    %3921 = vmatprep.subr.mxu0 0.0
    %3922 = vmatpush1.msra.mxu0 0.0
    %3923 = vmatprep.subr.mxu0 0.0
    %3924 = vmatpush1.msra.mxu0 0.0
    %3925 = vmatprep.subr.mxu0 0.0
    %3926 = vmatpush1.msra.mxu0 0.0
    %3927 = vmatprep.subr.mxu0 0.0
    %3928 = vmatpush1.msra.mxu0 0.0
    %3929 = vmatprep.subr.mxu0 0.0
    %3930 = vmatpush1.msra.mxu0 0.0
    %3931 = vmatprep.subr.mxu0 0.0
    %3932 = vmatpush1.msra.mxu0 0.0
    %3933 = vmatprep.subr.mxu0 0.0
    %3934 = vmatpush1.msra.mxu0 0.0
    %3935 = vmatprep.subr.mxu0 0.0
    %3936 = vmatpush1.msra.mxu0 0.0
    %3937 = vmatprep.subr.mxu0 0.0
    %3938 = vmatpush1.msra.mxu0 0.0
    %3939 = vmatprep.subr.mxu0 0.0
    %3940 = vmatpush1.msra.mxu0 0.0
    %3941 = vmatprep.subr.mxu0 0.0
    %3942 = vmatpush1.msra.mxu0 0.0
    %3943 = vmatprep.subr.mxu0 0.0
    %3944 = vmatpush1.msra.mxu0 0.0
    %3945 = vmatprep.subr.mxu0 0.0
    %3946 = vmatpush1.msra.mxu0 0.0
    %3947 = vmatprep.subr.mxu0 0.0
    %3948 = vmatpush1.msra.mxu0 0.0
    %3949 = vmatprep.mubr.f32.mxu0 0.0
    %3950 = vmatmul.mubr.f32.gmra.mrb[0].mxu0 %v3883
    %v3951 = vpop.f32.mrb[0].mxu0
    %v3952 = vadd.f32 0.0, %v3951
    %v3953 = vpop.f32.mrb[0].mxu0
    %3954 = vdwg.mxu0
    %v3955 = vmax.f32 %v3877, %v3952
    %s3956 = scalar_lea.vmem %s8, 16
    %v3957 = vld [vmem:[%s3956] sm:$0xff]
    %v3959 = vsel %vm2048, %v3957, 0
    %3961 = vmatprep.subr.mxu0 0.0
    %3962 = vmatpush1.msra.mxu0 %v3802
    %3963 = vmatprep.subr.mxu0 0.0
    %3964 = vmatpush1.msra.mxu0 %v3803
    %3965 = vmatprep.subr.mxu0 0.0
    %3966 = vmatpush1.msra.mxu0 %v3804
    %3967 = vmatprep.subr.mxu0 0.0
    %3968 = vmatpush1.msra.mxu0 %v3805
    %3969 = vmatprep.subr.mxu0 0.0
    %3970 = vmatpush1.msra.mxu0 0.0
    %3971 = vmatprep.subr.mxu0 0.0
    %3972 = vmatpush1.msra.mxu0 0.0
    %3973 = vmatprep.subr.mxu0 0.0
    %3974 = vmatpush1.msra.mxu0 0.0
    %3975 = vmatprep.subr.mxu0 0.0
    %3976 = vmatpush1.msra.mxu0 0.0
    %3977 = vmatprep.subr.mxu0 0.0
    %3978 = vmatpush1.msra.mxu0 0.0
    %3979 = vmatprep.subr.mxu0 0.0
    %3980 = vmatpush1.msra.mxu0 0.0
    %3981 = vmatprep.subr.mxu0 0.0
    %3982 = vmatpush1.msra.mxu0 0.0
    %3983 = vmatprep.subr.mxu0 0.0
    %3984 = vmatpush1.msra.mxu0 0.0
    %3985 = vmatprep.subr.mxu0 0.0
    %3986 = vmatpush1.msra.mxu0 0.0
    %3987 = vmatprep.subr.mxu0 0.0
    %3988 = vmatpush1.msra.mxu0 0.0
    %3989 = vmatprep.subr.mxu0 0.0
    %3990 = vmatpush1.msra.mxu0 0.0
    %3991 = vmatprep.subr.mxu0 0.0
    %3992 = vmatpush1.msra.mxu0 0.0
    %3993 = vmatprep.subr.mxu0 0.0
    %3994 = vmatpush1.msra.mxu0 0.0
    %3995 = vmatprep.subr.mxu0 0.0
    %3996 = vmatpush1.msra.mxu0 0.0
    %3997 = vmatprep.subr.mxu0 0.0
    %3998 = vmatpush1.msra.mxu0 0.0
    %3999 = vmatprep.subr.mxu0 0.0
    %4000 = vmatpush1.msra.mxu0 0.0
    %4001 = vmatprep.subr.mxu0 0.0
    %4002 = vmatpush1.msra.mxu0 0.0
    %4003 = vmatprep.subr.mxu0 0.0
    %4004 = vmatpush1.msra.mxu0 0.0
    %4005 = vmatprep.subr.mxu0 0.0
    %4006 = vmatpush1.msra.mxu0 0.0
    %4007 = vmatprep.subr.mxu0 0.0
    %4008 = vmatpush1.msra.mxu0 0.0
    %4009 = vmatprep.subr.mxu0 0.0
    %4010 = vmatpush1.msra.mxu0 0.0
    %4011 = vmatprep.subr.mxu0 0.0
    %4012 = vmatpush1.msra.mxu0 0.0
    %4013 = vmatprep.subr.mxu0 0.0
    %4014 = vmatpush1.msra.mxu0 0.0
    %4015 = vmatprep.subr.mxu0 0.0
    %4016 = vmatpush1.msra.mxu0 0.0
    %4017 = vmatprep.subr.mxu0 0.0
    %4018 = vmatpush1.msra.mxu0 0.0
    %4019 = vmatprep.subr.mxu0 0.0
    %4020 = vmatpush1.msra.mxu0 0.0
    %4021 = vmatprep.subr.mxu0 0.0
    %4022 = vmatpush1.msra.mxu0 0.0
    %4023 = vmatprep.subr.mxu0 0.0
    %4024 = vmatpush1.msra.mxu0 0.0
    %4025 = vmatprep.mubr.f32.mxu0 0.0
    %4026 = vmatmul.mubr.f32.gmra.mrb[0].mxu0 %v3959
    %v4027 = vpop.f32.mrb[0].mxu0
    %v4028 = vadd.f32 0.0, %v4027
    %v4029 = vpop.f32.mrb[0].mxu0
    %4030 = vdwg.mxu0
    %v4031 = vmax.f32 %v3955, %v4028
    %s4032 = scalar_lea.vmem %s8, 24
    %v4033 = vld [vmem:[%s4032] sm:$0xff]
    %v4035 = vsel %vm2048, %v4033, 0
    %4037 = vmatprep.subr.mxu0 0.0
    %4038 = vmatpush1.msra.mxu0 %v3802
    %4039 = vmatprep.subr.mxu0 0.0
    %4040 = vmatpush1.msra.mxu0 %v3803
    %4041 = vmatprep.subr.mxu0 0.0
    %4042 = vmatpush1.msra.mxu0 %v3804
    %4043 = vmatprep.subr.mxu0 0.0
    %4044 = vmatpush1.msra.mxu0 %v3805
    %4045 = vmatprep.subr.mxu0 0.0
    %4046 = vmatpush1.msra.mxu0 0.0
    %4047 = vmatprep.subr.mxu0 0.0
    %4048 = vmatpush1.msra.mxu0 0.0
    %4049 = vmatprep.subr.mxu0 0.0
    %4050 = vmatpush1.msra.mxu0 0.0
    %4051 = vmatprep.subr.mxu0 0.0
    %4052 = vmatpush1.msra.mxu0 0.0
    %4053 = vmatprep.subr.mxu0 0.0
    %4054 = vmatpush1.msra.mxu0 0.0
    %4055 = vmatprep.subr.mxu0 0.0
    %4056 = vmatpush1.msra.mxu0 0.0
    %4057 = vmatprep.subr.mxu0 0.0
    %4058 = vmatpush1.msra.mxu0 0.0
    %4059 = vmatprep.subr.mxu0 0.0
    %4060 = vmatpush1.msra.mxu0 0.0
    %4061 = vmatprep.subr.mxu0 0.0
    %4062 = vmatpush1.msra.mxu0 0.0
    %4063 = vmatprep.subr.mxu0 0.0
    %4064 = vmatpush1.msra.mxu0 0.0
    %4065 = vmatprep.subr.mxu0 0.0
    %4066 = vmatpush1.msra.mxu0 0.0
    %4067 = vmatprep.subr.mxu0 0.0
    %4068 = vmatpush1.msra.mxu0 0.0
    %4069 = vmatprep.subr.mxu0 0.0
    %4070 = vmatpush1.msra.mxu0 0.0
    %4071 = vmatprep.subr.mxu0 0.0
    %4072 = vmatpush1.msra.mxu0 0.0
    %4073 = vmatprep.subr.mxu0 0.0
    %4074 = vmatpush1.msra.mxu0 0.0
    %4075 = vmatprep.subr.mxu0 0.0
    %4076 = vmatpush1.msra.mxu0 0.0
    %4077 = vmatprep.subr.mxu0 0.0
    %4078 = vmatpush1.msra.mxu0 0.0
    %4079 = vmatprep.subr.mxu0 0.0
    %4080 = vmatpush1.msra.mxu0 0.0
    %4081 = vmatprep.subr.mxu0 0.0
    %4082 = vmatpush1.msra.mxu0 0.0
    %4083 = vmatprep.subr.mxu0 0.0
    %4084 = vmatpush1.msra.mxu0 0.0
    %4085 = vmatprep.subr.mxu0 0.0
    %4086 = vmatpush1.msra.mxu0 0.0
    %4087 = vmatprep.subr.mxu0 0.0
    %4088 = vmatpush1.msra.mxu0 0.0
    %4089 = vmatprep.subr.mxu0 0.0
    %4090 = vmatpush1.msra.mxu0 0.0
    %4091 = vmatprep.subr.mxu0 0.0
    %4092 = vmatpush1.msra.mxu0 0.0
    %4093 = vmatprep.subr.mxu0 0.0
    %4094 = vmatpush1.msra.mxu0 0.0
    %4095 = vmatprep.subr.mxu0 0.0
    %4096 = vmatpush1.msra.mxu0 0.0
    %4097 = vmatprep.subr.mxu0 0.0
    %4098 = vmatpush1.msra.mxu0 0.0
    %4099 = vmatprep.subr.mxu0 0.0
    %4100 = vmatpush1.msra.mxu0 0.0
    %4101 = vmatprep.mubr.f32.mxu0 0.0
    %4102 = vmatmul.mubr.f32.gmra.mrb[0].mxu0 %v4035
    %v4103 = vpop.f32.mrb[0].mxu0
    %v4104 = vadd.f32 0.0, %v4103
    %v4105 = vpop.f32.mrb[0].mxu0
    %4106 = vdwg.mxu0
    %v4107 = vmax.f32 %v4031, %v4104
    %v4108 = vld [vmem:[%s9] sm:$0x3]
    %vm4109 = vcmask 64512
    %v4111 = vsel %vm4109, %v4108, 0
    %4113 = vmatprep.subr.mxu0 0.0
    %4114 = vmatpush1.msra.mxu0 %v4107
    %4115 = vmatprep.subr.mxu0 0.0
    %4116 = vmatpush1.msra.mxu0 0.0
    %4117 = vmatprep.subr.mxu0 0.0
    %4118 = vmatpush1.msra.mxu0 0.0
    %4119 = vmatprep.subr.mxu0 0.0
    %4120 = vmatpush1.msra.mxu0 0.0
    %4121 = vmatprep.subr.mxu0 0.0
    %4122 = vmatpush1.msra.mxu0 0.0
    %4123 = vmatprep.subr.mxu0 0.0
    %4124 = vmatpush1.msra.mxu0 0.0
    %4125 = vmatprep.subr.mxu0 0.0
    %4126 = vmatpush1.msra.mxu0 0.0
    %4127 = vmatprep.subr.mxu0 0.0
    %4128 = vmatpush1.msra.mxu0 0.0
    %4129 = vmatprep.subr.mxu0 0.0
    %4130 = vmatpush1.msra.mxu0 0.0
    %4131 = vmatprep.subr.mxu0 0.0
    %4132 = vmatpush1.msra.mxu0 0.0
    %4133 = vmatprep.subr.mxu0 0.0
    %4134 = vmatpush1.msra.mxu0 0.0
    %4135 = vmatprep.subr.mxu0 0.0
    %4136 = vmatpush1.msra.mxu0 0.0
    %4137 = vmatprep.subr.mxu0 0.0
    %4138 = vmatpush1.msra.mxu0 0.0
    %4139 = vmatprep.subr.mxu0 0.0
    %4140 = vmatpush1.msra.mxu0 0.0
    %4141 = vmatprep.subr.mxu0 0.0
    %4142 = vmatpush1.msra.mxu0 0.0
    %4143 = vmatprep.subr.mxu0 0.0
    %4144 = vmatpush1.msra.mxu0 0.0
    %4145 = vmatprep.subr.mxu0 0.0
    %4146 = vmatpush1.msra.mxu0 0.0
    %4147 = vmatprep.subr.mxu0 0.0
    %4148 = vmatpush1.msra.mxu0 0.0
    %4149 = vmatprep.subr.mxu0 0.0
    %4150 = vmatpush1.msra.mxu0 0.0
    %4151 = vmatprep.subr.mxu0 0.0
    %4152 = vmatpush1.msra.mxu0 0.0
    %4153 = vmatprep.subr.mxu0 0.0
    %4154 = vmatpush1.msra.mxu0 0.0
    %4155 = vmatprep.subr.mxu0 0.0
    %4156 = vmatpush1.msra.mxu0 0.0
    %4157 = vmatprep.subr.mxu0 0.0
    %4158 = vmatpush1.msra.mxu0 0.0
    %4159 = vmatprep.subr.mxu0 0.0
    %4160 = vmatpush1.msra.mxu0 0.0
    %4161 = vmatprep.subr.mxu0 0.0
    %4162 = vmatpush1.msra.mxu0 0.0
    %4163 = vmatprep.subr.mxu0 0.0
    %4164 = vmatpush1.msra.mxu0 0.0
    %4165 = vmatprep.subr.mxu0 0.0
    %4166 = vmatpush1.msra.mxu0 0.0
    %4167 = vmatprep.subr.mxu0 0.0
    %4168 = vmatpush1.msra.mxu0 0.0
    %4169 = vmatprep.subr.mxu0 0.0
    %4170 = vmatpush1.msra.mxu0 0.0
    %4171 = vmatprep.subr.mxu0 0.0
    %4172 = vmatpush1.msra.mxu0 0.0
    %4173 = vmatprep.subr.mxu0 0.0
    %4174 = vmatpush1.msra.mxu0 0.0
    %4175 = vmatprep.subr.mxu0 0.0
    %4176 = vmatpush1.msra.mxu0 0.0
    %4177 = vmatprep.mubr.f32.mxu0 0.0
    %4178 = vmatmul.mubr.f32.gmra.mrb[0].mxu0 %v4111
    %v4179 = vpop.f32.mrb[0].mxu0
    %v4180 = vadd.f32 0.0, %v4179
    %v4181 = vpop.f32.mrb[0].mxu0
    %4182 = vdwg.mxu0
    %v4183 = vld [vmem:[%s10] sm:$0xff]
    %v4184 = vld [vmem:[%s10 + $0x8] sm:$0xff]
    %v4185 = vld [vmem:[%s10 + $0x10] sm:$0xff]
    %v4186 = vld [vmem:[%s10 + $0x18] sm:$0xff]
    %v4187 = vld [vmem:[%s10 + $0x20] sm:$0xff]
    %v4188 = vld [vmem:[%s10 + $0x28] sm:$0xff]
    %v4189 = vld [vmem:[%s10 + $0x30] sm:$0xff]
    %v4190 = vld [vmem:[%s10 + $0x38] sm:$0xff]
    %s4191 = scalar_lea.vmem %s9, 2
    %v4192 = vld [vmem:[%s4191] sm:$0x3]
    %v4194 = vsel %vm4109, %v4192, 0
    %4196 = vmatprep.subr.mxu0 0.0
    %4197 = vmatpush1.msra.mxu0 %v4107
    %4198 = vmatprep.subr.mxu0 0.0
    %4199 = vmatpush1.msra.mxu0 0.0
    %4200 = vmatprep.subr.mxu0 0.0
    %4201 = vmatpush1.msra.mxu0 0.0
    %4202 = vmatprep.subr.mxu0 0.0
    %4203 = vmatpush1.msra.mxu0 0.0
    %4204 = vmatprep.subr.mxu0 0.0
    %4205 = vmatpush1.msra.mxu0 0.0
    %4206 = vmatprep.subr.mxu0 0.0
    %4207 = vmatpush1.msra.mxu0 0.0
    %4208 = vmatprep.subr.mxu0 0.0
    %4209 = vmatpush1.msra.mxu0 0.0
    %4210 = vmatprep.subr.mxu0 0.0
    %4211 = vmatpush1.msra.mxu0 0.0
    %4212 = vmatprep.subr.mxu0 0.0
    %4213 = vmatpush1.msra.mxu0 0.0
    %4214 = vmatprep.subr.mxu0 0.0
    %4215 = vmatpush1.msra.mxu0 0.0
    %4216 = vmatprep.subr.mxu0 0.0
    %4217 = vmatpush1.msra.mxu0 0.0
    %4218 = vmatprep.subr.mxu0 0.0
    %4219 = vmatpush1.msra.mxu0 0.0
    %4220 = vmatprep.subr.mxu0 0.0
    %4221 = vmatpush1.msra.mxu0 0.0
    %4222 = vmatprep.subr.mxu0 0.0
    %4223 = vmatpush1.msra.mxu0 0.0
    %4224 = vmatprep.subr.mxu0 0.0
    %4225 = vmatpush1.msra.mxu0 0.0
    %4226 = vmatprep.subr.mxu0 0.0
    %4227 = vmatpush1.msra.mxu0 0.0
    %4228 = vmatprep.subr.mxu0 0.0
    %4229 = vmatpush1.msra.mxu0 0.0
    %4230 = vmatprep.subr.mxu0 0.0
    %4231 = vmatpush1.msra.mxu0 0.0
    %4232 = vmatprep.subr.mxu0 0.0
    %4233 = vmatpush1.msra.mxu0 0.0
    %4234 = vmatprep.subr.mxu0 0.0
    %4235 = vmatpush1.msra.mxu0 0.0
    %4236 = vmatprep.subr.mxu0 0.0
    %4237 = vmatpush1.msra.mxu0 0.0
    %4238 = vmatprep.subr.mxu0 0.0
    %4239 = vmatpush1.msra.mxu0 0.0
    %4240 = vmatprep.subr.mxu0 0.0
    %4241 = vmatpush1.msra.mxu0 0.0
    %4242 = vmatprep.subr.mxu0 0.0
    %4243 = vmatpush1.msra.mxu0 0.0
    %4244 = vmatprep.subr.mxu0 0.0
    %4245 = vmatpush1.msra.mxu0 0.0
    %4246 = vmatprep.subr.mxu0 0.0
    %4247 = vmatpush1.msra.mxu0 0.0
    %4248 = vmatprep.subr.mxu0 0.0
    %4249 = vmatpush1.msra.mxu0 0.0
    %4250 = vmatprep.subr.mxu0 0.0
    %4251 = vmatpush1.msra.mxu0 0.0
    %4252 = vmatprep.subr.mxu0 0.0
    %4253 = vmatpush1.msra.mxu0 0.0
    %4254 = vmatprep.subr.mxu0 0.0
    %4255 = vmatpush1.msra.mxu0 0.0
    %4256 = vmatprep.subr.mxu0 0.0
    %4257 = vmatpush1.msra.mxu0 0.0
    %4258 = vmatprep.subr.mxu0 0.0
    %4259 = vmatpush1.msra.mxu0 0.0
    %4260 = vmatprep.mubr.f32.mxu0 0.0
    %4261 = vmatmul.mubr.f32.gmra.mrb[0].mxu0 %v4194
    %v4262 = vpop.f32.mrb[0].mxu0
    %v4263 = vadd.f32 0.0, %v4262
    %v4264 = vpop.f32.mrb[0].mxu0
    %4265 = vdwg.mxu0
    %s4266 = scalar_lea.vmem %s10, 64
    %v4267 = vld [vmem:[%s4266] sm:$0xff]
    %v4268 = vld [vmem:[%s4266 + $0x8] sm:$0xff]
    %v4269 = vld [vmem:[%s4266 + $0x10] sm:$0xff]
    %v4270 = vld [vmem:[%s4266 + $0x18] sm:$0xff]
    %v4271 = vld [vmem:[%s4266 + $0x20] sm:$0xff]
    %v4272 = vld [vmem:[%s4266 + $0x28] sm:$0xff]
    %v4273 = vld [vmem:[%s4266 + $0x30] sm:$0xff]
    %v4274 = vld [vmem:[%s4266 + $0x38] sm:$0xff]
    %vm4275 = vcmask 523264
    %v4277 = vsel %vm4275, %v4263, 0
    %4279 = vmatprep.subr.mxu0 0.0
    %4280 = vmatpush1.msra.mxu0 %v4267
    %4281 = vmatprep.subr.mxu0 0.0
    %4282 = vmatpush1.msra.mxu0 %v4268
    %4283 = vmatprep.subr.mxu0 0.0
    %4284 = vmatpush1.msra.mxu0 %v4269
    %4285 = vmatprep.subr.mxu0 0.0
    %4286 = vmatpush1.msra.mxu0 %v4270
    %4287 = vmatprep.subr.mxu0 0.0
    %4288 = vmatpush1.msra.mxu0 %v4271
    %4289 = vmatprep.subr.mxu0 0.0
    %4290 = vmatpush1.msra.mxu0 %v4272
    %4291 = vmatprep.subr.mxu0 0.0
    %4292 = vmatpush1.msra.mxu0 %v4273
    %4293 = vmatprep.subr.mxu0 0.0
    %4294 = vmatpush1.msra.mxu0 %v4274
    %4295 = vmatprep.subr.mxu0 0.0
    %4296 = vmatpush1.msra.mxu0 0.0
    %4297 = vmatprep.subr.mxu0 0.0
    %4298 = vmatpush1.msra.mxu0 0.0
    %4299 = vmatprep.subr.mxu0 0.0
    %4300 = vmatpush1.msra.mxu0 0.0
    %4301 = vmatprep.subr.mxu0 0.0
    %4302 = vmatpush1.msra.mxu0 0.0
    %4303 = vmatprep.subr.mxu0 0.0
    %4304 = vmatpush1.msra.mxu0 0.0
    %4305 = vmatprep.subr.mxu0 0.0
    %4306 = vmatpush1.msra.mxu0 0.0
    %4307 = vmatprep.subr.mxu0 0.0
    %4308 = vmatpush1.msra.mxu0 0.0
    %4309 = vmatprep.subr.mxu0 0.0
    %4310 = vmatpush1.msra.mxu0 0.0
    %4311 = vmatprep.subr.mxu0 0.0
    %4312 = vmatpush1.msra.mxu0 0.0
    %4313 = vmatprep.subr.mxu0 0.0
    %4314 = vmatpush1.msra.mxu0 0.0
    %4315 = vmatprep.subr.mxu0 0.0
    %4316 = vmatpush1.msra.mxu0 0.0
    %4317 = vmatprep.subr.mxu0 0.0
    %4318 = vmatpush1.msra.mxu0 0.0
    %4319 = vmatprep.subr.mxu0 0.0
    %4320 = vmatpush1.msra.mxu0 0.0
    %4321 = vmatprep.subr.mxu0 0.0
    %4322 = vmatpush1.msra.mxu0 0.0
    %4323 = vmatprep.subr.mxu0 0.0
    %4324 = vmatpush1.msra.mxu0 0.0
    %4325 = vmatprep.subr.mxu0 0.0
    %4326 = vmatpush1.msra.mxu0 0.0
    %4327 = vmatprep.subr.mxu0 0.0
    %4328 = vmatpush1.msra.mxu0 0.0
    %4329 = vmatprep.subr.mxu0 0.0
    %4330 = vmatpush1.msra.mxu0 0.0
    %4331 = vmatprep.subr.mxu0 0.0
    %4332 = vmatpush1.msra.mxu0 0.0
    %4333 = vmatprep.subr.mxu0 0.0
    %4334 = vmatpush1.msra.mxu0 0.0
    %4335 = vmatprep.subr.mxu0 0.0
    %4336 = vmatpush1.msra.mxu0 0.0
    %4337 = vmatprep.subr.mxu0 0.0
    %4338 = vmatpush1.msra.mxu0 0.0
    %4339 = vmatprep.subr.mxu0 0.0
    %4340 = vmatpush1.msra.mxu0 0.0
    %4341 = vmatprep.subr.mxu0 0.0
    %4342 = vmatpush1.msra.mxu0 0.0
    %4343 = vmatprep.mubr.f32.mxu0 0.0
    %4344 = vmatmul.mubr.f32.gmra.mrb[0].mxu0 %v4277
    %v4345 = vpop.f32.mrb[0].mxu0
    %v4346 = vadd.f32 0.0, %v4345
    %v4347 = vpop.f32.mrb[0].mxu0
    %4348 = vdwg.mxu0
    %v4350 = vsel %vm4275, %v4180, 0
    %4352 = vmatprep.subr.mxu0 0.0
    %4353 = vmatpush1.msra.mxu0 %v4183
    %4354 = vmatprep.subr.mxu0 0.0
    %4355 = vmatpush1.msra.mxu0 %v4184
    %4356 = vmatprep.subr.mxu0 0.0
    %4357 = vmatpush1.msra.mxu0 %v4185
    %4358 = vmatprep.subr.mxu0 0.0
    %4359 = vmatpush1.msra.mxu0 %v4186
    %4360 = vmatprep.subr.mxu0 0.0
    %4361 = vmatpush1.msra.mxu0 %v4187
    %4362 = vmatprep.subr.mxu0 0.0
    %4363 = vmatpush1.msra.mxu0 %v4188
    %4364 = vmatprep.subr.mxu0 0.0
    %4365 = vmatpush1.msra.mxu0 %v4189
    %4366 = vmatprep.subr.mxu0 0.0
    %4367 = vmatpush1.msra.mxu0 %v4190
    %4368 = vmatprep.subr.mxu0 0.0
    %4369 = vmatpush1.msra.mxu0 0.0
    %4370 = vmatprep.subr.mxu0 0.0
    %4371 = vmatpush1.msra.mxu0 0.0
    %4372 = vmatprep.subr.mxu0 0.0
    %4373 = vmatpush1.msra.mxu0 0.0
    %4374 = vmatprep.subr.mxu0 0.0
    %4375 = vmatpush1.msra.mxu0 0.0
    %4376 = vmatprep.subr.mxu0 0.0
    %4377 = vmatpush1.msra.mxu0 0.0
    %4378 = vmatprep.subr.mxu0 0.0
    %4379 = vmatpush1.msra.mxu0 0.0
    %4380 = vmatprep.subr.mxu0 0.0
    %4381 = vmatpush1.msra.mxu0 0.0
    %4382 = vmatprep.subr.mxu0 0.0
    %4383 = vmatpush1.msra.mxu0 0.0
    %4384 = vmatprep.subr.mxu0 0.0
    %4385 = vmatpush1.msra.mxu0 0.0
    %4386 = vmatprep.subr.mxu0 0.0
    %4387 = vmatpush1.msra.mxu0 0.0
    %4388 = vmatprep.subr.mxu0 0.0
    %4389 = vmatpush1.msra.mxu0 0.0
    %4390 = vmatprep.subr.mxu0 0.0
    %4391 = vmatpush1.msra.mxu0 0.0
    %4392 = vmatprep.subr.mxu0 0.0
    %4393 = vmatpush1.msra.mxu0 0.0
    %4394 = vmatprep.subr.mxu0 0.0
    %4395 = vmatpush1.msra.mxu0 0.0
    %4396 = vmatprep.subr.mxu0 0.0
    %4397 = vmatpush1.msra.mxu0 0.0
    %4398 = vmatprep.subr.mxu0 0.0
    %4399 = vmatpush1.msra.mxu0 0.0
    %4400 = vmatprep.subr.mxu0 0.0
    %4401 = vmatpush1.msra.mxu0 0.0
    %4402 = vmatprep.subr.mxu0 0.0
    %4403 = vmatpush1.msra.mxu0 0.0
    %4404 = vmatprep.subr.mxu0 0.0
    %4405 = vmatpush1.msra.mxu0 0.0
    %4406 = vmatprep.subr.mxu0 0.0
    %4407 = vmatpush1.msra.mxu0 0.0
    %4408 = vmatprep.subr.mxu0 0.0
    %4409 = vmatpush1.msra.mxu0 0.0
    %4410 = vmatprep.subr.mxu0 0.0
    %4411 = vmatpush1.msra.mxu0 0.0
    %4412 = vmatprep.subr.mxu0 0.0
    %4413 = vmatpush1.msra.mxu0 0.0
    %4414 = vmatprep.subr.mxu0 0.0
    %4415 = vmatpush1.msra.mxu0 0.0
    %4416 = vmatprep.mubr.f32.mxu0 0.0
    %4417 = vmatmul.mubr.f32.gmra.mrb[0].mxu0 %v4350
    %v4418 = vpop.f32.mrb[0].mxu0
    %v4419 = vadd.f32 %v4346, %v4418
    %v4420 = vpop.f32.mrb[0].mxu0
    %4421 = vdwg.mxu0
    %s4422 = scalar_lea.vmem %s9, 4
    %v4423 = vld [vmem:[%s4422] sm:$0x3]
    %v4425 = vsel %vm4109, %v4423, 0
    %4427 = vmatprep.subr.mxu0 0.0
    %4428 = vmatpush1.msra.mxu0 %v4107
    %4429 = vmatprep.subr.mxu0 0.0
    %4430 = vmatpush1.msra.mxu0 0.0
    %4431 = vmatprep.subr.mxu0 0.0
    %4432 = vmatpush1.msra.mxu0 0.0
    %4433 = vmatprep.subr.mxu0 0.0
    %4434 = vmatpush1.msra.mxu0 0.0
    %4435 = vmatprep.subr.mxu0 0.0
    %4436 = vmatpush1.msra.mxu0 0.0
    %4437 = vmatprep.subr.mxu0 0.0
    %4438 = vmatpush1.msra.mxu0 0.0
    %4439 = vmatprep.subr.mxu0 0.0
    %4440 = vmatpush1.msra.mxu0 0.0
    %4441 = vmatprep.subr.mxu0 0.0
    %4442 = vmatpush1.msra.mxu0 0.0
    %4443 = vmatprep.subr.mxu0 0.0
    %4444 = vmatpush1.msra.mxu0 0.0
    %4445 = vmatprep.subr.mxu0 0.0
    %4446 = vmatpush1.msra.mxu0 0.0
    %4447 = vmatprep.subr.mxu0 0.0
    %4448 = vmatpush1.msra.mxu0 0.0
    %4449 = vmatprep.subr.mxu0 0.0
    %4450 = vmatpush1.msra.mxu0 0.0
    %4451 = vmatprep.subr.mxu0 0.0
    %4452 = vmatpush1.msra.mxu0 0.0
    %4453 = vmatprep.subr.mxu0 0.0
    %4454 = vmatpush1.msra.mxu0 0.0
    %4455 = vmatprep.subr.mxu0 0.0
    %4456 = vmatpush1.msra.mxu0 0.0
    %4457 = vmatprep.subr.mxu0 0.0
    %4458 = vmatpush1.msra.mxu0 0.0
    %4459 = vmatprep.subr.mxu0 0.0
    %4460 = vmatpush1.msra.mxu0 0.0
    %4461 = vmatprep.subr.mxu0 0.0
    %4462 = vmatpush1.msra.mxu0 0.0
    %4463 = vmatprep.subr.mxu0 0.0
    %4464 = vmatpush1.msra.mxu0 0.0
    %4465 = vmatprep.subr.mxu0 0.0
    %4466 = vmatpush1.msra.mxu0 0.0
    %4467 = vmatprep.subr.mxu0 0.0
    %4468 = vmatpush1.msra.mxu0 0.0
    %4469 = vmatprep.subr.mxu0 0.0
    %4470 = vmatpush1.msra.mxu0 0.0
    %4471 = vmatprep.subr.mxu0 0.0
    %4472 = vmatpush1.msra.mxu0 0.0
    %4473 = vmatprep.subr.mxu0 0.0
    %4474 = vmatpush1.msra.mxu0 0.0
    %4475 = vmatprep.subr.mxu0 0.0
    %4476 = vmatpush1.msra.mxu0 0.0
    %4477 = vmatprep.subr.mxu0 0.0
    %4478 = vmatpush1.msra.mxu0 0.0
    %4479 = vmatprep.subr.mxu0 0.0
    %4480 = vmatpush1.msra.mxu0 0.0
    %4481 = vmatprep.subr.mxu0 0.0
    %4482 = vmatpush1.msra.mxu0 0.0
    %4483 = vmatprep.subr.mxu0 0.0
    %4484 = vmatpush1.msra.mxu0 0.0
    %4485 = vmatprep.subr.mxu0 0.0
    %4486 = vmatpush1.msra.mxu0 0.0
    %4487 = vmatprep.subr.mxu0 0.0
    %4488 = vmatpush1.msra.mxu0 0.0
    %4489 = vmatprep.subr.mxu0 0.0
    %4490 = vmatpush1.msra.mxu0 0.0
    %4491 = vmatprep.mubr.f32.mxu0 0.0
    %4492 = vmatmul.mubr.f32.gmra.mrb[0].mxu0 %v4425
    %v4493 = vpop.f32.mrb[0].mxu0
    %v4494 = vadd.f32 0.0, %v4493
    %v4495 = vpop.f32.mrb[0].mxu0
    %4496 = vdwg.mxu0
    %s4497 = scalar_lea.vmem %s10, 128
    %v4498 = vld [vmem:[%s4497] sm:$0xff]
    %v4499 = vld [vmem:[%s4497 + $0x8] sm:$0xff]
    %v4500 = vld [vmem:[%s4497 + $0x10] sm:$0xff]
    %v4501 = vld [vmem:[%s4497 + $0x18] sm:$0xff]
    %v4502 = vld [vmem:[%s4497 + $0x20] sm:$0xff]
    %v4503 = vld [vmem:[%s4497 + $0x28] sm:$0xff]
    %v4504 = vld [vmem:[%s4497 + $0x30] sm:$0xff]
    %v4505 = vld [vmem:[%s4497 + $0x38] sm:$0xff]
    %v4507 = vsel %vm4275, %v4494, 0
    %4509 = vmatprep.subr.mxu0 0.0
    %4510 = vmatpush1.msra.mxu0 %v4498
    %4511 = vmatprep.subr.mxu0 0.0
    %4512 = vmatpush1.msra.mxu0 %v4499
    %4513 = vmatprep.subr.mxu0 0.0
    %4514 = vmatpush1.msra.mxu0 %v4500
    %4515 = vmatprep.subr.mxu0 0.0
    %4516 = vmatpush1.msra.mxu0 %v4501
    %4517 = vmatprep.subr.mxu0 0.0
    %4518 = vmatpush1.msra.mxu0 %v4502
    %4519 = vmatprep.subr.mxu0 0.0
    %4520 = vmatpush1.msra.mxu0 %v4503
    %4521 = vmatprep.subr.mxu0 0.0
    %4522 = vmatpush1.msra.mxu0 %v4504
    %4523 = vmatprep.subr.mxu0 0.0
    %4524 = vmatpush1.msra.mxu0 %v4505
    %4525 = vmatprep.subr.mxu0 0.0
    %4526 = vmatpush1.msra.mxu0 0.0
    %4527 = vmatprep.subr.mxu0 0.0
    %4528 = vmatpush1.msra.mxu0 0.0
    %4529 = vmatprep.subr.mxu0 0.0
    %4530 = vmatpush1.msra.mxu0 0.0
    %4531 = vmatprep.subr.mxu0 0.0
    %4532 = vmatpush1.msra.mxu0 0.0
    %4533 = vmatprep.subr.mxu0 0.0
    %4534 = vmatpush1.msra.mxu0 0.0
    %4535 = vmatprep.subr.mxu0 0.0
    %4536 = vmatpush1.msra.mxu0 0.0
    %4537 = vmatprep.subr.mxu0 0.0
    %4538 = vmatpush1.msra.mxu0 0.0
    %4539 = vmatprep.subr.mxu0 0.0
    %4540 = vmatpush1.msra.mxu0 0.0
    %4541 = vmatprep.subr.mxu0 0.0
    %4542 = vmatpush1.msra.mxu0 0.0
    %4543 = vmatprep.subr.mxu0 0.0
    %4544 = vmatpush1.msra.mxu0 0.0
    %4545 = vmatprep.subr.mxu0 0.0
    %4546 = vmatpush1.msra.mxu0 0.0
    %4547 = vmatprep.subr.mxu0 0.0
    %4548 = vmatpush1.msra.mxu0 0.0
    %4549 = vmatprep.subr.mxu0 0.0
    %4550 = vmatpush1.msra.mxu0 0.0
    %4551 = vmatprep.subr.mxu0 0.0
    %4552 = vmatpush1.msra.mxu0 0.0
    %4553 = vmatprep.subr.mxu0 0.0
    %4554 = vmatpush1.msra.mxu0 0.0
    %4555 = vmatprep.subr.mxu0 0.0
    %4556 = vmatpush1.msra.mxu0 0.0
    %4557 = vmatprep.subr.mxu0 0.0
    %4558 = vmatpush1.msra.mxu0 0.0
    %4559 = vmatprep.subr.mxu0 0.0
    %4560 = vmatpush1.msra.mxu0 0.0
    %4561 = vmatprep.subr.mxu0 0.0
    %4562 = vmatpush1.msra.mxu0 0.0
    %4563 = vmatprep.subr.mxu0 0.0
    %4564 = vmatpush1.msra.mxu0 0.0
    %4565 = vmatprep.subr.mxu0 0.0
    %4566 = vmatpush1.msra.mxu0 0.0
    %4567 = vmatprep.subr.mxu0 0.0
    %4568 = vmatpush1.msra.mxu0 0.0
    %4569 = vmatprep.subr.mxu0 0.0
    %4570 = vmatpush1.msra.mxu0 0.0
    %4571 = vmatprep.subr.mxu0 0.0
    %4572 = vmatpush1.msra.mxu0 0.0
    %4573 = vmatprep.mubr.f32.mxu0 0.0
    %4574 = vmatmul.mubr.f32.gmra.mrb[0].mxu0 %v4507
    %v4575 = vpop.f32.mrb[0].mxu0
    %v4576 = vadd.f32 0.0, %v4575
    %v4577 = vpop.f32.mrb[0].mxu0
    %4578 = vdwg.mxu0
    %v4579 = vadd.f32 %v4419, %v4576
    %s4580 = scalar_lea.vmem %s9, 6
    %v4581 = vld [vmem:[%s4580] sm:$0x3]
    %v4583 = vsel %vm4109, %v4581, 0
    %4585 = vmatprep.subr.mxu0 0.0
    %4586 = vmatpush1.msra.mxu0 %v4107
    %4587 = vmatprep.subr.mxu0 0.0
    %4588 = vmatpush1.msra.mxu0 0.0
    %4589 = vmatprep.subr.mxu0 0.0
    %4590 = vmatpush1.msra.mxu0 0.0
    %4591 = vmatprep.subr.mxu0 0.0
    %4592 = vmatpush1.msra.mxu0 0.0
    %4593 = vmatprep.subr.mxu0 0.0
    %4594 = vmatpush1.msra.mxu0 0.0
    %4595 = vmatprep.subr.mxu0 0.0
    %4596 = vmatpush1.msra.mxu0 0.0
    %4597 = vmatprep.subr.mxu0 0.0
    %4598 = vmatpush1.msra.mxu0 0.0
    %4599 = vmatprep.subr.mxu0 0.0
    %4600 = vmatpush1.msra.mxu0 0.0
    %4601 = vmatprep.subr.mxu0 0.0
    %4602 = vmatpush1.msra.mxu0 0.0
    %4603 = vmatprep.subr.mxu0 0.0
    %4604 = vmatpush1.msra.mxu0 0.0
    %4605 = vmatprep.subr.mxu0 0.0
    %4606 = vmatpush1.msra.mxu0 0.0
    %4607 = vmatprep.subr.mxu0 0.0
    %4608 = vmatpush1.msra.mxu0 0.0
    %4609 = vmatprep.subr.mxu0 0.0
    %4610 = vmatpush1.msra.mxu0 0.0
    %4611 = vmatprep.subr.mxu0 0.0
    %4612 = vmatpush1.msra.mxu0 0.0
    %4613 = vmatprep.subr.mxu0 0.0
    %4614 = vmatpush1.msra.mxu0 0.0
    %4615 = vmatprep.subr.mxu0 0.0
    %4616 = vmatpush1.msra.mxu0 0.0
    %4617 = vmatprep.subr.mxu0 0.0
    %4618 = vmatpush1.msra.mxu0 0.0
    %4619 = vmatprep.subr.mxu0 0.0
    %4620 = vmatpush1.msra.mxu0 0.0
    %4621 = vmatprep.subr.mxu0 0.0
    %4622 = vmatpush1.msra.mxu0 0.0
    %4623 = vmatprep.subr.mxu0 0.0
    %4624 = vmatpush1.msra.mxu0 0.0
    %4625 = vmatprep.subr.mxu0 0.0
    %4626 = vmatpush1.msra.mxu0 0.0
    %4627 = vmatprep.subr.mxu0 0.0
    %4628 = vmatpush1.msra.mxu0 0.0
    %4629 = vmatprep.subr.mxu0 0.0
    %4630 = vmatpush1.msra.mxu0 0.0
    %4631 = vmatprep.subr.mxu0 0.0
    %4632 = vmatpush1.msra.mxu0 0.0
    %4633 = vmatprep.subr.mxu0 0.0
    %4634 = vmatpush1.msra.mxu0 0.0
    %4635 = vmatprep.subr.mxu0 0.0
    %4636 = vmatpush1.msra.mxu0 0.0
    %4637 = vmatprep.subr.mxu0 0.0
    %4638 = vmatpush1.msra.mxu0 0.0
    %4639 = vmatprep.subr.mxu0 0.0
    %4640 = vmatpush1.msra.mxu0 0.0
    %4641 = vmatprep.subr.mxu0 0.0
    %4642 = vmatpush1.msra.mxu0 0.0
    %4643 = vmatprep.subr.mxu0 0.0
    %4644 = vmatpush1.msra.mxu0 0.0
    %4645 = vmatprep.subr.mxu0 0.0
    %4646 = vmatpush1.msra.mxu0 0.0
    %4647 = vmatprep.subr.mxu0 0.0
    %4648 = vmatpush1.msra.mxu0 0.0
    %4649 = vmatprep.mubr.f32.mxu0 0.0
    %4650 = vmatmul.mubr.f32.gmra.mrb[0].mxu0 %v4583
    %v4651 = vpop.f32.mrb[0].mxu0
    %v4652 = vadd.f32 0.0, %v4651
    %v4653 = vpop.f32.mrb[0].mxu0
    %4654 = vdwg.mxu0
    %s4655 = scalar_lea.vmem %s10, 192
    %v4656 = vld [vmem:[%s4655] sm:$0xff]
    %v4657 = vld [vmem:[%s4655 + $0x8] sm:$0xff]
    %v4658 = vld [vmem:[%s4655 + $0x10] sm:$0xff]
    %v4659 = vld [vmem:[%s4655 + $0x18] sm:$0xff]
    %v4660 = vld [vmem:[%s4655 + $0x20] sm:$0xff]
    %v4661 = vld [vmem:[%s4655 + $0x28] sm:$0xff]
    %v4662 = vld [vmem:[%s4655 + $0x30] sm:$0xff]
    %v4663 = vld [vmem:[%s4655 + $0x38] sm:$0xff]
    %v4665 = vsel %vm4275, %v4652, 0
    %4667 = vmatprep.subr.mxu0 0.0
    %4668 = vmatpush1.msra.mxu0 %v4656
    %4669 = vmatprep.subr.mxu0 0.0
    %4670 = vmatpush1.msra.mxu0 %v4657
    %4671 = vmatprep.subr.mxu0 0.0
    %4672 = vmatpush1.msra.mxu0 %v4658
    %4673 = vmatprep.subr.mxu0 0.0
    %4674 = vmatpush1.msra.mxu0 %v4659
    %4675 = vmatprep.subr.mxu0 0.0
    %4676 = vmatpush1.msra.mxu0 %v4660
    %4677 = vmatprep.subr.mxu0 0.0
    %4678 = vmatpush1.msra.mxu0 %v4661
    %4679 = vmatprep.subr.mxu0 0.0
    %4680 = vmatpush1.msra.mxu0 %v4662
    %4681 = vmatprep.subr.mxu0 0.0
    %4682 = vmatpush1.msra.mxu0 %v4663
    %4683 = vmatprep.subr.mxu0 0.0
    %4684 = vmatpush1.msra.mxu0 0.0
    %4685 = vmatprep.subr.mxu0 0.0
    %4686 = vmatpush1.msra.mxu0 0.0
    %4687 = vmatprep.subr.mxu0 0.0
    %4688 = vmatpush1.msra.mxu0 0.0
    %4689 = vmatprep.subr.mxu0 0.0
    %4690 = vmatpush1.msra.mxu0 0.0
    %4691 = vmatprep.subr.mxu0 0.0
    %4692 = vmatpush1.msra.mxu0 0.0
    %4693 = vmatprep.subr.mxu0 0.0
    %4694 = vmatpush1.msra.mxu0 0.0
    %4695 = vmatprep.subr.mxu0 0.0
    %4696 = vmatpush1.msra.mxu0 0.0
    %4697 = vmatprep.subr.mxu0 0.0
    %4698 = vmatpush1.msra.mxu0 0.0
    %4699 = vmatprep.subr.mxu0 0.0
    %4700 = vmatpush1.msra.mxu0 0.0
    %4701 = vmatprep.subr.mxu0 0.0
    %4702 = vmatpush1.msra.mxu0 0.0
    %4703 = vmatprep.subr.mxu0 0.0
    %4704 = vmatpush1.msra.mxu0 0.0
    %4705 = vmatprep.subr.mxu0 0.0
    %4706 = vmatpush1.msra.mxu0 0.0
    %4707 = vmatprep.subr.mxu0 0.0
    %4708 = vmatpush1.msra.mxu0 0.0
    %4709 = vmatprep.subr.mxu0 0.0
    %4710 = vmatpush1.msra.mxu0 0.0
    %4711 = vmatprep.subr.mxu0 0.0
    %4712 = vmatpush1.msra.mxu0 0.0
    %4713 = vmatprep.subr.mxu0 0.0
    %4714 = vmatpush1.msra.mxu0 0.0
    %4715 = vmatprep.subr.mxu0 0.0
    %4716 = vmatpush1.msra.mxu0 0.0
    %4717 = vmatprep.subr.mxu0 0.0
    %4718 = vmatpush1.msra.mxu0 0.0
    %4719 = vmatprep.subr.mxu0 0.0
    %4720 = vmatpush1.msra.mxu0 0.0
    %4721 = vmatprep.subr.mxu0 0.0
    %4722 = vmatpush1.msra.mxu0 0.0
    %4723 = vmatprep.subr.mxu0 0.0
    %4724 = vmatpush1.msra.mxu0 0.0
    %4725 = vmatprep.subr.mxu0 0.0
    %4726 = vmatpush1.msra.mxu0 0.0
    %4727 = vmatprep.subr.mxu0 0.0
    %4728 = vmatpush1.msra.mxu0 0.0
    %4729 = vmatprep.subr.mxu0 0.0
    %4730 = vmatpush1.msra.mxu0 0.0
    %4731 = vmatprep.mubr.f32.mxu0 0.0
    %4732 = vmatmul.mubr.f32.gmra.mrb[0].mxu0 %v4665
    %v4733 = vpop.f32.mrb[0].mxu0
    %v4734 = vadd.f32 0.0, %v4733
    %v4735 = vpop.f32.mrb[0].mxu0
    %4736 = vdwg.mxu0
    %v4737 = vadd.f32 %v4579, %v4734
    %v4738 = vld [vmem:[%s11] sm:$0x1]
    %v4740 = vlaneseq
    %v4741 = vshrl.u32 %v4740, 7
    %v4742 = vsub.s32 0, %v4741
    %v4743 = vrot.slane %v4738, %v4742
    %v4745 = vadd.f32 %v4737, %v4743
    %v4746 = vmax.f32 %v4745, 0.0
    %v4747 = vld [vmem:[%s12] sm:$0xff]
    %v4748 = vld [vmem:[%s12 + $0x8] sm:$0xff]
    %v4749 = vld [vmem:[%s12 + $0x10] sm:$0xff]
    %v4750 = vld [vmem:[%s12 + $0x18] sm:$0xff]
    %v4751 = vld [vmem:[%s12 + $0x20] sm:$0xff]
    %v4752 = vld [vmem:[%s12 + $0x28] sm:$0xff]
    %v4753 = vld [vmem:[%s12 + $0x30] sm:$0xff]
    %v4754 = vld [vmem:[%s12 + $0x38] sm:$0xff]
    %v4755 = vld [vmem:[%s12 + $0x40] sm:$0xff]
    %v4756 = vld [vmem:[%s12 + $0x48] sm:$0xff]
    %v4757 = vld [vmem:[%s12 + $0x50] sm:$0xff]
    %v4758 = vld [vmem:[%s12 + $0x58] sm:$0xff]
    %v4759 = vld [vmem:[%s12 + $0x60] sm:$0xff]
    %v4760 = vld [vmem:[%s12 + $0x68] sm:$0xff]
    %v4761 = vld [vmem:[%s12 + $0x70] sm:$0xff]
    %v4762 = vld [vmem:[%s12 + $0x78] sm:$0xff]
    %v4763 = vld [vmem:[%s13] sm:$0x1]
    %v4765 = vlaneseq
    %v4766 = vshrl.u32 %v4765, 7
    %v4767 = vsub.s32 0, %v4766
    %v4768 = vrot.slane %v4763, %v4767
    %4770 = vmatprep.subr.mxu0 0.0
    %4771 = vmatpush1.msra.mxu0 %v4747
    %4772 = vmatprep.subr.mxu0 0.0
    %4773 = vmatpush1.msra.mxu0 %v4748
    %4774 = vmatprep.subr.mxu0 0.0
    %4775 = vmatpush1.msra.mxu0 %v4749
    %4776 = vmatprep.subr.mxu0 0.0
    %4777 = vmatpush1.msra.mxu0 %v4750
    %4778 = vmatprep.subr.mxu0 0.0
    %4779 = vmatpush1.msra.mxu0 %v4751
    %4780 = vmatprep.subr.mxu0 0.0
    %4781 = vmatpush1.msra.mxu0 %v4752
    %4782 = vmatprep.subr.mxu0 0.0
    %4783 = vmatpush1.msra.mxu0 %v4753
    %4784 = vmatprep.subr.mxu0 0.0
    %4785 = vmatpush1.msra.mxu0 %v4754
    %4786 = vmatprep.subr.mxu0 0.0
    %4787 = vmatpush1.msra.mxu0 %v4755
    %4788 = vmatprep.subr.mxu0 0.0
    %4789 = vmatpush1.msra.mxu0 %v4756
    %4790 = vmatprep.subr.mxu0 0.0
    %4791 = vmatpush1.msra.mxu0 %v4757
    %4792 = vmatprep.subr.mxu0 0.0
    %4793 = vmatpush1.msra.mxu0 %v4758
    %4794 = vmatprep.subr.mxu0 0.0
    %4795 = vmatpush1.msra.mxu0 %v4759
    %4796 = vmatprep.subr.mxu0 0.0
    %4797 = vmatpush1.msra.mxu0 %v4760
    %4798 = vmatprep.subr.mxu0 0.0
    %4799 = vmatpush1.msra.mxu0 %v4761
    %4800 = vmatprep.subr.mxu0 0.0
    %4801 = vmatpush1.msra.mxu0 %v4762
    %4802 = vmatprep.subr.mxu0 0.0
    %4803 = vmatpush1.msra.mxu0 0.0
    %4804 = vmatprep.subr.mxu0 0.0
    %4805 = vmatpush1.msra.mxu0 0.0
    %4806 = vmatprep.subr.mxu0 0.0
    %4807 = vmatpush1.msra.mxu0 0.0
    %4808 = vmatprep.subr.mxu0 0.0
    %4809 = vmatpush1.msra.mxu0 0.0
    %4810 = vmatprep.subr.mxu0 0.0
    %4811 = vmatpush1.msra.mxu0 0.0
    %4812 = vmatprep.subr.mxu0 0.0
    %4813 = vmatpush1.msra.mxu0 0.0
    %4814 = vmatprep.subr.mxu0 0.0
    %4815 = vmatpush1.msra.mxu0 0.0
    %4816 = vmatprep.subr.mxu0 0.0
    %4817 = vmatpush1.msra.mxu0 0.0
    %4818 = vmatprep.subr.mxu0 0.0
    %4819 = vmatpush1.msra.mxu0 0.0
    %4820 = vmatprep.subr.mxu0 0.0
    %4821 = vmatpush1.msra.mxu0 0.0
    %4822 = vmatprep.subr.mxu0 0.0
    %4823 = vmatpush1.msra.mxu0 0.0
    %4824 = vmatprep.subr.mxu0 0.0
    %4825 = vmatpush1.msra.mxu0 0.0
    %4826 = vmatprep.subr.mxu0 0.0
    %4827 = vmatpush1.msra.mxu0 0.0
    %4828 = vmatprep.subr.mxu0 0.0
    %4829 = vmatpush1.msra.mxu0 0.0
    %4830 = vmatprep.subr.mxu0 0.0
    %4831 = vmatpush1.msra.mxu0 0.0
    %4832 = vmatprep.subr.mxu0 0.0
    %4833 = vmatpush1.msra.mxu0 0.0
    %4834 = vmatprep.mubr.f32.mxu0 0.0
    %4835 = vmatmul.mubr.f32.gmra.mrb[0].mxu0 %v4746
    %v4836 = vpop.f32.mrb[0].mxu0
    %v4837 = vadd.f32 %v4768, %v4836
    %v4838 = vpop.f32.mrb[0].mxu0
    %4839 = vdwg.mxu0
    %vm4840 = vcmask 197632
    %4841 = vst.msk [vmem:[#allocation2] sm:$0x3] %vm4840, %v4837
    // Predicated region
    $region58: #{fused_forward.1} parent=1 // pred_check
      _
    $region59: #{fused_forward.1} parent=1 // pred_check_branch
      %4843 = sbr.rel (0) target = $region61
    $region60: #{fused_forward.1} parent=1 // pred_region
      %s4845 = ssub.s32 32, 32
      %4846 = vsyncadd [#allocation3], %s4845
      %s4848 = sshll.u32 [#allocation2], 4
      %s4849 = int_to_ptr.vmem [resolvable:$true] %s4848
      %4851 = dma.vmem_to_hbm [thread:$0]  %s4849, 32, %s14, [#allocation3]
    $region61: #{fused_forward.1} parent=1 // pred_fallthru
      _
    // Predicated region
    $region62: #{fused_forward.1} parent=1 // pred_check
      _
    $region63: #{fused_forward.1} parent=1 // pred_check_branch
      %4853 = sbr.rel (0) target = $region65
    $region64: #{fused_forward.1} parent=1 // pred_region
      %4854 = dma.done [#allocation3], 32
    $region65: #{fused_forward.1} parent=1 // pred_fallthru
      _
    %4855 = vsyncpa [#allocation3], 1

</llo_original>
